<compile_context>
chip_gen: v7x
topology: tpu7x:2x2x1
jax: 0.10.0
libtpu: 0.0.40
codegen_flags: <defaults>
</compile_context>

<pallas_src>
import functools
import math

import numpy as np
import jax
import jax.numpy as jnp
from jax.experimental import pallas as pl
from jax.experimental.pallas import tpu as pltpu


# ----------------------------------------------------------------------------
# Kernel 1: fused double 3x3 "same" conv (+ optional trailing 1x1 projection).
# Layout inside the kernel: channels on sublanes, flattened spatial on lanes.
# ----------------------------------------------------------------------------
def _dc_compute(x, w1, b1, w2, b2, H, W):
    # x: (Cin, H+4, W+4) zero-padded input; w1: (Cmid, 9*Cin); w2: (Cout, 9*Cmid)
    Cin = x.shape[0]
    H1, W1 = H + 2, W + 2
    # conv1 as one im2col MXU contraction, evaluated over the (H+2, W+2) halo region
    p1 = jnp.concatenate(
        [x[:, dy:dy + H1, dx:dx + W1].reshape(Cin, H1 * W1)
         for dy in range(3) for dx in range(3)], axis=0)               # (9*Cin, H1*W1)
    y1 = jnp.maximum(jnp.dot(w1, p1, preferred_element_type=jnp.float32) + b1, 0.0)
    Cmid = y1.shape[0]
    # zero the 1-pixel halo ring -> identical to the zero padding conv2 would see
    row = jax.lax.broadcasted_iota(jnp.int32, (H1, W1), 0)
    col = jax.lax.broadcasted_iota(jnp.int32, (H1, W1), 1)
    interior = ((row >= 1) & (row <= H) & (col >= 1) & (col <= W)).astype(jnp.float32)
    y1 = y1.reshape(Cmid, H1, W1) * interior[None]
    # conv2 as one im2col MXU contraction over the valid H x W region
    p2 = jnp.concatenate(
        [y1[:, dy:dy + H, dx:dx + W].reshape(Cmid, H * W)
         for dy in range(3) for dx in range(3)], axis=0)               # (9*Cmid, H*W)
    y2 = jnp.maximum(jnp.dot(w2, p2, preferred_element_type=jnp.float32) + b2, 0.0)
    return y2                                                          # (Cout, H*W)


def _double_conv_kernel(x_ref, w1_ref, b1_ref, w2_ref, b2_ref, o_ref, *, H, W):
    y2 = _dc_compute(x_ref[0], w1_ref[...], b1_ref[...],
                     w2_ref[...], b2_ref[...], H, W)
    o_ref[...] = y2[None]                                              # (1, Cout, H*W)


def _double_conv_proj_kernel(x_ref, w1_ref, b1_ref, w2_ref, b2_ref,
                             w3_ref, b3_ref, o_ref, *, H, W):
    y2 = _dc_compute(x_ref[0], w1_ref[...], b1_ref[...],
                     w2_ref[...], b2_ref[...], H, W)
    y3 = jnp.dot(w3_ref[...], y2, preferred_element_type=jnp.float32) + b3_ref[...]
    o_ref[...] = y3[None]                                              # (1, Cf, H*W)


def double_conv3x3(x_nchw, w1, b1, w2, b2, w3=None, b3=None):
    # x_nchw: (BM, Cin, H, W); weights pre-flattened (Cout, 9*Cin); biases (Cout, 1)
    BM, Cin, H, W = x_nchw.shape
    xp = jnp.pad(x_nchw, ((0, 0), (0, 0), (2, 2), (2, 2)))
    Hp, Wp = H + 4, W + 4
    Cmid, Cout = w1.shape[0], w2.shape[0]

    in_specs = [
        pl.BlockSpec((1, Cin, Hp, Wp), lambda i: (i, 0, 0, 0)),
        pl.BlockSpec(w1.shape, lambda i: (0, 0)),
        pl.BlockSpec((Cmid, 1), lambda i: (0, 0)),
        pl.BlockSpec(w2.shape, lambda i: (0, 0)),
        pl.BlockSpec((Cout, 1), lambda i: (0, 0)),
    ]
    args = [xp, w1, b1, w2, b2]
    if w3 is not None:
        out_ch = w3.shape[0]
        in_specs += [pl.BlockSpec(w3.shape, lambda i: (0, 0)),
                     pl.BlockSpec((out_ch, 1), lambda i: (0, 0))]
        args += [w3, b3]
        kern = functools.partial(_double_conv_proj_kernel, H=H, W=W)
    else:
        out_ch = Cout
        kern = functools.partial(_double_conv_kernel, H=H, W=W)

    out = pl.pallas_call(
        kern,
        out_shape=jax.ShapeDtypeStruct((BM, out_ch, H * W), jnp.float32),
        grid=(BM,),
        in_specs=in_specs,
        out_specs=pl.BlockSpec((1, out_ch, H * W), lambda i: (i, 0, 0)),
        compiler_params=pltpu.CompilerParams(dimension_semantics=("parallel",)),
    )(*args)
    return out.reshape(BM, out_ch, H, W)


# ----------------------------------------------------------------------------
# Kernel 2: fused point path — bilinear sample (from corner idx/weights) ->
#           max fusion over views -> full PointDecoder MLP, tiled over N.
# ----------------------------------------------------------------------------
def _point_path_kernel(feats_ref, idx_ref, wgt_ref, *rest, n_views, layer_flags):
    # feats_ref: (1, M, C, HW); idx_ref/wgt_ref: (1, M, 4, NT)
    # rest = (w_0, scale_0, shift_0, ..., w_{L-1}, scale_{L-1}, shift_{L-1}, o_ref)
    o_ref = rest[-1]
    layer_refs = rest[:-1]
    HW = feats_ref.shape[3]
    NT = idx_ref.shape[3]
    C = feats_ref.shape[2]

    hw_iota = jax.lax.broadcasted_iota(jnp.int32, (HW, NT), 0)
    acc = jnp.full((C, NT), -jnp.inf, jnp.float32)
    for m in range(n_views):
        idx_m = idx_ref[0, m]                                    # (4, NT) int32
        wgt_m = wgt_ref[0, m]                                    # (4, NT) f32
        S = jnp.zeros((HW, NT), jnp.float32)
        for c in range(4):                                       # 4-corner bilinear
            sel = (hw_iota == idx_m[c:c + 1, :]).astype(jnp.float32)
            S = S + sel * wgt_m[c:c + 1, :]
        sampled = jnp.dot(feats_ref[0, m], S,
                          preferred_element_type=jnp.float32)    # (C, NT)
        acc = jnp.maximum(acc, sampled)                          # max fusion over views

    # PointDecoder: Conv1d(k=1) + folded BN + (residual) + ReLU, last layer plain.
    x = acc
    for li, (relu, residual) in enumerate(layer_flags):
        w_ref, s_ref, t_ref = layer_refs[3 * li: 3 * li + 3]
        y = jnp.dot(w_ref[...], x, preferred_element_type=jnp.float32)
        y = y * s_ref[...] + t_ref[...]
        if residual:
            y = y + x
        if relu:
            y = jnp.maximum(y, 0.0)
        x = y
    o_ref[...] = x[None]                                         # (1, Cout_last, NT)


def _choose_ntile(n):
    for t in (2048, 1024, 512, 256, 128):
        if n >= t and n % t == 0:
            return t
    return n  # small / non-128-multiple point counts: single full-width tile


def point_path(feats, idx, wgt, layer_params, layer_flags):
    # feats: (B, M, C, HW); idx/wgt: (B, M, 4, N) -> (B, Cout_last, N)
    B, M, C, HW = feats.shape
    N = idx.shape[3]
    NT = _choose_ntile(N)
    n_tiles = N // NT
    Cout = layer_params[-1][0].shape[0]

    in_specs = [
        pl.BlockSpec((1, M, C, HW), lambda b, n: (b, 0, 0, 0)),
        pl.BlockSpec((1, M, 4, NT), lambda b, n: (b, 0, 0, n)),
        pl.BlockSpec((1, M, 4, NT), lambda b, n: (b, 0, 0, n)),
    ]
    args = [feats, idx, wgt]
    for (w, s, t) in layer_params:
        co = w.shape[0]
        in_specs += [pl.BlockSpec(w.shape, lambda b, n: (0, 0)),
                     pl.BlockSpec((co, 1), lambda b, n: (0, 0)),
                     pl.BlockSpec((co, 1), lambda b, n: (0, 0))]
        args += [w, s, t]

    kern = functools.partial(_point_path_kernel, n_views=M,
                             layer_flags=tuple(layer_flags))
    # TODO(synk): for production sizes (HW ~ 16K), also tile HW as a reduction axis
    # and set vmem_limit_bytes per generation (64 MiB VMEM on v7x vs 128 MiB).
    return pl.pallas_call(
        kern,
        out_shape=jax.ShapeDtypeStruct((B, Cout, N), jnp.float32),
        grid=(B, n_tiles),
        in_specs=in_specs,
        out_specs=pl.BlockSpec((1, Cout, NT), lambda b, n: (b, 0, n)),
        compiler_params=pltpu.CompilerParams(
            dimension_semantics=("parallel", "parallel")),
    )(*args)


# ----------------------------------------------------------------------------
# Glue: bilinear corner precompute, UNet wiring, params, Recon_base forward.
# ----------------------------------------------------------------------------
def _bilinear_corners(points_proj, H, W):
    # points_proj: (B, M, N, 2) in [-1, 1]; grid_sample convention:
    # [...,0]=x (width), [...,1]=y (height); align_corners=True, zero padding.
    x = points_proj[..., 0]
    y = points_proj[..., 1]
    ix = (x + 1.0) * 0.5 * (W - 1)
    iy = (y + 1.0) * 0.5 * (H - 1)
    ix0 = jnp.floor(ix)
    iy0 = jnp.floor(iy)
    ix1 = ix0 + 1.0
    iy1 = iy0 + 1.0
    wx1 = ix - ix0
    wx0 = 1.0 - wx1
    wy1 = iy - iy0
    wy0 = 1.0 - wy1

    def corner(iyc, ixc, wgt):
        valid = ((iyc >= 0) & (iyc <= H - 1) &
                 (ixc >= 0) & (ixc <= W - 1)).astype(jnp.float32)
        yi = jnp.clip(iyc, 0, H - 1).astype(jnp.int32)
        xi = jnp.clip(ixc, 0, W - 1).astype(jnp.int32)
        return yi * W + xi, wgt * valid

    i00, w00 = corner(iy0, ix0, wy0 * wx0)
    i01, w01 = corner(iy0, ix1, wy0 * wx1)
    i10, w10 = corner(iy1, ix0, wy1 * wx0)
    i11, w11 = corner(iy1, ix1, wy1 * wx1)
    idx = jnp.stack([i00, i01, i10, i11], axis=-2).astype(jnp.int32)  # (B, M, 4, N)
    wgt = jnp.stack([w00, w01, w10, w11], axis=-2)                    # (B, M, 4, N)
    return idx, wgt


def _maxpool2(x):  # (BM, C, H, W) -> (BM, C, H/2, W/2)
    BM, C, H, W = x.shape
    return x.reshape(BM, C, H // 2, 2, W // 2, 2).max(axis=(3, 5))


def _upsample2(x):  # nearest 2x upsample on (BM, C, H, W)
    return jnp.repeat(jnp.repeat(x, 2, axis=2), 2, axis=3)


def init_params(key, *, base_c=8, enc_out_ch=8, mlp_chs=(32, 32, 1)):
    keys = iter(jax.random.split(key, 16))

    def conv3(cin, cout):
        w = (jax.random.normal(next(keys), (3, 3, cin, cout), jnp.float32)
             / math.sqrt(9 * cin))
        # flatten to (Cout, 9*Cin): tap-major (ky, kx), channel-minor within a tap
        w = jnp.transpose(w, (3, 0, 1, 2)).reshape(cout, 9 * cin)
        return w, jnp.zeros((cout, 1), jnp.float32)

    def conv1(cin, cout):
        w = jax.random.normal(next(keys), (cout, cin), jnp.float32) / math.sqrt(cin)
        return w, jnp.zeros((cout, 1), jnp.float32)

    C = base_c
    p = {
        'enc1': conv3(1, C) + conv3(C, C),
        'enc2': conv3(C, 2 * C) + conv3(2 * C, 2 * C),
        'dec1': conv3(3 * C, C) + conv3(C, C) + conv1(C, enc_out_ch),
    }

    # PointDecoder(channels=[mid_ch] + mlp_chs, residual=True, use_bn=True)
    # BatchNorm1d folded as inference-mode per-channel affine (scale, shift).
    chs = [enc_out_ch] + list(mlp_chs)
    pd_w, pd_scale, pd_shift, pd_flags = [], [], [], []
    for i in range(len(chs) - 1):
        cin, cout = chs[i], chs[i + 1]
        w = jax.random.normal(next(keys), (cout, cin), jnp.float32) / math.sqrt(cin)
        b = jnp.zeros((cout,), jnp.float32)
        last = (i == len(chs) - 2)
        if last:
            scale = jnp.ones((cout,), jnp.float32)
            shift = b
        else:
            gamma = 1.0 + 0.1 * jax.random.normal(next(keys), (cout,), jnp.float32)
            beta = jnp.zeros((cout,), jnp.float32)
            run_mean = jnp.zeros((cout,), jnp.float32)
            run_var = jnp.ones((cout,), jnp.float32)
            inv = gamma / jnp.sqrt(run_var + 1e-5)
            scale = inv
            shift = beta + inv * (b - run_mean)
        pd_w.append(w)
        pd_scale.append(scale.reshape(cout, 1))
        pd_shift.append(shift.reshape(cout, 1))
        pd_flags.append((not last, (not last) and (cin == cout)))  # (relu, residual)
    p['pd_w'], p['pd_scale'], p['pd_shift'] = pd_w, pd_scale, pd_shift
    p['pd_flags'] = tuple(pd_flags)
    return p


def unet_encode(params, projs):
    # projs: (B, M, 1, H, W) NCHW -> feats (B, M, Cf, H*W), lane-dense on H*W
    B, M, Cin, H, W = projs.shape
    x = projs.reshape(B * M, Cin, H, W)
    e1 = double_conv3x3(x, *params['enc1'])                 # (BM, C, H, W)
    p1 = _maxpool2(e1)
    e2 = double_conv3x3(p1, *params['enc2'])                # (BM, 2C, H/2, W/2)
    u1 = _upsample2(e2)
    d1_in = jnp.concatenate([u1, e1], axis=1)               # skip connection
    feats = double_conv3x3(d1_in, *params['dec1'])          # (BM, Cf, H, W)
    Cf = feats.shape[1]
    return feats.reshape(B, M, Cf, H * W)                   # 'feats_proj'


def recon_base_forward(params, data, is_eval=False, eval_npoint=100000):
    projs = data['projs']
    H, W = projs.shape[3], projs.shape[4]
    feats = unet_encode(params, projs)                      # encode_projs
    layer_params = list(zip(params['pd_w'], params['pd_scale'], params['pd_shift']))
    layer_flags = params['pd_flags']

    def forward_points(points_proj):
        idx, wgt = _bilinear_corners(points_proj, H, W)
        return point_path(feats, idx, wgt, layer_params, layer_flags)

    if not is_eval:
        return {'points_pred': forward_points(data['points_proj'])}

    total_npoint = data['points_proj'].shape[2]
    n_batch = int(np.ceil(total_npoint / eval_npoint))
    pred_list = []
    for i in range(n_batch):
        left = i * eval_npoint
        right = min((i + 1) * eval_npoint, total_npoint)
        chunk = data['points_proj'][..., left:right, :]
        nvalid = right - left
        if nvalid < eval_npoint:
            # pad ragged tail to the fixed chunk size -> single compiled shape
            chunk = jnp.pad(chunk, ((0, 0), (0, 0), (0, eval_npoint - nvalid), (0, 0)))
        pred_list.append(forward_points(chunk)[..., :nvalid])
    return {'points_pred': jnp.concatenate(pred_list, axis=2)}


if __name__ == "__main__":
    key = jax.random.PRNGKey(0)
    kp, k1, k2 = jax.random.split(key, 3)
    B, M, H, W, N = 2, 2, 16, 16, 64          # batch, views, proj size, num points
    params = init_params(kp, base_c=8, enc_out_ch=8, mlp_chs=(32, 32, 1))
    data = {
        'projs': jax.random.normal(k1, (B, M, 1, H, W), jnp.float32),
        'points_proj': jax.random.uniform(k2, (B, M, N, 2), jnp.float32,
                                          minval=-1.0, maxval=1.0),
    }
    out = recon_base_forward(params, data, is_eval=False)
    pred = jax.block_until_ready(out['points_pred'])
    assert pred.shape == (B, 1, N)

    # eval path: chunked point processing with a padded ragged tail + concat
    out_eval = recon_base_forward(params, data, is_eval=True, eval_npoint=48)
    pred_eval = jax.block_until_ready(out_eval['points_pred'])
    assert pred_eval.shape == (B, 1, N)
    assert np.allclose(np.asarray(pred), np.asarray(pred_eval), atol=1e-3), \
        "train/eval point paths disagree"
    print("KERNEL_OK")
</pallas_src>

<mosaic_0001>
module attributes {stable_mosaic.version = 11 : i64} {
  func.func @_double_conv_kernel(%arg0: i32, %arg1: memref<1x1x20x20xf32, #tpu.memory_space<vmem>>, %arg2: memref<8x9xf32, #tpu.memory_space<vmem>>, %arg3: memref<8x1xf32, #tpu.memory_space<vmem>>, %arg4: memref<8x72xf32, #tpu.memory_space<vmem>>, %arg5: memref<8x1xf32, #tpu.memory_space<vmem>>, %arg6: memref<1x8x256xf32, #tpu.memory_space<vmem>>) attributes {dimension_semantics = [#tpu.dimension_semantics<parallel>], iteration_bounds = array<i64: 4>, scalar_prefetch = 0 : i64, scratch_operands = 0 : i64, tpu.core_type = #tpu.core_type<tc>, window_params = [{transform_indices = @transform_0, window_bounds = array<i64: 1, 1, 20, 20>}, {pipeline_mode = #tpu.pipeline_mode<synchronous>, transform_indices = @transform_1, window_bounds = array<i64: 8, 9>}, {pipeline_mode = #tpu.pipeline_mode<synchronous>, transform_indices = @transform_2, window_bounds = array<i64: 8, 1>}, {pipeline_mode = #tpu.pipeline_mode<synchronous>, transform_indices = @transform_3, window_bounds = array<i64: 8, 72>}, {pipeline_mode = #tpu.pipeline_mode<synchronous>, transform_indices = @transform_4, window_bounds = array<i64: 8, 1>}, {transform_indices = @transform_5, window_bounds = array<i64: 1, 8, 256>}]} {
    %c0 = arith.constant 0 : index
    %c0_0 = arith.constant 0 : index
    %c0_1 = arith.constant 0 : index
    %c0_2 = arith.constant 0 : index
    %0 = vector.load %arg1[%c0, %c0_0, %c0_1, %c0_2] : memref<1x1x20x20xf32, #tpu.memory_space<vmem>>, vector<1x1x20x20xf32>
    %1 = vector.shape_cast %0 : vector<1x1x20x20xf32> to vector<1x20x20xf32>
    %c0_3 = arith.constant 0 : index
    %c0_4 = arith.constant 0 : index
    %2 = vector.load %arg2[%c0_3, %c0_4] : memref<8x9xf32, #tpu.memory_space<vmem>>, vector<8x9xf32>
    %c0_5 = arith.constant 0 : index
    %c0_6 = arith.constant 0 : index
    %3 = vector.load %arg3[%c0_5, %c0_6] : memref<8x1xf32, #tpu.memory_space<vmem>>, vector<8x1xf32>
    %c0_7 = arith.constant 0 : index
    %c0_8 = arith.constant 0 : index
    %4 = vector.load %arg4[%c0_7, %c0_8] : memref<8x72xf32, #tpu.memory_space<vmem>>, vector<8x72xf32>
    %c0_9 = arith.constant 0 : index
    %c0_10 = arith.constant 0 : index
    %5 = vector.load %arg5[%c0_9, %c0_10] : memref<8x1xf32, #tpu.memory_space<vmem>>, vector<8x1xf32>
    %6 = vector.extract_strided_slice %1 {offsets = [0, 0, 0], sizes = [1, 18, 18], strides = [1, 1, 1]} : vector<1x20x20xf32> to vector<1x18x18xf32>
    %7 = vector.shape_cast %6 : vector<1x18x18xf32> to vector<1x324xf32>
    %8 = vector.extract_strided_slice %1 {offsets = [0, 0, 1], sizes = [1, 18, 18], strides = [1, 1, 1]} : vector<1x20x20xf32> to vector<1x18x18xf32>
    %9 = vector.shape_cast %8 : vector<1x18x18xf32> to vector<1x324xf32>
    %10 = vector.extract_strided_slice %1 {offsets = [0, 0, 2], sizes = [1, 18, 18], strides = [1, 1, 1]} : vector<1x20x20xf32> to vector<1x18x18xf32>
    %11 = vector.shape_cast %10 : vector<1x18x18xf32> to vector<1x324xf32>
    %12 = vector.extract_strided_slice %1 {offsets = [0, 1, 0], sizes = [1, 18, 18], strides = [1, 1, 1]} : vector<1x20x20xf32> to vector<1x18x18xf32>
    %13 = vector.shape_cast %12 : vector<1x18x18xf32> to vector<1x324xf32>
    %14 = vector.extract_strided_slice %1 {offsets = [0, 1, 1], sizes = [1, 18, 18], strides = [1, 1, 1]} : vector<1x20x20xf32> to vector<1x18x18xf32>
    %15 = vector.shape_cast %14 : vector<1x18x18xf32> to vector<1x324xf32>
    %16 = vector.extract_strided_slice %1 {offsets = [0, 1, 2], sizes = [1, 18, 18], strides = [1, 1, 1]} : vector<1x20x20xf32> to vector<1x18x18xf32>
    %17 = vector.shape_cast %16 : vector<1x18x18xf32> to vector<1x324xf32>
    %18 = vector.extract_strided_slice %1 {offsets = [0, 2, 0], sizes = [1, 18, 18], strides = [1, 1, 1]} : vector<1x20x20xf32> to vector<1x18x18xf32>
    %19 = vector.shape_cast %18 : vector<1x18x18xf32> to vector<1x324xf32>
    %20 = vector.extract_strided_slice %1 {offsets = [0, 2, 1], sizes = [1, 18, 18], strides = [1, 1, 1]} : vector<1x20x20xf32> to vector<1x18x18xf32>
    %21 = vector.shape_cast %20 : vector<1x18x18xf32> to vector<1x324xf32>
    %22 = vector.extract_strided_slice %1 {offsets = [0, 2, 2], sizes = [1, 18, 18], strides = [1, 1, 1]} : vector<1x20x20xf32> to vector<1x18x18xf32>
    %23 = vector.shape_cast %22 : vector<1x18x18xf32> to vector<1x324xf32>
    %24 = tpu.concatenate %7, %9, %11, %13, %15, %17, %19, %21, %23 in 0 : vector<1x324xf32>, vector<1x324xf32>, vector<1x324xf32>, vector<1x324xf32>, vector<1x324xf32>, vector<1x324xf32>, vector<1x324xf32>, vector<1x324xf32>, vector<1x324xf32> -> vector<9x324xf32>
    %cst = arith.constant dense<0.000000e+00> : vector<8x324xf32>
    %25 = tpu.matmul %2, %24, %cst {dimension_numbers = #tpu.dot_dimension_numbers<[1], [0], [0], [1], [0, 0, 1, 1], [], []>} : vector<8x9xf32>, vector<9x324xf32>, vector<8x324xf32> -> vector<8x324xf32>
    %26 = vector.broadcast %3 : vector<8x1xf32> to vector<8x324xf32>
    %27 = arith.addf %25, %26 : vector<8x324xf32>
    %cst_11 = arith.constant 0.000000e+00 : f32
    %28 = vector.broadcast %cst_11 : f32 to vector<8x324xf32>
    %29 = arith.maximumf %27, %28 : vector<8x324xf32>
    %30 = tpu.iota {dimensions = array<i32: 0>} : vector<18x18xi32>
    %31 = tpu.iota {dimensions = array<i32: 1>} : vector<18x18xi32>
    %c1_i32 = arith.constant 1 : i32
    %32 = vector.broadcast %c1_i32 : i32 to vector<18x18xi32>
    %33 = arith.cmpi sge, %30, %32 : vector<18x18xi32>
    %c16_i32 = arith.constant 16 : i32
    %34 = vector.broadcast %c16_i32 : i32 to vector<18x18xi32>
    %35 = arith.cmpi sle, %30, %34 : vector<18x18xi32>
    %36 = arith.andi %33, %35 : vector<18x18xi1>
    %c1_i32_12 = arith.constant 1 : i32
    %37 = vector.broadcast %c1_i32_12 : i32 to vector<18x18xi32>
    %38 = arith.cmpi sge, %31, %37 : vector<18x18xi32>
    %39 = arith.andi %36, %38 : vector<18x18xi1>
    %c16_i32_13 = arith.constant 16 : i32
    %40 = vector.broadcast %c16_i32_13 : i32 to vector<18x18xi32>
    %41 = arith.cmpi sle, %31, %40 : vector<18x18xi32>
    %42 = arith.andi %39, %41 : vector<18x18xi1>
    %43 = arith.extui %42 : vector<18x18xi1> to vector<18x18xi32>
    %44 = arith.sitofp %43 : vector<18x18xi32> to vector<18x18xf32>
    %45 = vector.shape_cast %29 : vector<8x324xf32> to vector<8x18x18xf32>
    %46 = vector.shape_cast %44 : vector<18x18xf32> to vector<1x18x18xf32>
    %47 = vector.broadcast %46 : vector<1x18x18xf32> to vector<8x18x18xf32>
    %48 = arith.mulf %45, %47 : vector<8x18x18xf32>
    %49 = vector.extract_strided_slice %48 {offsets = [0, 0, 0], sizes = [8, 16, 16], strides = [1, 1, 1]} : vector<8x18x18xf32> to vector<8x16x16xf32>
    %50 = vector.shape_cast %49 : vector<8x16x16xf32> to vector<8x256xf32>
    %51 = vector.extract_strided_slice %48 {offsets = [0, 0, 1], sizes = [8, 16, 16], strides = [1, 1, 1]} : vector<8x18x18xf32> to vector<8x16x16xf32>
    %52 = vector.shape_cast %51 : vector<8x16x16xf32> to vector<8x256xf32>
    %53 = vector.extract_strided_slice %48 {offsets = [0, 0, 2], sizes = [8, 16, 16], strides = [1, 1, 1]} : vector<8x18x18xf32> to vector<8x16x16xf32>
    %54 = vector.shape_cast %53 : vector<8x16x16xf32> to vector<8x256xf32>
    %55 = vector.extract_strided_slice %48 {offsets = [0, 1, 0], sizes = [8, 16, 16], strides = [1, 1, 1]} : vector<8x18x18xf32> to vector<8x16x16xf32>
    %56 = vector.shape_cast %55 : vector<8x16x16xf32> to vector<8x256xf32>
    %57 = vector.extract_strided_slice %48 {offsets = [0, 1, 1], sizes = [8, 16, 16], strides = [1, 1, 1]} : vector<8x18x18xf32> to vector<8x16x16xf32>
    %58 = vector.shape_cast %57 : vector<8x16x16xf32> to vector<8x256xf32>
    %59 = vector.extract_strided_slice %48 {offsets = [0, 1, 2], sizes = [8, 16, 16], strides = [1, 1, 1]} : vector<8x18x18xf32> to vector<8x16x16xf32>
    %60 = vector.shape_cast %59 : vector<8x16x16xf32> to vector<8x256xf32>
    %61 = vector.extract_strided_slice %48 {offsets = [0, 2, 0], sizes = [8, 16, 16], strides = [1, 1, 1]} : vector<8x18x18xf32> to vector<8x16x16xf32>
    %62 = vector.shape_cast %61 : vector<8x16x16xf32> to vector<8x256xf32>
    %63 = vector.extract_strided_slice %48 {offsets = [0, 2, 1], sizes = [8, 16, 16], strides = [1, 1, 1]} : vector<8x18x18xf32> to vector<8x16x16xf32>
    %64 = vector.shape_cast %63 : vector<8x16x16xf32> to vector<8x256xf32>
    %65 = vector.extract_strided_slice %48 {offsets = [0, 2, 2], sizes = [8, 16, 16], strides = [1, 1, 1]} : vector<8x18x18xf32> to vector<8x16x16xf32>
    %66 = vector.shape_cast %65 : vector<8x16x16xf32> to vector<8x256xf32>
    %67 = tpu.concatenate %50, %52, %54, %56, %58, %60, %62, %64, %66 in 0 : vector<8x256xf32>, vector<8x256xf32>, vector<8x256xf32>, vector<8x256xf32>, vector<8x256xf32>, vector<8x256xf32>, vector<8x256xf32>, vector<8x256xf32>, vector<8x256xf32> -> vector<72x256xf32>
    %cst_14 = arith.constant dense<0.000000e+00> : vector<8x256xf32>
    %68 = tpu.matmul %4, %67, %cst_14 {dimension_numbers = #tpu.dot_dimension_numbers<[1], [0], [0], [1], [0, 0, 1, 1], [], []>} : vector<8x72xf32>, vector<72x256xf32>, vector<8x256xf32> -> vector<8x256xf32>
    %69 = vector.broadcast %5 : vector<8x1xf32> to vector<8x256xf32>
    %70 = arith.addf %68, %69 : vector<8x256xf32>
    %cst_15 = arith.constant 0.000000e+00 : f32
    %71 = vector.broadcast %cst_15 : f32 to vector<8x256xf32>
    %72 = arith.maximumf %70, %71 : vector<8x256xf32>
    %73 = vector.shape_cast %72 : vector<8x256xf32> to vector<1x8x256xf32>
    %c0_16 = arith.constant 0 : index
    %c0_17 = arith.constant 0 : index
    %c0_18 = arith.constant 0 : index
    %74 = vector.load %arg6[%c0_16, %c0_17, %c0_18] : memref<1x8x256xf32, #tpu.memory_space<vmem>>, vector<1x8x256xf32>
    tpu.vector_store %arg6[%c0_16, %c0_17, %c0_18], %73 {strides = array<i32>} : memref<1x8x256xf32, #tpu.memory_space<vmem>>, vector<1x8x256xf32>,
    return
  }
  func.func @transform_0(%arg0: i32) -> (i32, i32, i32, i32) {
    %c0_i32 = arith.constant 0 : i32
    %c0_i32_0 = arith.constant 0 : i32
    %c0_i32_1 = arith.constant 0 : i32
    %c0_i32_2 = arith.constant 0 : i32
    return %arg0, %c0_i32, %c0_i32_0, %c0_i32_1 : i32, i32, i32, i32
  }
  func.func @transform_1(%arg0: i32) -> (i32, i32) {
    %c0_i32 = arith.constant 0 : i32
    %c0_i32_0 = arith.constant 0 : i32
    %c0_i32_1 = arith.constant 0 : i32
    return %c0_i32, %c0_i32_0 : i32, i32
  }
  func.func @transform_2(%arg0: i32) -> (i32, i32) {
    %c0_i32 = arith.constant 0 : i32
    %c0_i32_0 = arith.constant 0 : i32
    %c0_i32_1 = arith.constant 0 : i32
    return %c0_i32, %c0_i32_0 : i32, i32
  }
  func.func @transform_3(%arg0: i32) -> (i32, i32) {
    %c0_i32 = arith.constant 0 : i32
    %c0_i32_0 = arith.constant 0 : i32
    %c0_i32_1 = arith.constant 0 : i32
    return %c0_i32, %c0_i32_0 : i32, i32
  }
  func.func @transform_4(%arg0: i32) -> (i32, i32) {
    %c0_i32 = arith.constant 0 : i32
    %c0_i32_0 = arith.constant 0 : i32
    %c0_i32_1 = arith.constant 0 : i32
    return %c0_i32, %c0_i32_0 : i32, i32
  }
  func.func @transform_5(%arg0: i32) -> (i32, i32, i32) {
    %c0_i32 = arith.constant 0 : i32
    %c0_i32_0 = arith.constant 0 : i32
    %c0_i32_1 = arith.constant 0 : i32
    return %arg0, %c0_i32, %c0_i32_0 : i32, i32, i32
  }
}

</mosaic_0001>

<llo_original>
// kernel: tpu_custom_call.1
$region0: #{tpu_custom_call.1}
  #allocation0 [shape = 'u32[]', space=smem, size = 0x4, offset = 0x4, fixed_abs, tag = 'smem constant byte address 0x4 - core index']
  #allocation1 [shape = 'u32[144,128]{1,0:T(1,128)}', space=vmem, size = 0x12000, scoped, tag = 'internal scratch']
  %s0 = inlined_call_operand.vmem [shape: f32[4,1,20,20], index: 0, kind: input, shape index: {}]
  %s1 = inlined_call_operand.vmem [shape: f32[8,9], index: 1, kind: input, shape index: {}]
  %s2 = inlined_call_operand.vmem [shape: f32[8,1], index: 2, kind: input, shape index: {}]
  %s3 = inlined_call_operand.vmem [shape: f32[8,72], index: 3, kind: input, shape index: {}]
  %s4 = inlined_call_operand.vmem [shape: f32[8,1], index: 4, kind: input, shape index: {}]
  %s5 = inlined_call_operand.hbm [shape: f32[4,8,256], index: 5, kind: output, shape index: {}]
  %s6 = sld [smem:[#allocation0]]
  $region53: #{tpu_custom_call.1} parent=0
    _
  %s8 = ssub.s32 1, %s6
  %s9 = scalar_select 0, %s8, %s6
  $region1: #{tpu_custom_call.1} parent=0
    #allocation2 [shape = 'u8[16384]{0}', space=vmem, size = 0x4000, scoped, tag = 'output window, operand 0']
    #allocation3 [shape = 's32[2]{0}', space=sflag, size = 0x8, scoped, tag = 'scoped memory for tpu_custom_call.1']
    %10 = vsyncpa [#allocation3], 0
    %s11 = scalar_lea.sflag [#allocation3], 1
    %12 = vsyncpa %s11, 0
    loop: start=0, step=1, limit=6
    $region2: #{tpu_custom_call.1} parent=1 // loop_pre_header
      _
    $region3: #{tpu_custom_call.1} parent=1 // loop_header
      %s14 = sphi 0, %s18
      %p15 = scmp.ge.s32.totalorder %s14, 6
      %s24 = sphi 0, %s26
      %s27 = sphi 0, %s24
      %s28 = sphi 0, %s27
      %s44 = sphi 0, %s28
      %s48 = sphi 0, %s48
      %s50 = sphi 0, %s48
      %s51 = sphi 0, %s50
      %s65 = sphi 0, %s51
      %s69 = sphi 0, %s69
      %s71 = sphi 0, %s69
      %s72 = sphi 0, %s71
      %s86 = sphi 0, %s72
      %s90 = sphi 0, %s90
      %s92 = sphi 0, %s90
      %s93 = sphi 0, %s92
      %s107 = sphi 0, %s93
      %s111 = sphi 0, %s111
      %s113 = sphi 0, %s111
      %s114 = sphi 0, %s113
      %s128 = sphi 0, %s114
      %s134 = sphi 0, %s136
      %s137 = sphi 0, %s134
      %s138 = sphi 0, %s137
      %s154 = sphi 0, %s138
    $region4: #{tpu_custom_call.1} parent=1 // loop_header_branch
      %17 = sbr.rel (%p15) target = $region8
    $region5: #{tpu_custom_call.1} parent=1 // loop_body
      %s19 = ssub.s32 %s14, 1
      %s20 = ssub.s32 %s14, 2
      %s21 = sadd.s32 %s14, 1
      %s22 = ssub.s32 %s14, %s21
      %p23 = scmp.eq.s32.totalorder %s22, 0
      %s25 = sadd.s32 %s24, 1
      %s26 = scalar_select %p23, %s24, %s25
      %p29 = pneg %p23
      %p30 = scmp.eq.s32.totalorder %s14, 3
      %p31 = por %p29, %p30
      %p32 = scmp.ne.s32.totalorder %s24, %s27
      %p33 = scmp.eq.s32.totalorder %s14, 0
      %p34 = por %p32, %p33
      %p35 = scmp.ne.s32.totalorder %s24, %s27
      %p36 = scmp.eq.s32.totalorder %s19, 3
      %p37 = por %p35, %p36
      %p38 = scmp.ne.s32.totalorder %s27, %s28
      %p39 = scmp.eq.s32.totalorder %s19, 0
      %p40 = por %p38, %p39
      %p41 = scmp.ne.s32.totalorder %s27, %s28
      %p42 = scmp.eq.s32.totalorder %s20, 3
      %p43 = por %p41, %p42
      %p45 = scmp.ne.s32.totalorder %s28, %s44
      %p46 = scmp.eq.s32.totalorder %s20, 0
      %p47 = por %p45, %p46
      %s49 = sadd.s32 %s48, 1
      %p52 = scmp.eq.s32.totalorder %s14, 3
      %p53 = scmp.ne.s32.totalorder %s48, %s50
      %p54 = scmp.eq.s32.totalorder %s14, 0
      %p55 = por %p53, %p54
      %p56 = scmp.ne.s32.totalorder %s48, %s50
      %p57 = scmp.eq.s32.totalorder %s19, 3
      %p58 = por %p56, %p57
      %p59 = scmp.ne.s32.totalorder %s50, %s51
      %p60 = scmp.eq.s32.totalorder %s19, 0
      %p61 = por %p59, %p60
      %p62 = scmp.ne.s32.totalorder %s50, %s51
      %p63 = scmp.eq.s32.totalorder %s20, 3
      %p64 = por %p62, %p63
      %p66 = scmp.ne.s32.totalorder %s51, %s65
      %p67 = scmp.eq.s32.totalorder %s20, 0
      %p68 = por %p66, %p67
      %s70 = sadd.s32 %s69, 1
      %p73 = scmp.eq.s32.totalorder %s14, 3
      %p74 = scmp.ne.s32.totalorder %s69, %s71
      %p75 = scmp.eq.s32.totalorder %s14, 0
      %p76 = por %p74, %p75
      %p77 = scmp.ne.s32.totalorder %s69, %s71
      %p78 = scmp.eq.s32.totalorder %s19, 3
      %p79 = por %p77, %p78
      %p80 = scmp.ne.s32.totalorder %s71, %s72
      %p81 = scmp.eq.s32.totalorder %s19, 0
      %p82 = por %p80, %p81
      %p83 = scmp.ne.s32.totalorder %s71, %s72
      %p84 = scmp.eq.s32.totalorder %s20, 3
      %p85 = por %p83, %p84
      %p87 = scmp.ne.s32.totalorder %s72, %s86
      %p88 = scmp.eq.s32.totalorder %s20, 0
      %p89 = por %p87, %p88
      %s91 = sadd.s32 %s90, 1
      %p94 = scmp.eq.s32.totalorder %s14, 3
      %p95 = scmp.ne.s32.totalorder %s90, %s92
      %p96 = scmp.eq.s32.totalorder %s14, 0
      %p97 = por %p95, %p96
      %p98 = scmp.ne.s32.totalorder %s90, %s92
      %p99 = scmp.eq.s32.totalorder %s19, 3
      %p100 = por %p98, %p99
      %p101 = scmp.ne.s32.totalorder %s92, %s93
      %p102 = scmp.eq.s32.totalorder %s19, 0
      %p103 = por %p101, %p102
      %p104 = scmp.ne.s32.totalorder %s92, %s93
      %p105 = scmp.eq.s32.totalorder %s20, 3
      %p106 = por %p104, %p105
      %p108 = scmp.ne.s32.totalorder %s93, %s107
      %p109 = scmp.eq.s32.totalorder %s20, 0
      %p110 = por %p108, %p109
      %s112 = sadd.s32 %s111, 1
      %p115 = scmp.eq.s32.totalorder %s14, 3
      %p116 = scmp.ne.s32.totalorder %s111, %s113
      %p117 = scmp.eq.s32.totalorder %s14, 0
      %p118 = por %p116, %p117
      %p119 = scmp.ne.s32.totalorder %s111, %s113
      %p120 = scmp.eq.s32.totalorder %s19, 3
      %p121 = por %p119, %p120
      %p122 = scmp.ne.s32.totalorder %s113, %s114
      %p123 = scmp.eq.s32.totalorder %s19, 0
      %p124 = por %p122, %p123
      %p125 = scmp.ne.s32.totalorder %s113, %s114
      %p126 = scmp.eq.s32.totalorder %s20, 3
      %p127 = por %p125, %p126
      %p129 = scmp.ne.s32.totalorder %s114, %s128
      %p130 = scmp.eq.s32.totalorder %s20, 0
      %p131 = por %p129, %p130
      %s132 = ssub.s32 %s14, %s21
      %p133 = scmp.eq.s32.totalorder %s132, 0
      %s135 = sadd.s32 %s134, 1
      %s136 = scalar_select %p133, %s134, %s135
      %p139 = pneg %p133
      %p140 = scmp.eq.s32.totalorder %s14, 3
      %p141 = por %p139, %p140
      %p142 = scmp.ne.s32.totalorder %s134, %s137
      %p143 = scmp.eq.s32.totalorder %s14, 0
      %p144 = por %p142, %p143
      %p145 = scmp.ne.s32.totalorder %s134, %s137
      %p146 = scmp.eq.s32.totalorder %s19, 3
      %p147 = por %p145, %p146
      %p148 = scmp.ne.s32.totalorder %s137, %s138
      %p149 = scmp.eq.s32.totalorder %s19, 0
      %p150 = por %p148, %p149
      %p151 = scmp.ne.s32.totalorder %s137, %s138
      %p152 = scmp.eq.s32.totalorder %s20, 3
      %p153 = por %p151, %p152
      %p155 = scmp.ne.s32.totalorder %s138, %s154
      %p156 = scmp.eq.s32.totalorder %s20, 0
      %p157 = por %p155, %p156
      %p158 = scmp.le.s32.totalorder 1, %s14
      %p159 = scmp.lt.s32.totalorder %s14, 5
      %p160 = pnand %p158, %p159
      %p161 = pneg %p160
      // Predicated region
      $region9: #{tpu_custom_call.1} parent=5 // pred_check
        _
      $region10: #{tpu_custom_call.1} parent=5 // pred_check_branch
        %163 = sbr.rel (%p160) target = $region12
      $region11: #{tpu_custom_call.1} parent=5 // pred_region
        %s164 = ssub.s32 %s14, 1
        // Predicated region
        $region13: #{tpu_custom_call.1} parent=11 // pred_check
          %p165 = pneg %p61
        $region14: #{tpu_custom_call.1} parent=11 // pred_check_branch
          %167 = sbr.rel (%p165) target = $region16
        $region15: #{tpu_custom_call.1} parent=11 // pred_region
          _
        $region16: #{tpu_custom_call.1} parent=11 // pred_fallthru
          _
        // Predicated region
        $region17: #{tpu_custom_call.1} parent=11 // pred_check
          %p168 = pneg %p82
        $region18: #{tpu_custom_call.1} parent=11 // pred_check_branch
          %170 = sbr.rel (%p168) target = $region20
        $region19: #{tpu_custom_call.1} parent=11 // pred_region
          _
        $region20: #{tpu_custom_call.1} parent=11 // pred_fallthru
          _
        // Predicated region
        $region21: #{tpu_custom_call.1} parent=11 // pred_check
          %p171 = pneg %p103
        $region22: #{tpu_custom_call.1} parent=11 // pred_check_branch
          %173 = sbr.rel (%p171) target = $region24
        $region23: #{tpu_custom_call.1} parent=11 // pred_region
          _
        $region24: #{tpu_custom_call.1} parent=11 // pred_fallthru
          _
        // Predicated region
        $region25: #{tpu_custom_call.1} parent=11 // pred_check
          %p174 = pneg %p124
        $region26: #{tpu_custom_call.1} parent=11 // pred_check_branch
          %176 = sbr.rel (%p174) target = $region28
        $region27: #{tpu_custom_call.1} parent=11 // pred_region
          _
        $region28: #{tpu_custom_call.1} parent=11 // pred_fallthru
          _
      $region12: #{tpu_custom_call.1} parent=5 // pred_fallthru
        _
      %p177 = scmp.lt.s32.totalorder %s14, 4
      // Predicated region
      $region29: #{tpu_custom_call.1} parent=5 // pred_check
        %p178 = pneg %p177
      $region30: #{tpu_custom_call.1} parent=5 // pred_check_branch
        %180 = sbr.rel (%p178) target = $region32
      $region31: #{tpu_custom_call.1} parent=5 // pred_region
        // Predicated region
        $region33: #{tpu_custom_call.1} parent=31 // pred_check
          %p181 = pneg %p34
        $region34: #{tpu_custom_call.1} parent=31 // pred_check_branch
          %183 = sbr.rel (%p181) target = $region36
        $region35: #{tpu_custom_call.1} parent=31 // pred_region
          %p184 = scmp.lt.s32.totalorder %s14, 3
          %s185 = scalar_select %p184, %s14, 3
          %s186 = smul.addr %s185, 3
          %s187 = smul.addr %s186, 8
          %s188 = scalar_lea.vmem %s0, %s187
        $region36: #{tpu_custom_call.1} parent=31 // pred_fallthru
          _
      $region32: #{tpu_custom_call.1} parent=5 // pred_fallthru
        _
      %p189 = scmp.le.s32.totalorder 1, %s14
      %p190 = scmp.lt.s32.totalorder %s14, 5
      %p191 = pnand %p189, %p190
      %p192 = pneg %p191
      // Predicated region
      $region37: #{tpu_custom_call.1} parent=5 // pred_check
        _
      $region38: #{tpu_custom_call.1} parent=5 // pred_check_branch
        %194 = sbr.rel (%p191) target = $region40
      $region39: #{tpu_custom_call.1} parent=5 // pred_region
        %s195 = ssub.s32 %s14, 1
        %p196 = scmp.lt.s32.totalorder %s19, 3
        %s197 = scalar_select %p196, %s19, 3
        %s198 = smul.addr %s197, 3
        %s199 = smul.addr %s198, 8
        %s200 = scalar_lea.vmem %s0, %s199
        %p201 = pneg %p40
        %p202 = pneg %p37
        %p203 = pneg %p61
        %p204 = pneg %p58
        %p205 = pneg %p82
        %p206 = pneg %p79
        %p207 = pneg %p103
        %p208 = pneg %p100
        %p209 = pneg %p124
        %p210 = pneg %p121
        %p211 = pneg %p150
        %p212 = pneg %p147
        %s213 = sand.u32 %s137, 1
        %s214 = scalar_lea.sflag [#allocation3], %s213
        %s215 = sand.u32 %s137, 1
        %s216 = smul.addr %s215, 16
        %s217 = scalar_lea.vmem [#allocation2], %s216
        %p218 = scmp.lt.s32.totalorder %s19, 3
        %s219 = scalar_select %p218, %s19, 3
        %s220 = smul.addr %s219, 3
        %s221 = smul.addr %s220, 8
        %s222 = scalar_lea.vmem %s0, %s221
        %v223 = vld [vmem:[%s222] sm:$0xff]
        %v224 = vld [vmem:[%s222 + $0x8] sm:$0xff]
        %v225 = vld [vmem:[%s222 + $0x10] sm:$0xf]
        %v226 = vld [vmem:[%s1] sm:$0xff]
        %v227 = vld [vmem:[%s2] sm:$0xff]
        %v228 = vld [vmem:[%s3] sm:$0xff]
        %v229 = vld [vmem:[%s4] sm:$0xff]
        %v230 = vcombine.high %v223, 0.0
        %v232 = vunpack.c.l.s4 1983009808
        %v233 = vunpack.c.0.s8 %v232
        %v234 = vlaneseq
        %v235 = vshrl.u32 %v234, 7
        %v236 = vsub.s32 %v233, %v235
        %v237 = vrot.slane %v223, %v236
        %v239 = vunpack.c.l.s4 1983009808
        %v240 = vunpack.c.0.s8 %v239
        %v241 = vlaneseq
        %v242 = vshrl.u32 %v241, 7
        %v243 = vsub.s32 %v240, %v242
        %v244 = vrot.slane %v230, %v243
        %v245 = vcombine.high %v237, 0.0
        %v247 = vunpack.c.l.s4 1934713408
        %v248 = vunpack.c.0.s8 %v247
        %v249 = vlaneseq
        %v250 = vshrl.u32 %v249, 7
        %v251 = vsub.s32 %v248, %v250
        %v252 = vrot.slane %v237, %v251
        %v254 = vunpack.c.l.s4 1934713408
        %v255 = vunpack.c.0.s8 %v254
        %v256 = vlaneseq
        %v257 = vshrl.u32 %v256, 7
        %v258 = vsub.s32 %v255, %v257
        %v259 = vrot.slane %v245, %v258
        %v260 = vcombine.high %v244, 0.0
        %v262 = vunpack.c.l.s4 1934713408
        %v263 = vunpack.c.0.s8 %v262
        %v264 = vlaneseq
        %v265 = vshrl.u32 %v264, 7
        %v266 = vsub.s32 %v263, %v265
        %v267 = vrot.slane %v244, %v266
        %v269 = vunpack.c.l.s4 1934713408
        %v270 = vunpack.c.0.s8 %v269
        %v271 = vlaneseq
        %v272 = vshrl.u32 %v271, 7
        %v273 = vsub.s32 %v270, %v272
        %v274 = vrot.slane %v260, %v273
        %v275 = vcombine.high %v252, 0.0
        %v276 = vcombine.high %v259, 0.0
        %v277 = vcombine.high %v267, 0.0
        %v278 = vcombine.high %v274, 0.0
        %v279 = vcombine.high %v224, 0.0
        %v281 = vunpack.c.l.s4 1983009808
        %v282 = vunpack.c.0.s8 %v281
        %v283 = vlaneseq
        %v284 = vshrl.u32 %v283, 7
        %v285 = vsub.s32 %v282, %v284
        %v286 = vrot.slane %v224, %v285
        %v288 = vunpack.c.l.s4 1983009808
        %v289 = vunpack.c.0.s8 %v288
        %v290 = vlaneseq
        %v291 = vshrl.u32 %v290, 7
        %v292 = vsub.s32 %v289, %v291
        %v293 = vrot.slane %v279, %v292
        %v294 = vcombine.high %v286, 0.0
        %v296 = vunpack.c.l.s4 1934713408
        %v297 = vunpack.c.0.s8 %v296
        %v298 = vlaneseq
        %v299 = vshrl.u32 %v298, 7
        %v300 = vsub.s32 %v297, %v299
        %v301 = vrot.slane %v286, %v300
        %v303 = vunpack.c.l.s4 1934713408
        %v304 = vunpack.c.0.s8 %v303
        %v305 = vlaneseq
        %v306 = vshrl.u32 %v305, 7
        %v307 = vsub.s32 %v304, %v306
        %v308 = vrot.slane %v294, %v307
        %v309 = vcombine.high %v293, 0.0
        %v311 = vunpack.c.l.s4 1934713408
        %v312 = vunpack.c.0.s8 %v311
        %v313 = vlaneseq
        %v314 = vshrl.u32 %v313, 7
        %v315 = vsub.s32 %v312, %v314
        %v316 = vrot.slane %v293, %v315
        %v318 = vunpack.c.l.s4 1934713408
        %v319 = vunpack.c.0.s8 %v318
        %v320 = vlaneseq
        %v321 = vshrl.u32 %v320, 7
        %v322 = vsub.s32 %v319, %v321
        %v323 = vrot.slane %v309, %v322
        %v324 = vcombine.high %v301, 0.0
        %v325 = vcombine.high %v308, 0.0
        %v326 = vcombine.high %v316, 0.0
        %v327 = vcombine.high %v323, 0.0
        %v329 = vunpack.c.l.s4 1934713408
        %v330 = vunpack.c.0.s8 %v329
        %v331 = vlaneseq
        %v332 = vshrl.u32 %v331, 7
        %v333 = vsub.s32 %v330, %v332
        %v334 = vrot.slane %v225, %v333
        %v335 = vcombine.high %v334, 0.0
        %337 = vrot.lane.b32.xlu0 %v275, 18
        %v338 = vpop.permute.xlu0 %337
        %341 = vrot.lane.b32.xlu0 %v259, 36
        %v342 = vpop.permute.xlu0 %341
        %345 = vrot.lane.b32.xlu0 %v276, 54
        %v346 = vpop.permute.xlu0 %345
        %349 = vrot.lane.b32.xlu0 %v267, 72
        %v350 = vpop.permute.xlu0 %349
        %353 = vrot.lane.b32.xlu0 %v277, 90
        %v354 = vpop.permute.xlu0 %353
        %357 = vrot.lane.b32.xlu0 %v274, 108
        %v358 = vpop.permute.xlu0 %357
        %361 = vrot.lane.b32.xlu0 %v278, 126
        %v362 = vpop.permute.xlu0 %361
        %365 = vrot.lane.b32.xlu0 %v301, 16
        %v366 = vpop.permute.xlu0 %365
        %369 = vrot.lane.b32.xlu0 %v324, 34
        %v370 = vpop.permute.xlu0 %369
        %373 = vrot.lane.b32.xlu0 %v308, 52
        %v374 = vpop.permute.xlu0 %373
        %377 = vrot.lane.b32.xlu0 %v325, 70
        %v378 = vpop.permute.xlu0 %377
        %381 = vrot.lane.b32.xlu0 %v316, 88
        %v382 = vpop.permute.xlu0 %381
        %385 = vrot.lane.b32.xlu0 %v326, 106
        %v386 = vpop.permute.xlu0 %385
        %389 = vrot.lane.b32.xlu0 %v323, 124
        %v390 = vpop.permute.xlu0 %389
        %393 = vrot.lane.b32.xlu0 %v327, 14
        %v394 = vpop.permute.xlu0 %393
        %397 = vrot.lane.b32.xlu0 %v334, 32
        %v398 = vpop.permute.xlu0 %397
        %401 = vrot.lane.b32.xlu0 %v335, 50
        %v402 = vpop.permute.xlu0 %401
        %vm404 = vcmask 146432
        %v405 = vsel %vm404, %v252, %v338
        %vm406 = vcmask 293888
        %v407 = vsel %vm406, %v405, %v342
        %vm408 = vcmask 441344
        %v409 = vsel %vm408, %v407, %v346
        %vm410 = vcmask 588800
        %v411 = vsel %vm410, %v409, %v350
        %vm412 = vcmask 736256
        %v413 = vsel %vm412, %v411, %v354
        %vm414 = vcmask 883712
        %v415 = vsel %vm414, %v413, %v358
        %vm416 = vcmask 1031168
        %v417 = vsel %vm416, %v415, %v362
        %vm418 = vcmask 130048
        %v419 = vsel %vm418, %v362, %v366
        %vm420 = vcmask 277504
        %v421 = vsel %vm420, %v419, %v370
        %vm422 = vcmask 424960
        %v423 = vsel %vm422, %v421, %v374
        %vm424 = vcmask 572416
        %v425 = vsel %vm424, %v423, %v378
        %vm426 = vcmask 719872
        %v427 = vsel %vm426, %v425, %v382
        %vm428 = vcmask 867328
        %v429 = vsel %vm428, %v427, %v386
        %vm430 = vcmask 1014784
        %v431 = vsel %vm430, %v429, %v390
        %vm432 = vcmask 113664
        %v433 = vsel %vm432, %v390, %v394
        %vm434 = vcmask 261120
        %v435 = vsel %vm434, %v433, %v398
        %vm436 = vcmask 408576
        %v437 = vsel %vm436, %v435, %v402
        %441 = vrot.lane.b32.xlu0 %v223, 127
        %v442 = vpop.permute.xlu0 %441
        %443 = vrot.lane.b32.xlu0 %v224, 127
        %v444 = vpop.permute.xlu0 %443
        %445 = vrot.lane.b32.xlu0 %v225, 127
        %v446 = vpop.permute.xlu0 %445
        %v449 = vcombine.high %v442, 0.0
        %v451 = vunpack.c.l.s4 1983009808
        %v452 = vunpack.c.0.s8 %v451
        %v453 = vlaneseq
        %v454 = vshrl.u32 %v453, 7
        %v455 = vsub.s32 %v452, %v454
        %v456 = vrot.slane %v442, %v455
        %v458 = vunpack.c.l.s4 1983009808
        %v459 = vunpack.c.0.s8 %v458
        %v460 = vlaneseq
        %v461 = vshrl.u32 %v460, 7
        %v462 = vsub.s32 %v459, %v461
        %v463 = vrot.slane %v449, %v462
        %v464 = vcombine.high %v456, 0.0
        %v466 = vunpack.c.l.s4 1934713408
        %v467 = vunpack.c.0.s8 %v466
        %v468 = vlaneseq
        %v469 = vshrl.u32 %v468, 7
        %v470 = vsub.s32 %v467, %v469
        %v471 = vrot.slane %v456, %v470
        %v473 = vunpack.c.l.s4 1934713408
        %v474 = vunpack.c.0.s8 %v473
        %v475 = vlaneseq
        %v476 = vshrl.u32 %v475, 7
        %v477 = vsub.s32 %v474, %v476
        %v478 = vrot.slane %v464, %v477
        %v479 = vcombine.high %v463, 0.0
        %v481 = vunpack.c.l.s4 1934713408
        %v482 = vunpack.c.0.s8 %v481
        %v483 = vlaneseq
        %v484 = vshrl.u32 %v483, 7
        %v485 = vsub.s32 %v482, %v484
        %v486 = vrot.slane %v463, %v485
        %v488 = vunpack.c.l.s4 1934713408
        %v489 = vunpack.c.0.s8 %v488
        %v490 = vlaneseq
        %v491 = vshrl.u32 %v490, 7
        %v492 = vsub.s32 %v489, %v491
        %v493 = vrot.slane %v479, %v492
        %v494 = vcombine.high %v471, 0.0
        %v495 = vcombine.high %v478, 0.0
        %v496 = vcombine.high %v486, 0.0
        %v497 = vcombine.high %v493, 0.0
        %v498 = vcombine.high %v444, 0.0
        %v500 = vunpack.c.l.s4 1983009808
        %v501 = vunpack.c.0.s8 %v500
        %v502 = vlaneseq
        %v503 = vshrl.u32 %v502, 7
        %v504 = vsub.s32 %v501, %v503
        %v505 = vrot.slane %v444, %v504
        %v507 = vunpack.c.l.s4 1983009808
        %v508 = vunpack.c.0.s8 %v507
        %v509 = vlaneseq
        %v510 = vshrl.u32 %v509, 7
        %v511 = vsub.s32 %v508, %v510
        %v512 = vrot.slane %v498, %v511
        %v513 = vcombine.high %v505, 0.0
        %v515 = vunpack.c.l.s4 1934713408
        %v516 = vunpack.c.0.s8 %v515
        %v517 = vlaneseq
        %v518 = vshrl.u32 %v517, 7
        %v519 = vsub.s32 %v516, %v518
        %v520 = vrot.slane %v505, %v519
        %v522 = vunpack.c.l.s4 1934713408
        %v523 = vunpack.c.0.s8 %v522
        %v524 = vlaneseq
        %v525 = vshrl.u32 %v524, 7
        %v526 = vsub.s32 %v523, %v525
        %v527 = vrot.slane %v513, %v526
        %v528 = vcombine.high %v512, 0.0
        %v530 = vunpack.c.l.s4 1934713408
        %v531 = vunpack.c.0.s8 %v530
        %v532 = vlaneseq
        %v533 = vshrl.u32 %v532, 7
        %v534 = vsub.s32 %v531, %v533
        %v535 = vrot.slane %v512, %v534
        %v537 = vunpack.c.l.s4 1934713408
        %v538 = vunpack.c.0.s8 %v537
        %v539 = vlaneseq
        %v540 = vshrl.u32 %v539, 7
        %v541 = vsub.s32 %v538, %v540
        %v542 = vrot.slane %v528, %v541
        %v543 = vcombine.high %v520, 0.0
        %v544 = vcombine.high %v527, 0.0
        %v545 = vcombine.high %v535, 0.0
        %v546 = vcombine.high %v542, 0.0
        %v549 = vunpack.c.l.s4 1934713408
        %v550 = vunpack.c.0.s8 %v549
        %v551 = vlaneseq
        %v552 = vshrl.u32 %v551, 7
        %v553 = vsub.s32 %v550, %v552
        %v554 = vrot.slane %v446, %v553
        %v555 = vcombine.high %v554, 0.0
        %557 = vrot.lane.b32.xlu0 %v494, 18
        %v558 = vpop.permute.xlu0 %557
        %561 = vrot.lane.b32.xlu0 %v478, 36
        %v562 = vpop.permute.xlu0 %561
        %565 = vrot.lane.b32.xlu0 %v495, 54
        %v566 = vpop.permute.xlu0 %565
        %569 = vrot.lane.b32.xlu0 %v486, 72
        %v570 = vpop.permute.xlu0 %569
        %573 = vrot.lane.b32.xlu0 %v496, 90
        %v574 = vpop.permute.xlu0 %573
        %577 = vrot.lane.b32.xlu0 %v493, 108
        %v578 = vpop.permute.xlu0 %577
        %581 = vrot.lane.b32.xlu0 %v497, 126
        %v582 = vpop.permute.xlu0 %581
        %585 = vrot.lane.b32.xlu0 %v520, 16
        %v586 = vpop.permute.xlu0 %585
        %589 = vrot.lane.b32.xlu0 %v543, 34
        %v590 = vpop.permute.xlu0 %589
        %593 = vrot.lane.b32.xlu0 %v527, 52
        %v594 = vpop.permute.xlu0 %593
        %597 = vrot.lane.b32.xlu0 %v544, 70
        %v598 = vpop.permute.xlu0 %597
        %601 = vrot.lane.b32.xlu0 %v535, 88
        %v602 = vpop.permute.xlu0 %601
        %605 = vrot.lane.b32.xlu0 %v545, 106
        %v606 = vpop.permute.xlu0 %605
        %609 = vrot.lane.b32.xlu0 %v542, 124
        %v610 = vpop.permute.xlu0 %609
        %613 = vrot.lane.b32.xlu0 %v546, 14
        %v614 = vpop.permute.xlu0 %613
        %617 = vrot.lane.b32.xlu0 %v554, 32
        %v618 = vpop.permute.xlu0 %617
        %621 = vrot.lane.b32.xlu0 %v555, 50
        %v622 = vpop.permute.xlu0 %621
        %v624 = vsel %vm404, %v471, %v558
        %v625 = vsel %vm406, %v624, %v562
        %v626 = vsel %vm408, %v625, %v566
        %v627 = vsel %vm410, %v626, %v570
        %v628 = vsel %vm412, %v627, %v574
        %v629 = vsel %vm414, %v628, %v578
        %v630 = vsel %vm416, %v629, %v582
        %v631 = vsel %vm418, %v582, %v586
        %v632 = vsel %vm420, %v631, %v590
        %v633 = vsel %vm422, %v632, %v594
        %v634 = vsel %vm424, %v633, %v598
        %v635 = vsel %vm426, %v634, %v602
        %v636 = vsel %vm428, %v635, %v606
        %v637 = vsel %vm430, %v636, %v610
        %v638 = vsel %vm432, %v610, %v614
        %v639 = vsel %vm434, %v638, %v618
        %v640 = vsel %vm436, %v639, %v622
        %641 = vrot.lane.b32.xlu0 %v223, 126
        %v642 = vpop.permute.xlu0 %641
        %643 = vrot.lane.b32.xlu0 %v224, 126
        %v644 = vpop.permute.xlu0 %643
        %645 = vrot.lane.b32.xlu0 %v225, 126
        %v646 = vpop.permute.xlu0 %645
        %v649 = vcombine.high %v642, 0.0
        %v651 = vunpack.c.l.s4 1983009808
        %v652 = vunpack.c.0.s8 %v651
        %v653 = vlaneseq
        %v654 = vshrl.u32 %v653, 7
        %v655 = vsub.s32 %v652, %v654
        %v656 = vrot.slane %v642, %v655
        %v658 = vunpack.c.l.s4 1983009808
        %v659 = vunpack.c.0.s8 %v658
        %v660 = vlaneseq
        %v661 = vshrl.u32 %v660, 7
        %v662 = vsub.s32 %v659, %v661
        %v663 = vrot.slane %v649, %v662
        %v664 = vcombine.high %v656, 0.0
        %v666 = vunpack.c.l.s4 1934713408
        %v667 = vunpack.c.0.s8 %v666
        %v668 = vlaneseq
        %v669 = vshrl.u32 %v668, 7
        %v670 = vsub.s32 %v667, %v669
        %v671 = vrot.slane %v656, %v670
        %v673 = vunpack.c.l.s4 1934713408
        %v674 = vunpack.c.0.s8 %v673
        %v675 = vlaneseq
        %v676 = vshrl.u32 %v675, 7
        %v677 = vsub.s32 %v674, %v676
        %v678 = vrot.slane %v664, %v677
        %v679 = vcombine.high %v663, 0.0
        %v681 = vunpack.c.l.s4 1934713408
        %v682 = vunpack.c.0.s8 %v681
        %v683 = vlaneseq
        %v684 = vshrl.u32 %v683, 7
        %v685 = vsub.s32 %v682, %v684
        %v686 = vrot.slane %v663, %v685
        %v688 = vunpack.c.l.s4 1934713408
        %v689 = vunpack.c.0.s8 %v688
        %v690 = vlaneseq
        %v691 = vshrl.u32 %v690, 7
        %v692 = vsub.s32 %v689, %v691
        %v693 = vrot.slane %v679, %v692
        %v694 = vcombine.high %v671, 0.0
        %v695 = vcombine.high %v678, 0.0
        %v696 = vcombine.high %v686, 0.0
        %v697 = vcombine.high %v693, 0.0
        %v698 = vcombine.high %v644, 0.0
        %v700 = vunpack.c.l.s4 1983009808
        %v701 = vunpack.c.0.s8 %v700
        %v702 = vlaneseq
        %v703 = vshrl.u32 %v702, 7
        %v704 = vsub.s32 %v701, %v703
        %v705 = vrot.slane %v644, %v704
        %v707 = vunpack.c.l.s4 1983009808
        %v708 = vunpack.c.0.s8 %v707
        %v709 = vlaneseq
        %v710 = vshrl.u32 %v709, 7
        %v711 = vsub.s32 %v708, %v710
        %v712 = vrot.slane %v698, %v711
        %v713 = vcombine.high %v705, 0.0
        %v715 = vunpack.c.l.s4 1934713408
        %v716 = vunpack.c.0.s8 %v715
        %v717 = vlaneseq
        %v718 = vshrl.u32 %v717, 7
        %v719 = vsub.s32 %v716, %v718
        %v720 = vrot.slane %v705, %v719
        %v722 = vunpack.c.l.s4 1934713408
        %v723 = vunpack.c.0.s8 %v722
        %v724 = vlaneseq
        %v725 = vshrl.u32 %v724, 7
        %v726 = vsub.s32 %v723, %v725
        %v727 = vrot.slane %v713, %v726
        %v728 = vcombine.high %v712, 0.0
        %v730 = vunpack.c.l.s4 1934713408
        %v731 = vunpack.c.0.s8 %v730
        %v732 = vlaneseq
        %v733 = vshrl.u32 %v732, 7
        %v734 = vsub.s32 %v731, %v733
        %v735 = vrot.slane %v712, %v734
        %v737 = vunpack.c.l.s4 1934713408
        %v738 = vunpack.c.0.s8 %v737
        %v739 = vlaneseq
        %v740 = vshrl.u32 %v739, 7
        %v741 = vsub.s32 %v738, %v740
        %v742 = vrot.slane %v728, %v741
        %v743 = vcombine.high %v720, 0.0
        %v744 = vcombine.high %v727, 0.0
        %v745 = vcombine.high %v735, 0.0
        %v746 = vcombine.high %v742, 0.0
        %v749 = vunpack.c.l.s4 1934713408
        %v750 = vunpack.c.0.s8 %v749
        %v751 = vlaneseq
        %v752 = vshrl.u32 %v751, 7
        %v753 = vsub.s32 %v750, %v752
        %v754 = vrot.slane %v646, %v753
        %v755 = vcombine.high %v754, 0.0
        %757 = vrot.lane.b32.xlu0 %v694, 18
        %v758 = vpop.permute.xlu0 %757
        %761 = vrot.lane.b32.xlu0 %v678, 36
        %v762 = vpop.permute.xlu0 %761
        %765 = vrot.lane.b32.xlu0 %v695, 54
        %v766 = vpop.permute.xlu0 %765
        %769 = vrot.lane.b32.xlu0 %v686, 72
        %v770 = vpop.permute.xlu0 %769
        %773 = vrot.lane.b32.xlu0 %v696, 90
        %v774 = vpop.permute.xlu0 %773
        %777 = vrot.lane.b32.xlu0 %v693, 108
        %v778 = vpop.permute.xlu0 %777
        %781 = vrot.lane.b32.xlu0 %v697, 126
        %v782 = vpop.permute.xlu0 %781
        %785 = vrot.lane.b32.xlu0 %v720, 16
        %v786 = vpop.permute.xlu0 %785
        %789 = vrot.lane.b32.xlu0 %v743, 34
        %v790 = vpop.permute.xlu0 %789
        %793 = vrot.lane.b32.xlu0 %v727, 52
        %v794 = vpop.permute.xlu0 %793
        %797 = vrot.lane.b32.xlu0 %v744, 70
        %v798 = vpop.permute.xlu0 %797
        %801 = vrot.lane.b32.xlu0 %v735, 88
        %v802 = vpop.permute.xlu0 %801
        %805 = vrot.lane.b32.xlu0 %v745, 106
        %v806 = vpop.permute.xlu0 %805
        %809 = vrot.lane.b32.xlu0 %v742, 124
        %v810 = vpop.permute.xlu0 %809
        %813 = vrot.lane.b32.xlu0 %v746, 14
        %v814 = vpop.permute.xlu0 %813
        %817 = vrot.lane.b32.xlu0 %v754, 32
        %v818 = vpop.permute.xlu0 %817
        %821 = vrot.lane.b32.xlu0 %v755, 50
        %v822 = vpop.permute.xlu0 %821
        %v824 = vsel %vm404, %v671, %v758
        %v825 = vsel %vm406, %v824, %v762
        %v826 = vsel %vm408, %v825, %v766
        %v827 = vsel %vm410, %v826, %v770
        %v828 = vsel %vm412, %v827, %v774
        %v829 = vsel %vm414, %v828, %v778
        %v830 = vsel %vm416, %v829, %v782
        %v831 = vsel %vm418, %v782, %v786
        %v832 = vsel %vm420, %v831, %v790
        %v833 = vsel %vm422, %v832, %v794
        %v834 = vsel %vm424, %v833, %v798
        %v835 = vsel %vm426, %v834, %v802
        %v836 = vsel %vm428, %v835, %v806
        %v837 = vsel %vm430, %v836, %v810
        %v838 = vsel %vm432, %v810, %v814
        %v839 = vsel %vm434, %v838, %v818
        %v840 = vsel %vm436, %v839, %v822
        %vm841 = vcmask 1046528
        %v842 = vrot.slane %v223, 1
        %v843 = vrot.slane %v224, 1
        %v844 = vsel %vm841, %v842, %v843
        %v845 = vrot.slane %v225, 1
        %v846 = vsel %vm841, %v843, %v845
        %v849 = vcombine.high %v844, 0.0
        %v851 = vunpack.c.l.s4 1983009808
        %v852 = vunpack.c.0.s8 %v851
        %v853 = vlaneseq
        %v854 = vshrl.u32 %v853, 7
        %v855 = vsub.s32 %v852, %v854
        %v856 = vrot.slane %v844, %v855
        %v858 = vunpack.c.l.s4 1983009808
        %v859 = vunpack.c.0.s8 %v858
        %v860 = vlaneseq
        %v861 = vshrl.u32 %v860, 7
        %v862 = vsub.s32 %v859, %v861
        %v863 = vrot.slane %v849, %v862
        %v864 = vcombine.high %v856, 0.0
        %v866 = vunpack.c.l.s4 1934713408
        %v867 = vunpack.c.0.s8 %v866
        %v868 = vlaneseq
        %v869 = vshrl.u32 %v868, 7
        %v870 = vsub.s32 %v867, %v869
        %v871 = vrot.slane %v856, %v870
        %v873 = vunpack.c.l.s4 1934713408
        %v874 = vunpack.c.0.s8 %v873
        %v875 = vlaneseq
        %v876 = vshrl.u32 %v875, 7
        %v877 = vsub.s32 %v874, %v876
        %v878 = vrot.slane %v864, %v877
        %v879 = vcombine.high %v863, 0.0
        %v881 = vunpack.c.l.s4 1934713408
        %v882 = vunpack.c.0.s8 %v881
        %v883 = vlaneseq
        %v884 = vshrl.u32 %v883, 7
        %v885 = vsub.s32 %v882, %v884
        %v886 = vrot.slane %v863, %v885
        %v888 = vunpack.c.l.s4 1934713408
        %v889 = vunpack.c.0.s8 %v888
        %v890 = vlaneseq
        %v891 = vshrl.u32 %v890, 7
        %v892 = vsub.s32 %v889, %v891
        %v893 = vrot.slane %v879, %v892
        %v894 = vcombine.high %v871, 0.0
        %v895 = vcombine.high %v878, 0.0
        %v896 = vcombine.high %v886, 0.0
        %v897 = vcombine.high %v893, 0.0
        %v898 = vcombine.high %v846, 0.0
        %v900 = vunpack.c.l.s4 1983009808
        %v901 = vunpack.c.0.s8 %v900
        %v902 = vlaneseq
        %v903 = vshrl.u32 %v902, 7
        %v904 = vsub.s32 %v901, %v903
        %v905 = vrot.slane %v846, %v904
        %v907 = vunpack.c.l.s4 1983009808
        %v908 = vunpack.c.0.s8 %v907
        %v909 = vlaneseq
        %v910 = vshrl.u32 %v909, 7
        %v911 = vsub.s32 %v908, %v910
        %v912 = vrot.slane %v898, %v911
        %v913 = vcombine.high %v905, 0.0
        %v915 = vunpack.c.l.s4 1934713408
        %v916 = vunpack.c.0.s8 %v915
        %v917 = vlaneseq
        %v918 = vshrl.u32 %v917, 7
        %v919 = vsub.s32 %v916, %v918
        %v920 = vrot.slane %v905, %v919
        %v922 = vunpack.c.l.s4 1934713408
        %v923 = vunpack.c.0.s8 %v922
        %v924 = vlaneseq
        %v925 = vshrl.u32 %v924, 7
        %v926 = vsub.s32 %v923, %v925
        %v927 = vrot.slane %v913, %v926
        %v928 = vcombine.high %v912, 0.0
        %v930 = vunpack.c.l.s4 1934713408
        %v931 = vunpack.c.0.s8 %v930
        %v932 = vlaneseq
        %v933 = vshrl.u32 %v932, 7
        %v934 = vsub.s32 %v931, %v933
        %v935 = vrot.slane %v912, %v934
        %v937 = vunpack.c.l.s4 1934713408
        %v938 = vunpack.c.0.s8 %v937
        %v939 = vlaneseq
        %v940 = vshrl.u32 %v939, 7
        %v941 = vsub.s32 %v938, %v940
        %v942 = vrot.slane %v928, %v941
        %v943 = vcombine.high %v920, 0.0
        %v944 = vcombine.high %v927, 0.0
        %v945 = vcombine.high %v935, 0.0
        %v946 = vcombine.high %v942, 0.0
        %v949 = vunpack.c.l.s4 1934713408
        %v950 = vunpack.c.0.s8 %v949
        %v951 = vlaneseq
        %v952 = vshrl.u32 %v951, 7
        %v953 = vsub.s32 %v950, %v952
        %v954 = vrot.slane %v845, %v953
        %v955 = vcombine.high %v954, 0.0
        %957 = vrot.lane.b32.xlu0 %v894, 18
        %v958 = vpop.permute.xlu0 %957
        %961 = vrot.lane.b32.xlu0 %v878, 36
        %v962 = vpop.permute.xlu0 %961
        %965 = vrot.lane.b32.xlu0 %v895, 54
        %v966 = vpop.permute.xlu0 %965
        %969 = vrot.lane.b32.xlu0 %v886, 72
        %v970 = vpop.permute.xlu0 %969
        %973 = vrot.lane.b32.xlu0 %v896, 90
        %v974 = vpop.permute.xlu0 %973
        %977 = vrot.lane.b32.xlu0 %v893, 108
        %v978 = vpop.permute.xlu0 %977
        %981 = vrot.lane.b32.xlu0 %v897, 126
        %v982 = vpop.permute.xlu0 %981
        %985 = vrot.lane.b32.xlu0 %v920, 16
        %v986 = vpop.permute.xlu0 %985
        %989 = vrot.lane.b32.xlu0 %v943, 34
        %v990 = vpop.permute.xlu0 %989
        %993 = vrot.lane.b32.xlu0 %v927, 52
        %v994 = vpop.permute.xlu0 %993
        %997 = vrot.lane.b32.xlu0 %v944, 70
        %v998 = vpop.permute.xlu0 %997
        %1001 = vrot.lane.b32.xlu0 %v935, 88
        %v1002 = vpop.permute.xlu0 %1001
        %1005 = vrot.lane.b32.xlu0 %v945, 106
        %v1006 = vpop.permute.xlu0 %1005
        %1009 = vrot.lane.b32.xlu0 %v942, 124
        %v1010 = vpop.permute.xlu0 %1009
        %1013 = vrot.lane.b32.xlu0 %v946, 14
        %v1014 = vpop.permute.xlu0 %1013
        %1017 = vrot.lane.b32.xlu0 %v954, 32
        %v1018 = vpop.permute.xlu0 %1017
        %1021 = vrot.lane.b32.xlu0 %v955, 50
        %v1022 = vpop.permute.xlu0 %1021
        %v1024 = vsel %vm404, %v871, %v958
        %v1025 = vsel %vm406, %v1024, %v962
        %v1026 = vsel %vm408, %v1025, %v966
        %v1027 = vsel %vm410, %v1026, %v970
        %v1028 = vsel %vm412, %v1027, %v974
        %v1029 = vsel %vm414, %v1028, %v978
        %v1030 = vsel %vm416, %v1029, %v982
        %v1031 = vsel %vm418, %v982, %v986
        %v1032 = vsel %vm420, %v1031, %v990
        %v1033 = vsel %vm422, %v1032, %v994
        %v1034 = vsel %vm424, %v1033, %v998
        %v1035 = vsel %vm426, %v1034, %v1002
        %v1036 = vsel %vm428, %v1035, %v1006
        %v1037 = vsel %vm430, %v1036, %v1010
        %v1038 = vsel %vm432, %v1010, %v1014
        %v1039 = vsel %vm434, %v1038, %v1018
        %v1040 = vsel %vm436, %v1039, %v1022
        %1041 = vrot.lane.b32.xlu0 %v844, 127
        %v1042 = vpop.permute.xlu0 %1041
        %1043 = vrot.lane.b32.xlu0 %v846, 127
        %v1044 = vpop.permute.xlu0 %1043
        %1045 = vrot.lane.b32.xlu0 %v845, 127
        %v1046 = vpop.permute.xlu0 %1045
        %v1049 = vcombine.high %v1042, 0.0
        %v1051 = vunpack.c.l.s4 1983009808
        %v1052 = vunpack.c.0.s8 %v1051
        %v1053 = vlaneseq
        %v1054 = vshrl.u32 %v1053, 7
        %v1055 = vsub.s32 %v1052, %v1054
        %v1056 = vrot.slane %v1042, %v1055
        %v1058 = vunpack.c.l.s4 1983009808
        %v1059 = vunpack.c.0.s8 %v1058
        %v1060 = vlaneseq
        %v1061 = vshrl.u32 %v1060, 7
        %v1062 = vsub.s32 %v1059, %v1061
        %v1063 = vrot.slane %v1049, %v1062
        %v1064 = vcombine.high %v1056, 0.0
        %v1066 = vunpack.c.l.s4 1934713408
        %v1067 = vunpack.c.0.s8 %v1066
        %v1068 = vlaneseq
        %v1069 = vshrl.u32 %v1068, 7
        %v1070 = vsub.s32 %v1067, %v1069
        %v1071 = vrot.slane %v1056, %v1070
        %v1073 = vunpack.c.l.s4 1934713408
        %v1074 = vunpack.c.0.s8 %v1073
        %v1075 = vlaneseq
        %v1076 = vshrl.u32 %v1075, 7
        %v1077 = vsub.s32 %v1074, %v1076
        %v1078 = vrot.slane %v1064, %v1077
        %v1079 = vcombine.high %v1063, 0.0
        %v1081 = vunpack.c.l.s4 1934713408
        %v1082 = vunpack.c.0.s8 %v1081
        %v1083 = vlaneseq
        %v1084 = vshrl.u32 %v1083, 7
        %v1085 = vsub.s32 %v1082, %v1084
        %v1086 = vrot.slane %v1063, %v1085
        %v1088 = vunpack.c.l.s4 1934713408
        %v1089 = vunpack.c.0.s8 %v1088
        %v1090 = vlaneseq
        %v1091 = vshrl.u32 %v1090, 7
        %v1092 = vsub.s32 %v1089, %v1091
        %v1093 = vrot.slane %v1079, %v1092
        %v1094 = vcombine.high %v1071, 0.0
        %v1095 = vcombine.high %v1078, 0.0
        %v1096 = vcombine.high %v1086, 0.0
        %v1097 = vcombine.high %v1093, 0.0
        %v1098 = vcombine.high %v1044, 0.0
        %v1100 = vunpack.c.l.s4 1983009808
        %v1101 = vunpack.c.0.s8 %v1100
        %v1102 = vlaneseq
        %v1103 = vshrl.u32 %v1102, 7
        %v1104 = vsub.s32 %v1101, %v1103
        %v1105 = vrot.slane %v1044, %v1104
        %v1107 = vunpack.c.l.s4 1983009808
        %v1108 = vunpack.c.0.s8 %v1107
        %v1109 = vlaneseq
        %v1110 = vshrl.u32 %v1109, 7
        %v1111 = vsub.s32 %v1108, %v1110
        %v1112 = vrot.slane %v1098, %v1111
        %v1113 = vcombine.high %v1105, 0.0
        %v1115 = vunpack.c.l.s4 1934713408
        %v1116 = vunpack.c.0.s8 %v1115
        %v1117 = vlaneseq
        %v1118 = vshrl.u32 %v1117, 7
        %v1119 = vsub.s32 %v1116, %v1118
        %v1120 = vrot.slane %v1105, %v1119
        %v1122 = vunpack.c.l.s4 1934713408
        %v1123 = vunpack.c.0.s8 %v1122
        %v1124 = vlaneseq
        %v1125 = vshrl.u32 %v1124, 7
        %v1126 = vsub.s32 %v1123, %v1125
        %v1127 = vrot.slane %v1113, %v1126
        %v1128 = vcombine.high %v1112, 0.0
        %v1130 = vunpack.c.l.s4 1934713408
        %v1131 = vunpack.c.0.s8 %v1130
        %v1132 = vlaneseq
        %v1133 = vshrl.u32 %v1132, 7
        %v1134 = vsub.s32 %v1131, %v1133
        %v1135 = vrot.slane %v1112, %v1134
        %v1137 = vunpack.c.l.s4 1934713408
        %v1138 = vunpack.c.0.s8 %v1137
        %v1139 = vlaneseq
        %v1140 = vshrl.u32 %v1139, 7
        %v1141 = vsub.s32 %v1138, %v1140
        %v1142 = vrot.slane %v1128, %v1141
        %v1143 = vcombine.high %v1120, 0.0
        %v1144 = vcombine.high %v1127, 0.0
        %v1145 = vcombine.high %v1135, 0.0
        %v1146 = vcombine.high %v1142, 0.0
        %v1149 = vunpack.c.l.s4 1934713408
        %v1150 = vunpack.c.0.s8 %v1149
        %v1151 = vlaneseq
        %v1152 = vshrl.u32 %v1151, 7
        %v1153 = vsub.s32 %v1150, %v1152
        %v1154 = vrot.slane %v1046, %v1153
        %v1155 = vcombine.high %v1154, 0.0
        %1157 = vrot.lane.b32.xlu0 %v1094, 18
        %v1158 = vpop.permute.xlu0 %1157
        %1161 = vrot.lane.b32.xlu0 %v1078, 36
        %v1162 = vpop.permute.xlu0 %1161
        %1165 = vrot.lane.b32.xlu0 %v1095, 54
        %v1166 = vpop.permute.xlu0 %1165
        %1169 = vrot.lane.b32.xlu0 %v1086, 72
        %v1170 = vpop.permute.xlu0 %1169
        %1173 = vrot.lane.b32.xlu0 %v1096, 90
        %v1174 = vpop.permute.xlu0 %1173
        %1177 = vrot.lane.b32.xlu0 %v1093, 108
        %v1178 = vpop.permute.xlu0 %1177
        %1181 = vrot.lane.b32.xlu0 %v1097, 126
        %v1182 = vpop.permute.xlu0 %1181
        %1185 = vrot.lane.b32.xlu0 %v1120, 16
        %v1186 = vpop.permute.xlu0 %1185
        %1189 = vrot.lane.b32.xlu0 %v1143, 34
        %v1190 = vpop.permute.xlu0 %1189
        %1193 = vrot.lane.b32.xlu0 %v1127, 52
        %v1194 = vpop.permute.xlu0 %1193
        %1197 = vrot.lane.b32.xlu0 %v1144, 70
        %v1198 = vpop.permute.xlu0 %1197
        %1201 = vrot.lane.b32.xlu0 %v1135, 88
        %v1202 = vpop.permute.xlu0 %1201
        %1205 = vrot.lane.b32.xlu0 %v1145, 106
        %v1206 = vpop.permute.xlu0 %1205
        %1209 = vrot.lane.b32.xlu0 %v1142, 124
        %v1210 = vpop.permute.xlu0 %1209
        %1213 = vrot.lane.b32.xlu0 %v1146, 14
        %v1214 = vpop.permute.xlu0 %1213
        %1217 = vrot.lane.b32.xlu0 %v1154, 32
        %v1218 = vpop.permute.xlu0 %1217
        %1221 = vrot.lane.b32.xlu0 %v1155, 50
        %v1222 = vpop.permute.xlu0 %1221
        %v1224 = vsel %vm404, %v1071, %v1158
        %v1225 = vsel %vm406, %v1224, %v1162
        %v1226 = vsel %vm408, %v1225, %v1166
        %v1227 = vsel %vm410, %v1226, %v1170
        %v1228 = vsel %vm412, %v1227, %v1174
        %v1229 = vsel %vm414, %v1228, %v1178
        %v1230 = vsel %vm416, %v1229, %v1182
        %v1231 = vsel %vm418, %v1182, %v1186
        %v1232 = vsel %vm420, %v1231, %v1190
        %v1233 = vsel %vm422, %v1232, %v1194
        %v1234 = vsel %vm424, %v1233, %v1198
        %v1235 = vsel %vm426, %v1234, %v1202
        %v1236 = vsel %vm428, %v1235, %v1206
        %v1237 = vsel %vm430, %v1236, %v1210
        %v1238 = vsel %vm432, %v1210, %v1214
        %v1239 = vsel %vm434, %v1238, %v1218
        %v1240 = vsel %vm436, %v1239, %v1222
        %1241 = vrot.lane.b32.xlu0 %v844, 126
        %v1242 = vpop.permute.xlu0 %1241
        %1243 = vrot.lane.b32.xlu0 %v846, 126
        %v1244 = vpop.permute.xlu0 %1243
        %1245 = vrot.lane.b32.xlu0 %v845, 126
        %v1246 = vpop.permute.xlu0 %1245
        %v1249 = vcombine.high %v1242, 0.0
        %v1251 = vunpack.c.l.s4 1983009808
        %v1252 = vunpack.c.0.s8 %v1251
        %v1253 = vlaneseq
        %v1254 = vshrl.u32 %v1253, 7
        %v1255 = vsub.s32 %v1252, %v1254
        %v1256 = vrot.slane %v1242, %v1255
        %v1258 = vunpack.c.l.s4 1983009808
        %v1259 = vunpack.c.0.s8 %v1258
        %v1260 = vlaneseq
        %v1261 = vshrl.u32 %v1260, 7
        %v1262 = vsub.s32 %v1259, %v1261
        %v1263 = vrot.slane %v1249, %v1262
        %v1264 = vcombine.high %v1256, 0.0
        %v1266 = vunpack.c.l.s4 1934713408
        %v1267 = vunpack.c.0.s8 %v1266
        %v1268 = vlaneseq
        %v1269 = vshrl.u32 %v1268, 7
        %v1270 = vsub.s32 %v1267, %v1269
        %v1271 = vrot.slane %v1256, %v1270
        %v1273 = vunpack.c.l.s4 1934713408
        %v1274 = vunpack.c.0.s8 %v1273
        %v1275 = vlaneseq
        %v1276 = vshrl.u32 %v1275, 7
        %v1277 = vsub.s32 %v1274, %v1276
        %v1278 = vrot.slane %v1264, %v1277
        %v1279 = vcombine.high %v1263, 0.0
        %v1281 = vunpack.c.l.s4 1934713408
        %v1282 = vunpack.c.0.s8 %v1281
        %v1283 = vlaneseq
        %v1284 = vshrl.u32 %v1283, 7
        %v1285 = vsub.s32 %v1282, %v1284
        %v1286 = vrot.slane %v1263, %v1285
        %v1288 = vunpack.c.l.s4 1934713408
        %v1289 = vunpack.c.0.s8 %v1288
        %v1290 = vlaneseq
        %v1291 = vshrl.u32 %v1290, 7
        %v1292 = vsub.s32 %v1289, %v1291
        %v1293 = vrot.slane %v1279, %v1292
        %v1294 = vcombine.high %v1271, 0.0
        %v1295 = vcombine.high %v1278, 0.0
        %v1296 = vcombine.high %v1286, 0.0
        %v1297 = vcombine.high %v1293, 0.0
        %v1298 = vcombine.high %v1244, 0.0
        %v1300 = vunpack.c.l.s4 1983009808
        %v1301 = vunpack.c.0.s8 %v1300
        %v1302 = vlaneseq
        %v1303 = vshrl.u32 %v1302, 7
        %v1304 = vsub.s32 %v1301, %v1303
        %v1305 = vrot.slane %v1244, %v1304
        %v1307 = vunpack.c.l.s4 1983009808
        %v1308 = vunpack.c.0.s8 %v1307
        %v1309 = vlaneseq
        %v1310 = vshrl.u32 %v1309, 7
        %v1311 = vsub.s32 %v1308, %v1310
        %v1312 = vrot.slane %v1298, %v1311
        %v1313 = vcombine.high %v1305, 0.0
        %v1315 = vunpack.c.l.s4 1934713408
        %v1316 = vunpack.c.0.s8 %v1315
        %v1317 = vlaneseq
        %v1318 = vshrl.u32 %v1317, 7
        %v1319 = vsub.s32 %v1316, %v1318
        %v1320 = vrot.slane %v1305, %v1319
        %v1322 = vunpack.c.l.s4 1934713408
        %v1323 = vunpack.c.0.s8 %v1322
        %v1324 = vlaneseq
        %v1325 = vshrl.u32 %v1324, 7
        %v1326 = vsub.s32 %v1323, %v1325
        %v1327 = vrot.slane %v1313, %v1326
        %v1328 = vcombine.high %v1312, 0.0
        %v1330 = vunpack.c.l.s4 1934713408
        %v1331 = vunpack.c.0.s8 %v1330
        %v1332 = vlaneseq
        %v1333 = vshrl.u32 %v1332, 7
        %v1334 = vsub.s32 %v1331, %v1333
        %v1335 = vrot.slane %v1312, %v1334
        %v1337 = vunpack.c.l.s4 1934713408
        %v1338 = vunpack.c.0.s8 %v1337
        %v1339 = vlaneseq
        %v1340 = vshrl.u32 %v1339, 7
        %v1341 = vsub.s32 %v1338, %v1340
        %v1342 = vrot.slane %v1328, %v1341
        %v1343 = vcombine.high %v1320, 0.0
        %v1344 = vcombine.high %v1327, 0.0
        %v1345 = vcombine.high %v1335, 0.0
        %v1346 = vcombine.high %v1342, 0.0
        %v1349 = vunpack.c.l.s4 1934713408
        %v1350 = vunpack.c.0.s8 %v1349
        %v1351 = vlaneseq
        %v1352 = vshrl.u32 %v1351, 7
        %v1353 = vsub.s32 %v1350, %v1352
        %v1354 = vrot.slane %v1246, %v1353
        %v1355 = vcombine.high %v1354, 0.0
        %1357 = vrot.lane.b32.xlu0 %v1294, 18
        %v1358 = vpop.permute.xlu0 %1357
        %1361 = vrot.lane.b32.xlu0 %v1278, 36
        %v1362 = vpop.permute.xlu0 %1361
        %1365 = vrot.lane.b32.xlu0 %v1295, 54
        %v1366 = vpop.permute.xlu0 %1365
        %1369 = vrot.lane.b32.xlu0 %v1286, 72
        %v1370 = vpop.permute.xlu0 %1369
        %1373 = vrot.lane.b32.xlu0 %v1296, 90
        %v1374 = vpop.permute.xlu0 %1373
        %1377 = vrot.lane.b32.xlu0 %v1293, 108
        %v1378 = vpop.permute.xlu0 %1377
        %1381 = vrot.lane.b32.xlu0 %v1297, 126
        %v1382 = vpop.permute.xlu0 %1381
        %1385 = vrot.lane.b32.xlu0 %v1320, 16
        %v1386 = vpop.permute.xlu0 %1385
        %1389 = vrot.lane.b32.xlu0 %v1343, 34
        %v1390 = vpop.permute.xlu0 %1389
        %1393 = vrot.lane.b32.xlu0 %v1327, 52
        %v1394 = vpop.permute.xlu0 %1393
        %1397 = vrot.lane.b32.xlu0 %v1344, 70
        %v1398 = vpop.permute.xlu0 %1397
        %1401 = vrot.lane.b32.xlu0 %v1335, 88
        %v1402 = vpop.permute.xlu0 %1401
        %1405 = vrot.lane.b32.xlu0 %v1345, 106
        %v1406 = vpop.permute.xlu0 %1405
        %1409 = vrot.lane.b32.xlu0 %v1342, 124
        %v1410 = vpop.permute.xlu0 %1409
        %1413 = vrot.lane.b32.xlu0 %v1346, 14
        %v1414 = vpop.permute.xlu0 %1413
        %1417 = vrot.lane.b32.xlu0 %v1354, 32
        %v1418 = vpop.permute.xlu0 %1417
        %1421 = vrot.lane.b32.xlu0 %v1355, 50
        %v1422 = vpop.permute.xlu0 %1421
        %v1424 = vsel %vm404, %v1271, %v1358
        %v1425 = vsel %vm406, %v1424, %v1362
        %v1426 = vsel %vm408, %v1425, %v1366
        %v1427 = vsel %vm410, %v1426, %v1370
        %v1428 = vsel %vm412, %v1427, %v1374
        %v1429 = vsel %vm414, %v1428, %v1378
        %v1430 = vsel %vm416, %v1429, %v1382
        %v1431 = vsel %vm418, %v1382, %v1386
        %v1432 = vsel %vm420, %v1431, %v1390
        %v1433 = vsel %vm422, %v1432, %v1394
        %v1434 = vsel %vm424, %v1433, %v1398
        %v1435 = vsel %vm426, %v1434, %v1402
        %v1436 = vsel %vm428, %v1435, %v1406
        %v1437 = vsel %vm430, %v1436, %v1410
        %v1438 = vsel %vm432, %v1410, %v1414
        %v1439 = vsel %vm434, %v1438, %v1418
        %v1440 = vsel %vm436, %v1439, %v1422
        %vm1441 = vcmask 1045504
        %v1442 = vrot.slane %v223, 2
        %v1443 = vrot.slane %v224, 2
        %v1444 = vsel %vm1441, %v1442, %v1443
        %v1445 = vrot.slane %v225, 2
        %v1446 = vsel %vm1441, %v1443, %v1445
        %v1449 = vcombine.high %v1444, 0.0
        %v1451 = vunpack.c.l.s4 1983009808
        %v1452 = vunpack.c.0.s8 %v1451
        %v1453 = vlaneseq
        %v1454 = vshrl.u32 %v1453, 7
        %v1455 = vsub.s32 %v1452, %v1454
        %v1456 = vrot.slane %v1444, %v1455
        %v1458 = vunpack.c.l.s4 1983009808
        %v1459 = vunpack.c.0.s8 %v1458
        %v1460 = vlaneseq
        %v1461 = vshrl.u32 %v1460, 7
        %v1462 = vsub.s32 %v1459, %v1461
        %v1463 = vrot.slane %v1449, %v1462
        %v1464 = vcombine.high %v1456, 0.0
        %v1466 = vunpack.c.l.s4 1934713408
        %v1467 = vunpack.c.0.s8 %v1466
        %v1468 = vlaneseq
        %v1469 = vshrl.u32 %v1468, 7
        %v1470 = vsub.s32 %v1467, %v1469
        %v1471 = vrot.slane %v1456, %v1470
        %v1473 = vunpack.c.l.s4 1934713408
        %v1474 = vunpack.c.0.s8 %v1473
        %v1475 = vlaneseq
        %v1476 = vshrl.u32 %v1475, 7
        %v1477 = vsub.s32 %v1474, %v1476
        %v1478 = vrot.slane %v1464, %v1477
        %v1479 = vcombine.high %v1463, 0.0
        %v1481 = vunpack.c.l.s4 1934713408
        %v1482 = vunpack.c.0.s8 %v1481
        %v1483 = vlaneseq
        %v1484 = vshrl.u32 %v1483, 7
        %v1485 = vsub.s32 %v1482, %v1484
        %v1486 = vrot.slane %v1463, %v1485
        %v1488 = vunpack.c.l.s4 1934713408
        %v1489 = vunpack.c.0.s8 %v1488
        %v1490 = vlaneseq
        %v1491 = vshrl.u32 %v1490, 7
        %v1492 = vsub.s32 %v1489, %v1491
        %v1493 = vrot.slane %v1479, %v1492
        %v1494 = vcombine.high %v1471, 0.0
        %v1495 = vcombine.high %v1478, 0.0
        %v1496 = vcombine.high %v1486, 0.0
        %v1497 = vcombine.high %v1493, 0.0
        %v1498 = vcombine.high %v1446, 0.0
        %v1500 = vunpack.c.l.s4 1983009808
        %v1501 = vunpack.c.0.s8 %v1500
        %v1502 = vlaneseq
        %v1503 = vshrl.u32 %v1502, 7
        %v1504 = vsub.s32 %v1501, %v1503
        %v1505 = vrot.slane %v1446, %v1504
        %v1507 = vunpack.c.l.s4 1983009808
        %v1508 = vunpack.c.0.s8 %v1507
        %v1509 = vlaneseq
        %v1510 = vshrl.u32 %v1509, 7
        %v1511 = vsub.s32 %v1508, %v1510
        %v1512 = vrot.slane %v1498, %v1511
        %v1513 = vcombine.high %v1505, 0.0
        %v1515 = vunpack.c.l.s4 1934713408
        %v1516 = vunpack.c.0.s8 %v1515
        %v1517 = vlaneseq
        %v1518 = vshrl.u32 %v1517, 7
        %v1519 = vsub.s32 %v1516, %v1518
        %v1520 = vrot.slane %v1505, %v1519
        %v1522 = vunpack.c.l.s4 1934713408
        %v1523 = vunpack.c.0.s8 %v1522
        %v1524 = vlaneseq
        %v1525 = vshrl.u32 %v1524, 7
        %v1526 = vsub.s32 %v1523, %v1525
        %v1527 = vrot.slane %v1513, %v1526
        %v1528 = vcombine.high %v1512, 0.0
        %v1530 = vunpack.c.l.s4 1934713408
        %v1531 = vunpack.c.0.s8 %v1530
        %v1532 = vlaneseq
        %v1533 = vshrl.u32 %v1532, 7
        %v1534 = vsub.s32 %v1531, %v1533
        %v1535 = vrot.slane %v1512, %v1534
        %v1537 = vunpack.c.l.s4 1934713408
        %v1538 = vunpack.c.0.s8 %v1537
        %v1539 = vlaneseq
        %v1540 = vshrl.u32 %v1539, 7
        %v1541 = vsub.s32 %v1538, %v1540
        %v1542 = vrot.slane %v1528, %v1541
        %v1543 = vcombine.high %v1520, 0.0
        %v1544 = vcombine.high %v1527, 0.0
        %v1545 = vcombine.high %v1535, 0.0
        %v1546 = vcombine.high %v1542, 0.0
        %v1549 = vunpack.c.l.s4 1934713408
        %v1550 = vunpack.c.0.s8 %v1549
        %v1551 = vlaneseq
        %v1552 = vshrl.u32 %v1551, 7
        %v1553 = vsub.s32 %v1550, %v1552
        %v1554 = vrot.slane %v1445, %v1553
        %v1555 = vcombine.high %v1554, 0.0
        %1557 = vrot.lane.b32.xlu0 %v1494, 18
        %v1558 = vpop.permute.xlu0 %1557
        %1561 = vrot.lane.b32.xlu0 %v1478, 36
        %v1562 = vpop.permute.xlu0 %1561
        %1565 = vrot.lane.b32.xlu0 %v1495, 54
        %v1566 = vpop.permute.xlu0 %1565
        %1569 = vrot.lane.b32.xlu0 %v1486, 72
        %v1570 = vpop.permute.xlu0 %1569
        %1573 = vrot.lane.b32.xlu0 %v1496, 90
        %v1574 = vpop.permute.xlu0 %1573
        %1577 = vrot.lane.b32.xlu0 %v1493, 108
        %v1578 = vpop.permute.xlu0 %1577
        %1581 = vrot.lane.b32.xlu0 %v1497, 126
        %v1582 = vpop.permute.xlu0 %1581
        %1585 = vrot.lane.b32.xlu0 %v1520, 16
        %v1586 = vpop.permute.xlu0 %1585
        %1589 = vrot.lane.b32.xlu0 %v1543, 34
        %v1590 = vpop.permute.xlu0 %1589
        %1593 = vrot.lane.b32.xlu0 %v1527, 52
        %v1594 = vpop.permute.xlu0 %1593
        %1597 = vrot.lane.b32.xlu0 %v1544, 70
        %v1598 = vpop.permute.xlu0 %1597
        %1601 = vrot.lane.b32.xlu0 %v1535, 88
        %v1602 = vpop.permute.xlu0 %1601
        %1605 = vrot.lane.b32.xlu0 %v1545, 106
        %v1606 = vpop.permute.xlu0 %1605
        %1609 = vrot.lane.b32.xlu0 %v1542, 124
        %v1610 = vpop.permute.xlu0 %1609
        %1613 = vrot.lane.b32.xlu0 %v1546, 14
        %v1614 = vpop.permute.xlu0 %1613
        %1617 = vrot.lane.b32.xlu0 %v1554, 32
        %v1618 = vpop.permute.xlu0 %1617
        %1621 = vrot.lane.b32.xlu0 %v1555, 50
        %v1622 = vpop.permute.xlu0 %1621
        %v1624 = vsel %vm404, %v1471, %v1558
        %v1625 = vsel %vm406, %v1624, %v1562
        %v1626 = vsel %vm408, %v1625, %v1566
        %v1627 = vsel %vm410, %v1626, %v1570
        %v1628 = vsel %vm412, %v1627, %v1574
        %v1629 = vsel %vm414, %v1628, %v1578
        %v1630 = vsel %vm416, %v1629, %v1582
        %v1631 = vsel %vm418, %v1582, %v1586
        %v1632 = vsel %vm420, %v1631, %v1590
        %v1633 = vsel %vm422, %v1632, %v1594
        %v1634 = vsel %vm424, %v1633, %v1598
        %v1635 = vsel %vm426, %v1634, %v1602
        %v1636 = vsel %vm428, %v1635, %v1606
        %v1637 = vsel %vm430, %v1636, %v1610
        %v1638 = vsel %vm432, %v1610, %v1614
        %v1639 = vsel %vm434, %v1638, %v1618
        %v1640 = vsel %vm436, %v1639, %v1622
        %1641 = vrot.lane.b32.xlu0 %v1444, 127
        %v1642 = vpop.permute.xlu0 %1641
        %1643 = vrot.lane.b32.xlu0 %v1446, 127
        %v1644 = vpop.permute.xlu0 %1643
        %1645 = vrot.lane.b32.xlu0 %v1445, 127
        %v1646 = vpop.permute.xlu0 %1645
        %v1649 = vcombine.high %v1642, 0.0
        %v1651 = vunpack.c.l.s4 1983009808
        %v1652 = vunpack.c.0.s8 %v1651
        %v1653 = vlaneseq
        %v1654 = vshrl.u32 %v1653, 7
        %v1655 = vsub.s32 %v1652, %v1654
        %v1656 = vrot.slane %v1642, %v1655
        %v1658 = vunpack.c.l.s4 1983009808
        %v1659 = vunpack.c.0.s8 %v1658
        %v1660 = vlaneseq
        %v1661 = vshrl.u32 %v1660, 7
        %v1662 = vsub.s32 %v1659, %v1661
        %v1663 = vrot.slane %v1649, %v1662
        %v1664 = vcombine.high %v1656, 0.0
        %v1666 = vunpack.c.l.s4 1934713408
        %v1667 = vunpack.c.0.s8 %v1666
        %v1668 = vlaneseq
        %v1669 = vshrl.u32 %v1668, 7
        %v1670 = vsub.s32 %v1667, %v1669
        %v1671 = vrot.slane %v1656, %v1670
        %v1673 = vunpack.c.l.s4 1934713408
        %v1674 = vunpack.c.0.s8 %v1673
        %v1675 = vlaneseq
        %v1676 = vshrl.u32 %v1675, 7
        %v1677 = vsub.s32 %v1674, %v1676
        %v1678 = vrot.slane %v1664, %v1677
        %v1679 = vcombine.high %v1663, 0.0
        %v1681 = vunpack.c.l.s4 1934713408
        %v1682 = vunpack.c.0.s8 %v1681
        %v1683 = vlaneseq
        %v1684 = vshrl.u32 %v1683, 7
        %v1685 = vsub.s32 %v1682, %v1684
        %v1686 = vrot.slane %v1663, %v1685
        %v1688 = vunpack.c.l.s4 1934713408
        %v1689 = vunpack.c.0.s8 %v1688
        %v1690 = vlaneseq
        %v1691 = vshrl.u32 %v1690, 7
        %v1692 = vsub.s32 %v1689, %v1691
        %v1693 = vrot.slane %v1679, %v1692
        %v1694 = vcombine.high %v1671, 0.0
        %v1695 = vcombine.high %v1678, 0.0
        %v1696 = vcombine.high %v1686, 0.0
        %v1697 = vcombine.high %v1693, 0.0
        %v1698 = vcombine.high %v1644, 0.0
        %v1700 = vunpack.c.l.s4 1983009808
        %v1701 = vunpack.c.0.s8 %v1700
        %v1702 = vlaneseq
        %v1703 = vshrl.u32 %v1702, 7
        %v1704 = vsub.s32 %v1701, %v1703
        %v1705 = vrot.slane %v1644, %v1704
        %v1707 = vunpack.c.l.s4 1983009808
        %v1708 = vunpack.c.0.s8 %v1707
        %v1709 = vlaneseq
        %v1710 = vshrl.u32 %v1709, 7
        %v1711 = vsub.s32 %v1708, %v1710
        %v1712 = vrot.slane %v1698, %v1711
        %v1713 = vcombine.high %v1705, 0.0
        %v1715 = vunpack.c.l.s4 1934713408
        %v1716 = vunpack.c.0.s8 %v1715
        %v1717 = vlaneseq
        %v1718 = vshrl.u32 %v1717, 7
        %v1719 = vsub.s32 %v1716, %v1718
        %v1720 = vrot.slane %v1705, %v1719
        %v1722 = vunpack.c.l.s4 1934713408
        %v1723 = vunpack.c.0.s8 %v1722
        %v1724 = vlaneseq
        %v1725 = vshrl.u32 %v1724, 7
        %v1726 = vsub.s32 %v1723, %v1725
        %v1727 = vrot.slane %v1713, %v1726
        %v1728 = vcombine.high %v1712, 0.0
        %v1730 = vunpack.c.l.s4 1934713408
        %v1731 = vunpack.c.0.s8 %v1730
        %v1732 = vlaneseq
        %v1733 = vshrl.u32 %v1732, 7
        %v1734 = vsub.s32 %v1731, %v1733
        %v1735 = vrot.slane %v1712, %v1734
        %v1737 = vunpack.c.l.s4 1934713408
        %v1738 = vunpack.c.0.s8 %v1737
        %v1739 = vlaneseq
        %v1740 = vshrl.u32 %v1739, 7
        %v1741 = vsub.s32 %v1738, %v1740
        %v1742 = vrot.slane %v1728, %v1741
        %v1743 = vcombine.high %v1720, 0.0
        %v1744 = vcombine.high %v1727, 0.0
        %v1745 = vcombine.high %v1735, 0.0
        %v1746 = vcombine.high %v1742, 0.0
        %v1749 = vunpack.c.l.s4 1934713408
        %v1750 = vunpack.c.0.s8 %v1749
        %v1751 = vlaneseq
        %v1752 = vshrl.u32 %v1751, 7
        %v1753 = vsub.s32 %v1750, %v1752
        %v1754 = vrot.slane %v1646, %v1753
        %v1755 = vcombine.high %v1754, 0.0
        %1757 = vrot.lane.b32.xlu0 %v1694, 18
        %v1758 = vpop.permute.xlu0 %1757
        %1761 = vrot.lane.b32.xlu0 %v1678, 36
        %v1762 = vpop.permute.xlu0 %1761
        %1765 = vrot.lane.b32.xlu0 %v1695, 54
        %v1766 = vpop.permute.xlu0 %1765
        %1769 = vrot.lane.b32.xlu0 %v1686, 72
        %v1770 = vpop.permute.xlu0 %1769
        %1773 = vrot.lane.b32.xlu0 %v1696, 90
        %v1774 = vpop.permute.xlu0 %1773
        %1777 = vrot.lane.b32.xlu0 %v1693, 108
        %v1778 = vpop.permute.xlu0 %1777
        %1781 = vrot.lane.b32.xlu0 %v1697, 126
        %v1782 = vpop.permute.xlu0 %1781
        %1785 = vrot.lane.b32.xlu0 %v1720, 16
        %v1786 = vpop.permute.xlu0 %1785
        %1789 = vrot.lane.b32.xlu0 %v1743, 34
        %v1790 = vpop.permute.xlu0 %1789
        %1793 = vrot.lane.b32.xlu0 %v1727, 52
        %v1794 = vpop.permute.xlu0 %1793
        %1797 = vrot.lane.b32.xlu0 %v1744, 70
        %v1798 = vpop.permute.xlu0 %1797
        %1801 = vrot.lane.b32.xlu0 %v1735, 88
        %v1802 = vpop.permute.xlu0 %1801
        %1805 = vrot.lane.b32.xlu0 %v1745, 106
        %v1806 = vpop.permute.xlu0 %1805
        %1809 = vrot.lane.b32.xlu0 %v1742, 124
        %v1810 = vpop.permute.xlu0 %1809
        %1813 = vrot.lane.b32.xlu0 %v1746, 14
        %v1814 = vpop.permute.xlu0 %1813
        %1817 = vrot.lane.b32.xlu0 %v1754, 32
        %v1818 = vpop.permute.xlu0 %1817
        %1821 = vrot.lane.b32.xlu0 %v1755, 50
        %v1822 = vpop.permute.xlu0 %1821
        %v1824 = vsel %vm404, %v1671, %v1758
        %v1825 = vsel %vm406, %v1824, %v1762
        %v1826 = vsel %vm408, %v1825, %v1766
        %v1827 = vsel %vm410, %v1826, %v1770
        %v1828 = vsel %vm412, %v1827, %v1774
        %v1829 = vsel %vm414, %v1828, %v1778
        %v1830 = vsel %vm416, %v1829, %v1782
        %v1831 = vsel %vm418, %v1782, %v1786
        %v1832 = vsel %vm420, %v1831, %v1790
        %v1833 = vsel %vm422, %v1832, %v1794
        %v1834 = vsel %vm424, %v1833, %v1798
        %v1835 = vsel %vm426, %v1834, %v1802
        %v1836 = vsel %vm428, %v1835, %v1806
        %v1837 = vsel %vm430, %v1836, %v1810
        %v1838 = vsel %vm432, %v1810, %v1814
        %v1839 = vsel %vm434, %v1838, %v1818
        %v1840 = vsel %vm436, %v1839, %v1822
        %1841 = vrot.lane.b32.xlu0 %v1444, 126
        %v1842 = vpop.permute.xlu0 %1841
        %1843 = vrot.lane.b32.xlu0 %v1446, 126
        %v1844 = vpop.permute.xlu0 %1843
        %1845 = vrot.lane.b32.xlu0 %v1445, 126
        %v1846 = vpop.permute.xlu0 %1845
        %v1849 = vcombine.high %v1842, 0.0
        %v1851 = vunpack.c.l.s4 1983009808
        %v1852 = vunpack.c.0.s8 %v1851
        %v1853 = vlaneseq
        %v1854 = vshrl.u32 %v1853, 7
        %v1855 = vsub.s32 %v1852, %v1854
        %v1856 = vrot.slane %v1842, %v1855
        %v1858 = vunpack.c.l.s4 1983009808
        %v1859 = vunpack.c.0.s8 %v1858
        %v1860 = vlaneseq
        %v1861 = vshrl.u32 %v1860, 7
        %v1862 = vsub.s32 %v1859, %v1861
        %v1863 = vrot.slane %v1849, %v1862
        %v1864 = vcombine.high %v1856, 0.0
        %v1866 = vunpack.c.l.s4 1934713408
        %v1867 = vunpack.c.0.s8 %v1866
        %v1868 = vlaneseq
        %v1869 = vshrl.u32 %v1868, 7
        %v1870 = vsub.s32 %v1867, %v1869
        %v1871 = vrot.slane %v1856, %v1870
        %v1873 = vunpack.c.l.s4 1934713408
        %v1874 = vunpack.c.0.s8 %v1873
        %v1875 = vlaneseq
        %v1876 = vshrl.u32 %v1875, 7
        %v1877 = vsub.s32 %v1874, %v1876
        %v1878 = vrot.slane %v1864, %v1877
        %v1879 = vcombine.high %v1863, 0.0
        %v1881 = vunpack.c.l.s4 1934713408
        %v1882 = vunpack.c.0.s8 %v1881
        %v1883 = vlaneseq
        %v1884 = vshrl.u32 %v1883, 7
        %v1885 = vsub.s32 %v1882, %v1884
        %v1886 = vrot.slane %v1863, %v1885
        %v1888 = vunpack.c.l.s4 1934713408
        %v1889 = vunpack.c.0.s8 %v1888
        %v1890 = vlaneseq
        %v1891 = vshrl.u32 %v1890, 7
        %v1892 = vsub.s32 %v1889, %v1891
        %v1893 = vrot.slane %v1879, %v1892
        %v1894 = vcombine.high %v1871, 0.0
        %v1895 = vcombine.high %v1878, 0.0
        %v1896 = vcombine.high %v1886, 0.0
        %v1897 = vcombine.high %v1893, 0.0
        %v1898 = vcombine.high %v1844, 0.0
        %v1900 = vunpack.c.l.s4 1983009808
        %v1901 = vunpack.c.0.s8 %v1900
        %v1902 = vlaneseq
        %v1903 = vshrl.u32 %v1902, 7
        %v1904 = vsub.s32 %v1901, %v1903
        %v1905 = vrot.slane %v1844, %v1904
        %v1907 = vunpack.c.l.s4 1983009808
        %v1908 = vunpack.c.0.s8 %v1907
        %v1909 = vlaneseq
        %v1910 = vshrl.u32 %v1909, 7
        %v1911 = vsub.s32 %v1908, %v1910
        %v1912 = vrot.slane %v1898, %v1911
        %v1913 = vcombine.high %v1905, 0.0
        %v1915 = vunpack.c.l.s4 1934713408
        %v1916 = vunpack.c.0.s8 %v1915
        %v1917 = vlaneseq
        %v1918 = vshrl.u32 %v1917, 7
        %v1919 = vsub.s32 %v1916, %v1918
        %v1920 = vrot.slane %v1905, %v1919
        %v1922 = vunpack.c.l.s4 1934713408
        %v1923 = vunpack.c.0.s8 %v1922
        %v1924 = vlaneseq
        %v1925 = vshrl.u32 %v1924, 7
        %v1926 = vsub.s32 %v1923, %v1925
        %v1927 = vrot.slane %v1913, %v1926
        %v1928 = vcombine.high %v1912, 0.0
        %v1930 = vunpack.c.l.s4 1934713408
        %v1931 = vunpack.c.0.s8 %v1930
        %v1932 = vlaneseq
        %v1933 = vshrl.u32 %v1932, 7
        %v1934 = vsub.s32 %v1931, %v1933
        %v1935 = vrot.slane %v1912, %v1934
        %v1937 = vunpack.c.l.s4 1934713408
        %v1938 = vunpack.c.0.s8 %v1937
        %v1939 = vlaneseq
        %v1940 = vshrl.u32 %v1939, 7
        %v1941 = vsub.s32 %v1938, %v1940
        %v1942 = vrot.slane %v1928, %v1941
        %v1943 = vcombine.high %v1920, 0.0
        %v1944 = vcombine.high %v1927, 0.0
        %v1945 = vcombine.high %v1935, 0.0
        %v1946 = vcombine.high %v1942, 0.0
        %v1949 = vunpack.c.l.s4 1934713408
        %v1950 = vunpack.c.0.s8 %v1949
        %v1951 = vlaneseq
        %v1952 = vshrl.u32 %v1951, 7
        %v1953 = vsub.s32 %v1950, %v1952
        %v1954 = vrot.slane %v1846, %v1953
        %v1955 = vcombine.high %v1954, 0.0
        %1957 = vrot.lane.b32.xlu0 %v1894, 18
        %v1958 = vpop.permute.xlu0 %1957
        %1961 = vrot.lane.b32.xlu0 %v1878, 36
        %v1962 = vpop.permute.xlu0 %1961
        %1965 = vrot.lane.b32.xlu0 %v1895, 54
        %v1966 = vpop.permute.xlu0 %1965
        %1969 = vrot.lane.b32.xlu0 %v1886, 72
        %v1970 = vpop.permute.xlu0 %1969
        %1973 = vrot.lane.b32.xlu0 %v1896, 90
        %v1974 = vpop.permute.xlu0 %1973
        %1977 = vrot.lane.b32.xlu0 %v1893, 108
        %v1978 = vpop.permute.xlu0 %1977
        %1981 = vrot.lane.b32.xlu0 %v1897, 126
        %v1982 = vpop.permute.xlu0 %1981
        %1985 = vrot.lane.b32.xlu0 %v1920, 16
        %v1986 = vpop.permute.xlu0 %1985
        %1989 = vrot.lane.b32.xlu0 %v1943, 34
        %v1990 = vpop.permute.xlu0 %1989
        %1993 = vrot.lane.b32.xlu0 %v1927, 52
        %v1994 = vpop.permute.xlu0 %1993
        %1997 = vrot.lane.b32.xlu0 %v1944, 70
        %v1998 = vpop.permute.xlu0 %1997
        %2001 = vrot.lane.b32.xlu0 %v1935, 88
        %v2002 = vpop.permute.xlu0 %2001
        %2005 = vrot.lane.b32.xlu0 %v1945, 106
        %v2006 = vpop.permute.xlu0 %2005
        %2009 = vrot.lane.b32.xlu0 %v1942, 124
        %v2010 = vpop.permute.xlu0 %2009
        %2013 = vrot.lane.b32.xlu0 %v1946, 14
        %v2014 = vpop.permute.xlu0 %2013
        %2017 = vrot.lane.b32.xlu0 %v1954, 32
        %v2018 = vpop.permute.xlu0 %2017
        %2021 = vrot.lane.b32.xlu0 %v1955, 50
        %v2022 = vpop.permute.xlu0 %2021
        %v2024 = vsel %vm404, %v1871, %v1958
        %v2025 = vsel %vm406, %v2024, %v1962
        %v2026 = vsel %vm408, %v2025, %v1966
        %v2027 = vsel %vm410, %v2026, %v1970
        %v2028 = vsel %vm412, %v2027, %v1974
        %v2029 = vsel %vm414, %v2028, %v1978
        %v2030 = vsel %vm416, %v2029, %v1982
        %v2031 = vsel %vm418, %v1982, %v1986
        %v2032 = vsel %vm420, %v2031, %v1990
        %v2033 = vsel %vm422, %v2032, %v1994
        %v2034 = vsel %vm424, %v2033, %v1998
        %v2035 = vsel %vm426, %v2034, %v2002
        %v2036 = vsel %vm428, %v2035, %v2006
        %v2037 = vsel %vm430, %v2036, %v2010
        %v2038 = vsel %vm432, %v2010, %v2014
        %v2039 = vsel %vm434, %v2038, %v2018
        %v2040 = vsel %vm436, %v2039, %v2022
        %v2044 = vrot.slane %v630, 7
        %v2045 = vrot.slane %v637, 7
        %v2046 = vrot.slane %v640, 7
        %v2053 = vrot.slane %v830, 6
        %v2054 = vrot.slane %v837, 6
        %v2055 = vrot.slane %v840, 6
        %v2062 = vrot.slane %v1030, 5
        %v2063 = vrot.slane %v1037, 5
        %v2064 = vrot.slane %v1040, 5
        %v2071 = vrot.slane %v1230, 4
        %v2072 = vrot.slane %v1237, 4
        %v2073 = vrot.slane %v1240, 4
        %v2080 = vrot.slane %v1430, 3
        %v2081 = vrot.slane %v1437, 3
        %v2082 = vrot.slane %v1440, 3
        %v2089 = vrot.slane %v1630, 2
        %v2090 = vrot.slane %v1637, 2
        %v2091 = vrot.slane %v1640, 2
        %v2098 = vrot.slane %v1830, 1
        %v2099 = vrot.slane %v1837, 1
        %v2100 = vrot.slane %v1840, 1
        %vm2104 = vcmask 1040384
        %v2105 = vsel %vm2104, %v417, %v2044
        %v2106 = vsel %vm2104, %v431, %v2045
        %v2107 = vsel %vm2104, %v437, %v2046
        %vm2108 = vcmask 1041408
        %v2109 = vsel %vm2108, %v2105, %v2053
        %v2110 = vsel %vm2108, %v2106, %v2054
        %v2111 = vsel %vm2108, %v2107, %v2055
        %vm2112 = vcmask 1042432
        %v2113 = vsel %vm2112, %v2109, %v2062
        %v2114 = vsel %vm2112, %v2110, %v2063
        %v2115 = vsel %vm2112, %v2111, %v2064
        %vm2116 = vcmask 1043456
        %v2117 = vsel %vm2116, %v2113, %v2071
        %v2118 = vsel %vm2116, %v2114, %v2072
        %v2119 = vsel %vm2116, %v2115, %v2073
        %vm2120 = vcmask 1044480
        %v2121 = vsel %vm2120, %v2117, %v2080
        %v2122 = vsel %vm2120, %v2118, %v2081
        %v2123 = vsel %vm2120, %v2119, %v2082
        %v2124 = vsel %vm1441, %v2121, %v2089
        %v2125 = vsel %vm1441, %v2122, %v2090
        %v2126 = vsel %vm1441, %v2123, %v2091
        %v2127 = vsel %vm841, %v2124, %v2098
        %v2128 = vsel %vm841, %v2125, %v2099
        %v2129 = vsel %vm841, %v2126, %v2100
        %2131 = vset.pattern.permute.xlu0 0
        %2132 = vperm.xlu0 %2131, %v227
        %v2133 = vpop.permute.xlu0 %2132
        %vm2135 = vcmask 72704
        %v2137 = vsel %vm2135, %v226, 0
        %v2140 = vsel %vm2104, %v2030, 0
        %v2143 = vsel %vm2104, %v2037, 0
        %v2146 = vsel %vm2104, %v2040, 0
        %2148 = vmatprep.subr.mxu0 %v2128
        %2149 = vmatpush1.msra.mxu0 %v2127
        %2150 = vmatprep.subr.mxu0 %v2143
        %2151 = vmatpush1.msra.mxu0 %v2140
        %2152 = vmatprep.subr.mxu0 0.0
        %2153 = vmatpush1.msra.mxu0 0.0
        %2154 = vmatprep.subr.mxu0 0.0
        %2155 = vmatpush1.msra.mxu0 0.0
        %2156 = vmatprep.subr.mxu0 0.0
        %2157 = vmatpush1.msra.mxu0 0.0
        %2158 = vmatprep.subr.mxu0 0.0
        %2159 = vmatpush1.msra.mxu0 0.0
        %2160 = vmatprep.subr.mxu0 0.0
        %2161 = vmatpush1.msra.mxu0 0.0
        %2162 = vmatprep.subr.mxu0 0.0
        %2163 = vmatpush1.msra.mxu0 0.0
        %2164 = vmatprep.subr.mxu0 0.0
        %2165 = vmatpush1.msra.mxu0 0.0
        %2166 = vmatprep.subr.mxu0 0.0
        %2167 = vmatpush1.msra.mxu0 0.0
        %2168 = vmatprep.subr.mxu0 0.0
        %2169 = vmatpush1.msra.mxu0 0.0
        %2170 = vmatprep.subr.mxu0 0.0
        %2171 = vmatpush1.msra.mxu0 0.0
        %2172 = vmatprep.subr.mxu0 0.0
        %2173 = vmatpush1.msra.mxu0 0.0
        %2174 = vmatprep.subr.mxu0 0.0
        %2175 = vmatpush1.msra.mxu0 0.0
        %2176 = vmatprep.subr.mxu0 0.0
        %2177 = vmatpush1.msra.mxu0 0.0
        %2178 = vmatprep.subr.mxu0 0.0
        %2179 = vmatpush1.msra.mxu0 0.0
        %2180 = vmatprep.subr.mxu0 0.0
        %2181 = vmatpush1.msra.mxu0 0.0
        %2182 = vmatprep.subr.mxu0 0.0
        %2183 = vmatpush1.msra.mxu0 0.0
        %2184 = vmatprep.subr.mxu0 0.0
        %2185 = vmatpush1.msra.mxu0 0.0
        %2186 = vmatprep.subr.mxu0 0.0
        %2187 = vmatpush1.msra.mxu0 0.0
        %2188 = vmatprep.subr.mxu0 0.0
        %2189 = vmatpush1.msra.mxu0 0.0
        %2190 = vmatprep.subr.mxu0 0.0
        %2191 = vmatpush1.msra.mxu0 0.0
        %2192 = vmatprep.subr.mxu0 0.0
        %2193 = vmatpush1.msra.mxu0 0.0
        %2194 = vmatprep.subr.mxu0 0.0
        %2195 = vmatpush1.msra.mxu0 0.0
        %2196 = vmatprep.subr.mxu0 0.0
        %2197 = vmatpush1.msra.mxu0 0.0
        %2198 = vmatprep.subr.mxu0 0.0
        %2199 = vmatpush1.msra.mxu0 0.0
        %2200 = vmatprep.subr.mxu0 0.0
        %2201 = vmatpush1.msra.mxu0 0.0
        %2202 = vmatprep.subr.mxu0 0.0
        %2203 = vmatpush1.msra.mxu0 0.0
        %2204 = vmatprep.subr.mxu0 0.0
        %2205 = vmatpush1.msra.mxu0 0.0
        %2206 = vmatprep.subr.mxu0 0.0
        %2207 = vmatpush1.msra.mxu0 0.0
        %2208 = vmatprep.subr.mxu0 0.0
        %2209 = vmatpush1.msra.mxu0 0.0
        %2210 = vmatprep.subr.mxu0 0.0
        %2211 = vmatpush1.msra.mxu0 0.0
        %2212 = vmatprep.mubr.f32.mxu0 0.0
        %2213 = vmatmul.mubr.f32.gmra.mrb[0].mxu0 %v2137
        %v2214 = vpop.f32.mrb[0].mxu0
        %v2215 = vadd.f32 %v2133, %v2214
        %v2216 = vpop.f32.mrb[0].mxu0
        %v2217 = vadd.f32 %v2133, %v2216
        %2218 = vdwg.mxu0
        %2219 = vmatprep.subr.mxu0 0.0
        %2220 = vmatpush1.msra.mxu0 %v2129
        %2221 = vmatprep.subr.mxu0 0.0
        %2222 = vmatpush1.msra.mxu0 %v2146
        %2223 = vmatprep.subr.mxu0 0.0
        %2224 = vmatpush1.msra.mxu0 0.0
        %2225 = vmatprep.subr.mxu0 0.0
        %2226 = vmatpush1.msra.mxu0 0.0
        %2227 = vmatprep.subr.mxu0 0.0
        %2228 = vmatpush1.msra.mxu0 0.0
        %2229 = vmatprep.subr.mxu0 0.0
        %2230 = vmatpush1.msra.mxu0 0.0
        %2231 = vmatprep.subr.mxu0 0.0
        %2232 = vmatpush1.msra.mxu0 0.0
        %2233 = vmatprep.subr.mxu0 0.0
        %2234 = vmatpush1.msra.mxu0 0.0
        %2235 = vmatprep.subr.mxu0 0.0
        %2236 = vmatpush1.msra.mxu0 0.0
        %2237 = vmatprep.subr.mxu0 0.0
        %2238 = vmatpush1.msra.mxu0 0.0
        %2239 = vmatprep.subr.mxu0 0.0
        %2240 = vmatpush1.msra.mxu0 0.0
        %2241 = vmatprep.subr.mxu0 0.0
        %2242 = vmatpush1.msra.mxu0 0.0
        %2243 = vmatprep.subr.mxu0 0.0
        %2244 = vmatpush1.msra.mxu0 0.0
        %2245 = vmatprep.subr.mxu0 0.0
        %2246 = vmatpush1.msra.mxu0 0.0
        %2247 = vmatprep.subr.mxu0 0.0
        %2248 = vmatpush1.msra.mxu0 0.0
        %2249 = vmatprep.subr.mxu0 0.0
        %2250 = vmatpush1.msra.mxu0 0.0
        %2251 = vmatprep.subr.mxu0 0.0
        %2252 = vmatpush1.msra.mxu0 0.0
        %2253 = vmatprep.subr.mxu0 0.0
        %2254 = vmatpush1.msra.mxu0 0.0
        %2255 = vmatprep.subr.mxu0 0.0
        %2256 = vmatpush1.msra.mxu0 0.0
        %2257 = vmatprep.subr.mxu0 0.0
        %2258 = vmatpush1.msra.mxu0 0.0
        %2259 = vmatprep.subr.mxu0 0.0
        %2260 = vmatpush1.msra.mxu0 0.0
        %2261 = vmatprep.subr.mxu0 0.0
        %2262 = vmatpush1.msra.mxu0 0.0
        %2263 = vmatprep.subr.mxu0 0.0
        %2264 = vmatpush1.msra.mxu0 0.0
        %2265 = vmatprep.subr.mxu0 0.0
        %2266 = vmatpush1.msra.mxu0 0.0
        %2267 = vmatprep.subr.mxu0 0.0
        %2268 = vmatpush1.msra.mxu0 0.0
        %2269 = vmatprep.subr.mxu0 0.0
        %2270 = vmatpush1.msra.mxu0 0.0
        %2271 = vmatprep.subr.mxu0 0.0
        %2272 = vmatpush1.msra.mxu0 0.0
        %2273 = vmatprep.subr.mxu0 0.0
        %2274 = vmatpush1.msra.mxu0 0.0
        %2275 = vmatprep.subr.mxu0 0.0
        %2276 = vmatpush1.msra.mxu0 0.0
        %2277 = vmatprep.subr.mxu0 0.0
        %2278 = vmatpush1.msra.mxu0 0.0
        %2279 = vmatprep.subr.mxu0 0.0
        %2280 = vmatpush1.msra.mxu0 0.0
        %2281 = vmatprep.subr.mxu0 0.0
        %2282 = vmatpush1.msra.mxu0 0.0
        %2283 = vmatprep.mubr.f32.mxu0 0.0
        %2284 = vmatmul.mubr.f32.gmra.mrb[0].mxu0 %v2137
        %v2285 = vpop.f32.mrb[0].mxu0
        %v2286 = vadd.f32 %v2133, %v2285
        %v2287 = vpop.f32.mrb[0].mxu0
        %2288 = vdwg.mxu0
        %v2289 = vmax.f32 %v2215, 0.0
        %v2290 = vmax.f32 %v2217, 0.0
        %v2291 = vmax.f32 %v2286, 0.0
        %v2292 = vlaneseq
        %v2293 = vshrl.u32 %v2292, 7
        %v2294 = vadd.s32 %v2293, 8
        %v2295 = vadd.s32 %v2293, 16
        %v2296 = vlaneseq
        %v2297 = vand.u32 %v2296, 127
        %vm2298 = vcmp.ge.s32.totalorder %v2293, 1
        %vm2299 = vcmp.ge.s32.totalorder %v2294, 1
        %vm2300 = vcmp.ge.s32.totalorder %v2295, 1
        %vm2301 = vcmp.le.s32.totalorder %v2293, 16
        %vm2302 = vcmp.le.s32.totalorder %v2294, 16
        %vm2303 = vcmp.le.s32.totalorder %v2295, 16
        %vm2304 = vmand %vm2298, %vm2301
        %vm2305 = vmand %vm2299, %vm2302
        %vm2306 = vmand %vm2300, %vm2303
        %vm2307 = vcmp.ge.s32.totalorder %v2297, 1
        %vm2308 = vmand %vm2304, %vm2307
        %vm2309 = vmand %vm2305, %vm2307
        %vm2310 = vmand %vm2306, %vm2307
        %vm2311 = vcmp.le.s32.totalorder %v2297, 16
        %vm2312 = vmand %vm2308, %vm2311
        %vm2313 = vmand %vm2309, %vm2311
        %vm2314 = vmand %vm2310, %vm2311
        %v2315 = vsel %vm2312, 1, 0
        %v2316 = vsel %vm2313, 1, 0
        %v2317 = vsel %vm2314, 1, 0
        %v2318 = vcvt.s32.f32 %v2315
        %v2319 = vcvt.s32.f32 %v2316
        %v2320 = vcvt.s32.f32 %v2317
        %2322 = vrot.lane.b32.xlu0 %v2289, 110
        %v2323 = vpop.permute.xlu0 %2322
        %2325 = vrot.lane.b32.xlu0 %v2289, 92
        %v2326 = vpop.permute.xlu0 %2325
        %2328 = vrot.lane.b32.xlu0 %v2289, 74
        %v2329 = vpop.permute.xlu0 %2328
        %2331 = vrot.lane.b32.xlu0 %v2289, 56
        %v2332 = vpop.permute.xlu0 %2331
        %2334 = vrot.lane.b32.xlu0 %v2289, 38
        %v2335 = vpop.permute.xlu0 %2334
        %2337 = vrot.lane.b32.xlu0 %v2289, 20
        %v2338 = vpop.permute.xlu0 %2337
        %2341 = vrot.lane.b32.xlu0 %v2289, 2
        %v2342 = vpop.permute.xlu0 %2341
        %2343 = vrot.lane.b32.xlu0 %v2290, 2
        %v2344 = vpop.permute.xlu0 %2343
        %vm2345 = vcmask 15360
        %v2346 = vsel %vm2345, %v2342, %v2344
        %2348 = vrot.lane.b32.xlu0 %v2290, 112
        %v2349 = vpop.permute.xlu0 %2348
        %2351 = vrot.lane.b32.xlu0 %v2290, 94
        %v2352 = vpop.permute.xlu0 %2351
        %2354 = vrot.lane.b32.xlu0 %v2290, 76
        %v2355 = vpop.permute.xlu0 %2354
        %2357 = vrot.lane.b32.xlu0 %v2290, 58
        %v2358 = vpop.permute.xlu0 %2357
        %2360 = vrot.lane.b32.xlu0 %v2290, 40
        %v2361 = vpop.permute.xlu0 %2360
        %2363 = vrot.lane.b32.xlu0 %v2290, 22
        %v2364 = vpop.permute.xlu0 %2363
        %2367 = vrot.lane.b32.xlu0 %v2290, 4
        %v2368 = vpop.permute.xlu0 %2367
        %2369 = vrot.lane.b32.xlu0 %v2291, 4
        %v2370 = vpop.permute.xlu0 %2369
        %vm2371 = vcmask 31744
        %v2372 = vsel %vm2371, %v2368, %v2370
        %2374 = vrot.lane.b32.xlu0 %v2291, 114
        %v2375 = vpop.permute.xlu0 %2374
        %2377 = vrot.lane.b32.xlu0 %v2291, 96
        %v2378 = vpop.permute.xlu0 %2377
        %2380 = vrot.lane.b32.xlu0 %v2291, 78
        %v2381 = vpop.permute.xlu0 %2380
        %v2383 = vcombine.low %v2289, %v2326
        %v2384 = vcombine.high %v2289, %v2326
        %v2386 = vunpack.c.l.s4 1983009808
        %v2387 = vunpack.c.0.s8 %v2386
        %v2388 = vlaneseq
        %v2389 = vshrl.u32 %v2388, 7
        %v2390 = vsub.s32 %v2387, %v2389
        %v2391 = vrot.slane %v2383, %v2390
        %v2393 = vunpack.c.l.s4 1983009808
        %v2394 = vunpack.c.0.s8 %v2393
        %v2395 = vlaneseq
        %v2396 = vshrl.u32 %v2395, 7
        %v2397 = vsub.s32 %v2394, %v2396
        %v2398 = vrot.slane %v2384, %v2397
        %v2399 = vcombine.low %v2323, %v2329
        %v2400 = vcombine.high %v2323, %v2329
        %v2402 = vunpack.c.l.s4 1983009808
        %v2403 = vunpack.c.0.s8 %v2402
        %v2404 = vlaneseq
        %v2405 = vshrl.u32 %v2404, 7
        %v2406 = vsub.s32 %v2403, %v2405
        %v2407 = vrot.slane %v2399, %v2406
        %v2409 = vunpack.c.l.s4 1983009808
        %v2410 = vunpack.c.0.s8 %v2409
        %v2411 = vlaneseq
        %v2412 = vshrl.u32 %v2411, 7
        %v2413 = vsub.s32 %v2410, %v2412
        %v2414 = vrot.slane %v2400, %v2413
        %v2415 = vcombine.low %v2332, %v2338
        %v2416 = vcombine.high %v2332, %v2338
        %v2418 = vunpack.c.l.s4 1983009808
        %v2419 = vunpack.c.0.s8 %v2418
        %v2420 = vlaneseq
        %v2421 = vshrl.u32 %v2420, 7
        %v2422 = vsub.s32 %v2419, %v2421
        %v2423 = vrot.slane %v2415, %v2422
        %v2425 = vunpack.c.l.s4 1983009808
        %v2426 = vunpack.c.0.s8 %v2425
        %v2427 = vlaneseq
        %v2428 = vshrl.u32 %v2427, 7
        %v2429 = vsub.s32 %v2426, %v2428
        %v2430 = vrot.slane %v2416, %v2429
        %v2431 = vcombine.low %v2335, %v2346
        %v2432 = vcombine.high %v2335, %v2346
        %v2434 = vunpack.c.l.s4 1983009808
        %v2435 = vunpack.c.0.s8 %v2434
        %v2436 = vlaneseq
        %v2437 = vshrl.u32 %v2436, 7
        %v2438 = vsub.s32 %v2435, %v2437
        %v2439 = vrot.slane %v2431, %v2438
        %v2441 = vunpack.c.l.s4 1983009808
        %v2442 = vunpack.c.0.s8 %v2441
        %v2443 = vlaneseq
        %v2444 = vshrl.u32 %v2443, 7
        %v2445 = vsub.s32 %v2442, %v2444
        %v2446 = vrot.slane %v2432, %v2445
        %v2447 = vcombine.low %v2391, %v2407
        %v2448 = vcombine.high %v2391, %v2407
        %v2450 = vunpack.c.l.s4 1934713408
        %v2451 = vunpack.c.0.s8 %v2450
        %v2452 = vlaneseq
        %v2453 = vshrl.u32 %v2452, 7
        %v2454 = vsub.s32 %v2451, %v2453
        %v2455 = vrot.slane %v2447, %v2454
        %v2457 = vunpack.c.l.s4 1934713408
        %v2458 = vunpack.c.0.s8 %v2457
        %v2459 = vlaneseq
        %v2460 = vshrl.u32 %v2459, 7
        %v2461 = vsub.s32 %v2458, %v2460
        %v2462 = vrot.slane %v2448, %v2461
        %v2463 = vcombine.low %v2398, %v2414
        %v2464 = vcombine.high %v2398, %v2414
        %v2466 = vunpack.c.l.s4 1934713408
        %v2467 = vunpack.c.0.s8 %v2466
        %v2468 = vlaneseq
        %v2469 = vshrl.u32 %v2468, 7
        %v2470 = vsub.s32 %v2467, %v2469
        %v2471 = vrot.slane %v2463, %v2470
        %v2473 = vunpack.c.l.s4 1934713408
        %v2474 = vunpack.c.0.s8 %v2473
        %v2475 = vlaneseq
        %v2476 = vshrl.u32 %v2475, 7
        %v2477 = vsub.s32 %v2474, %v2476
        %v2478 = vrot.slane %v2464, %v2477
        %v2479 = vcombine.low %v2423, %v2439
        %v2480 = vcombine.high %v2423, %v2439
        %v2482 = vunpack.c.l.s4 1934713408
        %v2483 = vunpack.c.0.s8 %v2482
        %v2484 = vlaneseq
        %v2485 = vshrl.u32 %v2484, 7
        %v2486 = vsub.s32 %v2483, %v2485
        %v2487 = vrot.slane %v2479, %v2486
        %v2489 = vunpack.c.l.s4 1934713408
        %v2490 = vunpack.c.0.s8 %v2489
        %v2491 = vlaneseq
        %v2492 = vshrl.u32 %v2491, 7
        %v2493 = vsub.s32 %v2490, %v2492
        %v2494 = vrot.slane %v2480, %v2493
        %v2495 = vcombine.low %v2430, %v2446
        %v2496 = vcombine.high %v2430, %v2446
        %v2498 = vunpack.c.l.s4 1934713408
        %v2499 = vunpack.c.0.s8 %v2498
        %v2500 = vlaneseq
        %v2501 = vshrl.u32 %v2500, 7
        %v2502 = vsub.s32 %v2499, %v2501
        %v2503 = vrot.slane %v2495, %v2502
        %v2505 = vunpack.c.l.s4 1934713408
        %v2506 = vunpack.c.0.s8 %v2505
        %v2507 = vlaneseq
        %v2508 = vshrl.u32 %v2507, 7
        %v2509 = vsub.s32 %v2506, %v2508
        %v2510 = vrot.slane %v2496, %v2509
        %v2511 = vcombine.low %v2455, %v2487
        %v2512 = vcombine.high %v2455, %v2487
        %v2513 = vcombine.low %v2462, %v2494
        %v2514 = vcombine.high %v2462, %v2494
        %v2515 = vcombine.low %v2471, %v2503
        %v2516 = vcombine.high %v2471, %v2503
        %v2517 = vcombine.low %v2478, %v2510
        %v2518 = vcombine.high %v2478, %v2510
        %v2519 = vcombine.low %v2349, %v2355
        %v2520 = vcombine.high %v2349, %v2355
        %v2522 = vunpack.c.l.s4 1983009808
        %v2523 = vunpack.c.0.s8 %v2522
        %v2524 = vlaneseq
        %v2525 = vshrl.u32 %v2524, 7
        %v2526 = vsub.s32 %v2523, %v2525
        %v2527 = vrot.slane %v2519, %v2526
        %v2529 = vunpack.c.l.s4 1983009808
        %v2530 = vunpack.c.0.s8 %v2529
        %v2531 = vlaneseq
        %v2532 = vshrl.u32 %v2531, 7
        %v2533 = vsub.s32 %v2530, %v2532
        %v2534 = vrot.slane %v2520, %v2533
        %v2535 = vcombine.low %v2352, %v2358
        %v2536 = vcombine.high %v2352, %v2358
        %v2538 = vunpack.c.l.s4 1983009808
        %v2539 = vunpack.c.0.s8 %v2538
        %v2540 = vlaneseq
        %v2541 = vshrl.u32 %v2540, 7
        %v2542 = vsub.s32 %v2539, %v2541
        %v2543 = vrot.slane %v2535, %v2542
        %v2545 = vunpack.c.l.s4 1983009808
        %v2546 = vunpack.c.0.s8 %v2545
        %v2547 = vlaneseq
        %v2548 = vshrl.u32 %v2547, 7
        %v2549 = vsub.s32 %v2546, %v2548
        %v2550 = vrot.slane %v2536, %v2549
        %v2551 = vcombine.low %v2361, %v2372
        %v2552 = vcombine.high %v2361, %v2372
        %v2554 = vunpack.c.l.s4 1983009808
        %v2555 = vunpack.c.0.s8 %v2554
        %v2556 = vlaneseq
        %v2557 = vshrl.u32 %v2556, 7
        %v2558 = vsub.s32 %v2555, %v2557
        %v2559 = vrot.slane %v2551, %v2558
        %v2561 = vunpack.c.l.s4 1983009808
        %v2562 = vunpack.c.0.s8 %v2561
        %v2563 = vlaneseq
        %v2564 = vshrl.u32 %v2563, 7
        %v2565 = vsub.s32 %v2562, %v2564
        %v2566 = vrot.slane %v2552, %v2565
        %v2567 = vcombine.low %v2364, %v2375
        %v2568 = vcombine.high %v2364, %v2375
        %v2570 = vunpack.c.l.s4 1983009808
        %v2571 = vunpack.c.0.s8 %v2570
        %v2572 = vlaneseq
        %v2573 = vshrl.u32 %v2572, 7
        %v2574 = vsub.s32 %v2571, %v2573
        %v2575 = vrot.slane %v2567, %v2574
        %v2577 = vunpack.c.l.s4 1983009808
        %v2578 = vunpack.c.0.s8 %v2577
        %v2579 = vlaneseq
        %v2580 = vshrl.u32 %v2579, 7
        %v2581 = vsub.s32 %v2578, %v2580
        %v2582 = vrot.slane %v2568, %v2581
        %v2583 = vcombine.low %v2527, %v2543
        %v2584 = vcombine.high %v2527, %v2543
        %v2586 = vunpack.c.l.s4 1934713408
        %v2587 = vunpack.c.0.s8 %v2586
        %v2588 = vlaneseq
        %v2589 = vshrl.u32 %v2588, 7
        %v2590 = vsub.s32 %v2587, %v2589
        %v2591 = vrot.slane %v2583, %v2590
        %v2593 = vunpack.c.l.s4 1934713408
        %v2594 = vunpack.c.0.s8 %v2593
        %v2595 = vlaneseq
        %v2596 = vshrl.u32 %v2595, 7
        %v2597 = vsub.s32 %v2594, %v2596
        %v2598 = vrot.slane %v2584, %v2597
        %v2599 = vcombine.low %v2534, %v2550
        %v2600 = vcombine.high %v2534, %v2550
        %v2602 = vunpack.c.l.s4 1934713408
        %v2603 = vunpack.c.0.s8 %v2602
        %v2604 = vlaneseq
        %v2605 = vshrl.u32 %v2604, 7
        %v2606 = vsub.s32 %v2603, %v2605
        %v2607 = vrot.slane %v2599, %v2606
        %v2609 = vunpack.c.l.s4 1934713408
        %v2610 = vunpack.c.0.s8 %v2609
        %v2611 = vlaneseq
        %v2612 = vshrl.u32 %v2611, 7
        %v2613 = vsub.s32 %v2610, %v2612
        %v2614 = vrot.slane %v2600, %v2613
        %v2615 = vcombine.low %v2559, %v2575
        %v2616 = vcombine.high %v2559, %v2575
        %v2618 = vunpack.c.l.s4 1934713408
        %v2619 = vunpack.c.0.s8 %v2618
        %v2620 = vlaneseq
        %v2621 = vshrl.u32 %v2620, 7
        %v2622 = vsub.s32 %v2619, %v2621
        %v2623 = vrot.slane %v2615, %v2622
        %v2625 = vunpack.c.l.s4 1934713408
        %v2626 = vunpack.c.0.s8 %v2625
        %v2627 = vlaneseq
        %v2628 = vshrl.u32 %v2627, 7
        %v2629 = vsub.s32 %v2626, %v2628
        %v2630 = vrot.slane %v2616, %v2629
        %v2631 = vcombine.low %v2566, %v2582
        %v2632 = vcombine.high %v2566, %v2582
        %v2634 = vunpack.c.l.s4 1934713408
        %v2635 = vunpack.c.0.s8 %v2634
        %v2636 = vlaneseq
        %v2637 = vshrl.u32 %v2636, 7
        %v2638 = vsub.s32 %v2635, %v2637
        %v2639 = vrot.slane %v2631, %v2638
        %v2641 = vunpack.c.l.s4 1934713408
        %v2642 = vunpack.c.0.s8 %v2641
        %v2643 = vlaneseq
        %v2644 = vshrl.u32 %v2643, 7
        %v2645 = vsub.s32 %v2642, %v2644
        %v2646 = vrot.slane %v2632, %v2645
        %v2647 = vcombine.low %v2591, %v2623
        %v2648 = vcombine.high %v2591, %v2623
        %v2649 = vcombine.low %v2598, %v2630
        %v2650 = vcombine.high %v2598, %v2630
        %v2651 = vcombine.low %v2607, %v2639
        %v2652 = vcombine.high %v2607, %v2639
        %v2653 = vcombine.low %v2614, %v2646
        %v2654 = vcombine.high %v2614, %v2646
        %v2655 = vcombine.high %v2378, 0.0
        %v2657 = vunpack.c.l.s4 1983009808
        %v2658 = vunpack.c.0.s8 %v2657
        %v2659 = vlaneseq
        %v2660 = vshrl.u32 %v2659, 7
        %v2661 = vsub.s32 %v2658, %v2660
        %v2662 = vrot.slane %v2378, %v2661
        %v2664 = vunpack.c.l.s4 1983009808
        %v2665 = vunpack.c.0.s8 %v2664
        %v2666 = vlaneseq
        %v2667 = vshrl.u32 %v2666, 7
        %v2668 = vsub.s32 %v2665, %v2667
        %v2669 = vrot.slane %v2655, %v2668
        %v2670 = vcombine.high %v2381, 0.0
        %v2672 = vunpack.c.l.s4 1983009808
        %v2673 = vunpack.c.0.s8 %v2672
        %v2674 = vlaneseq
        %v2675 = vshrl.u32 %v2674, 7
        %v2676 = vsub.s32 %v2673, %v2675
        %v2677 = vrot.slane %v2381, %v2676
        %v2679 = vunpack.c.l.s4 1983009808
        %v2680 = vunpack.c.0.s8 %v2679
        %v2681 = vlaneseq
        %v2682 = vshrl.u32 %v2681, 7
        %v2683 = vsub.s32 %v2680, %v2682
        %v2684 = vrot.slane %v2670, %v2683
        %v2685 = vcombine.low %v2662, %v2677
        %v2686 = vcombine.high %v2662, %v2677
        %v2688 = vunpack.c.l.s4 1934713408
        %v2689 = vunpack.c.0.s8 %v2688
        %v2690 = vlaneseq
        %v2691 = vshrl.u32 %v2690, 7
        %v2692 = vsub.s32 %v2689, %v2691
        %v2693 = vrot.slane %v2685, %v2692
        %v2695 = vunpack.c.l.s4 1934713408
        %v2696 = vunpack.c.0.s8 %v2695
        %v2697 = vlaneseq
        %v2698 = vshrl.u32 %v2697, 7
        %v2699 = vsub.s32 %v2696, %v2698
        %v2700 = vrot.slane %v2686, %v2699
        %v2701 = vcombine.low %v2669, %v2684
        %v2702 = vcombine.high %v2669, %v2684
        %v2704 = vunpack.c.l.s4 1934713408
        %v2705 = vunpack.c.0.s8 %v2704
        %v2706 = vlaneseq
        %v2707 = vshrl.u32 %v2706, 7
        %v2708 = vsub.s32 %v2705, %v2707
        %v2709 = vrot.slane %v2701, %v2708
        %v2711 = vunpack.c.l.s4 1934713408
        %v2712 = vunpack.c.0.s8 %v2711
        %v2713 = vlaneseq
        %v2714 = vshrl.u32 %v2713, 7
        %v2715 = vsub.s32 %v2712, %v2714
        %v2716 = vrot.slane %v2702, %v2715
        %v2717 = vcombine.high %v2693, 0.0
        %v2718 = vcombine.high %v2700, 0.0
        %v2719 = vcombine.high %v2709, 0.0
        %v2720 = vcombine.high %v2716, 0.0
        %v2721 = vmul.f32 %v2511, %v2318
        %v2722 = vmul.f32 %v2647, %v2319
        %v2723 = vmul.f32 %v2693, %v2320
        %v2724 = vmul.f32 %v2512, %v2318
        %v2725 = vmul.f32 %v2648, %v2319
        %v2726 = vmul.f32 %v2717, %v2320
        %v2727 = vmul.f32 %v2513, %v2318
        %v2728 = vmul.f32 %v2649, %v2319
        %v2729 = vmul.f32 %v2700, %v2320
        %v2730 = vmul.f32 %v2514, %v2318
        %v2731 = vmul.f32 %v2650, %v2319
        %v2732 = vmul.f32 %v2718, %v2320
        %v2733 = vmul.f32 %v2515, %v2318
        %v2734 = vmul.f32 %v2651, %v2319
        %v2735 = vmul.f32 %v2709, %v2320
        %v2736 = vmul.f32 %v2516, %v2318
        %v2737 = vmul.f32 %v2652, %v2319
        %v2738 = vmul.f32 %v2719, %v2320
        %v2739 = vmul.f32 %v2517, %v2318
        %v2740 = vmul.f32 %v2653, %v2319
        %v2741 = vmul.f32 %v2716, %v2320
        %v2742 = vmul.f32 %v2518, %v2318
        %v2743 = vmul.f32 %v2654, %v2319
        %v2744 = vmul.f32 %v2720, %v2320
        %v2745 = vcombine.low %v2721, %v2727
        %v2746 = vcombine.high %v2721, %v2727
        %v2748 = vunpack.c.l.s4 1983009808
        %v2749 = vunpack.c.0.s8 %v2748
        %v2750 = vlaneseq
        %v2751 = vshrl.u32 %v2750, 7
        %v2752 = vsub.s32 %v2749, %v2751
        %v2753 = vrot.slane %v2745, %v2752
        %v2755 = vunpack.c.l.s4 1983009808
        %v2756 = vunpack.c.0.s8 %v2755
        %v2757 = vlaneseq
        %v2758 = vshrl.u32 %v2757, 7
        %v2759 = vsub.s32 %v2756, %v2758
        %v2760 = vrot.slane %v2746, %v2759
        %v2761 = vcombine.low %v2724, %v2730
        %v2762 = vcombine.high %v2724, %v2730
        %v2764 = vunpack.c.l.s4 1983009808
        %v2765 = vunpack.c.0.s8 %v2764
        %v2766 = vlaneseq
        %v2767 = vshrl.u32 %v2766, 7
        %v2768 = vsub.s32 %v2765, %v2767
        %v2769 = vrot.slane %v2761, %v2768
        %v2771 = vunpack.c.l.s4 1983009808
        %v2772 = vunpack.c.0.s8 %v2771
        %v2773 = vlaneseq
        %v2774 = vshrl.u32 %v2773, 7
        %v2775 = vsub.s32 %v2772, %v2774
        %v2776 = vrot.slane %v2762, %v2775
        %v2777 = vcombine.low %v2733, %v2739
        %v2778 = vcombine.high %v2733, %v2739
        %v2780 = vunpack.c.l.s4 1983009808
        %v2781 = vunpack.c.0.s8 %v2780
        %v2782 = vlaneseq
        %v2783 = vshrl.u32 %v2782, 7
        %v2784 = vsub.s32 %v2781, %v2783
        %v2785 = vrot.slane %v2777, %v2784
        %v2787 = vunpack.c.l.s4 1983009808
        %v2788 = vunpack.c.0.s8 %v2787
        %v2789 = vlaneseq
        %v2790 = vshrl.u32 %v2789, 7
        %v2791 = vsub.s32 %v2788, %v2790
        %v2792 = vrot.slane %v2778, %v2791
        %v2793 = vcombine.low %v2736, %v2742
        %v2794 = vcombine.high %v2736, %v2742
        %v2796 = vunpack.c.l.s4 1983009808
        %v2797 = vunpack.c.0.s8 %v2796
        %v2798 = vlaneseq
        %v2799 = vshrl.u32 %v2798, 7
        %v2800 = vsub.s32 %v2797, %v2799
        %v2801 = vrot.slane %v2793, %v2800
        %v2803 = vunpack.c.l.s4 1983009808
        %v2804 = vunpack.c.0.s8 %v2803
        %v2805 = vlaneseq
        %v2806 = vshrl.u32 %v2805, 7
        %v2807 = vsub.s32 %v2804, %v2806
        %v2808 = vrot.slane %v2794, %v2807
        %v2809 = vcombine.low %v2753, %v2769
        %v2810 = vcombine.high %v2753, %v2769
        %v2812 = vunpack.c.l.s4 1934713408
        %v2813 = vunpack.c.0.s8 %v2812
        %v2814 = vlaneseq
        %v2815 = vshrl.u32 %v2814, 7
        %v2816 = vsub.s32 %v2813, %v2815
        %v2817 = vrot.slane %v2809, %v2816
        %v2819 = vunpack.c.l.s4 1934713408
        %v2820 = vunpack.c.0.s8 %v2819
        %v2821 = vlaneseq
        %v2822 = vshrl.u32 %v2821, 7
        %v2823 = vsub.s32 %v2820, %v2822
        %v2824 = vrot.slane %v2810, %v2823
        %v2825 = vcombine.low %v2760, %v2776
        %v2826 = vcombine.high %v2760, %v2776
        %v2828 = vunpack.c.l.s4 1934713408
        %v2829 = vunpack.c.0.s8 %v2828
        %v2830 = vlaneseq
        %v2831 = vshrl.u32 %v2830, 7
        %v2832 = vsub.s32 %v2829, %v2831
        %v2833 = vrot.slane %v2825, %v2832
        %v2835 = vunpack.c.l.s4 1934713408
        %v2836 = vunpack.c.0.s8 %v2835
        %v2837 = vlaneseq
        %v2838 = vshrl.u32 %v2837, 7
        %v2839 = vsub.s32 %v2836, %v2838
        %v2840 = vrot.slane %v2826, %v2839
        %v2841 = vcombine.low %v2785, %v2801
        %v2842 = vcombine.high %v2785, %v2801
        %v2844 = vunpack.c.l.s4 1934713408
        %v2845 = vunpack.c.0.s8 %v2844
        %v2846 = vlaneseq
        %v2847 = vshrl.u32 %v2846, 7
        %v2848 = vsub.s32 %v2845, %v2847
        %v2849 = vrot.slane %v2841, %v2848
        %v2851 = vunpack.c.l.s4 1934713408
        %v2852 = vunpack.c.0.s8 %v2851
        %v2853 = vlaneseq
        %v2854 = vshrl.u32 %v2853, 7
        %v2855 = vsub.s32 %v2852, %v2854
        %v2856 = vrot.slane %v2842, %v2855
        %v2857 = vcombine.low %v2792, %v2808
        %v2858 = vcombine.high %v2792, %v2808
        %v2860 = vunpack.c.l.s4 1934713408
        %v2861 = vunpack.c.0.s8 %v2860
        %v2862 = vlaneseq
        %v2863 = vshrl.u32 %v2862, 7
        %v2864 = vsub.s32 %v2861, %v2863
        %v2865 = vrot.slane %v2857, %v2864
        %v2867 = vunpack.c.l.s4 1934713408
        %v2868 = vunpack.c.0.s8 %v2867
        %v2869 = vlaneseq
        %v2870 = vshrl.u32 %v2869, 7
        %v2871 = vsub.s32 %v2868, %v2870
        %v2872 = vrot.slane %v2858, %v2871
        %v2873 = vcombine.low %v2817, %v2849
        %v2874 = vcombine.high %v2817, %v2849
        %v2875 = vcombine.low %v2824, %v2856
        %v2876 = vcombine.high %v2824, %v2856
        %v2877 = vcombine.low %v2833, %v2865
        %v2878 = vcombine.high %v2833, %v2865
        %v2879 = vcombine.low %v2840, %v2872
        %v2880 = vcombine.high %v2840, %v2872
        %v2881 = vcombine.low %v2722, %v2728
        %v2882 = vcombine.high %v2722, %v2728
        %v2884 = vunpack.c.l.s4 1983009808
        %v2885 = vunpack.c.0.s8 %v2884
        %v2886 = vlaneseq
        %v2887 = vshrl.u32 %v2886, 7
        %v2888 = vsub.s32 %v2885, %v2887
        %v2889 = vrot.slane %v2881, %v2888
        %v2891 = vunpack.c.l.s4 1983009808
        %v2892 = vunpack.c.0.s8 %v2891
        %v2893 = vlaneseq
        %v2894 = vshrl.u32 %v2893, 7
        %v2895 = vsub.s32 %v2892, %v2894
        %v2896 = vrot.slane %v2882, %v2895
        %v2897 = vcombine.low %v2725, %v2731
        %v2898 = vcombine.high %v2725, %v2731
        %v2900 = vunpack.c.l.s4 1983009808
        %v2901 = vunpack.c.0.s8 %v2900
        %v2902 = vlaneseq
        %v2903 = vshrl.u32 %v2902, 7
        %v2904 = vsub.s32 %v2901, %v2903
        %v2905 = vrot.slane %v2897, %v2904
        %v2907 = vunpack.c.l.s4 1983009808
        %v2908 = vunpack.c.0.s8 %v2907
        %v2909 = vlaneseq
        %v2910 = vshrl.u32 %v2909, 7
        %v2911 = vsub.s32 %v2908, %v2910
        %v2912 = vrot.slane %v2898, %v2911
        %v2913 = vcombine.low %v2734, %v2740
        %v2914 = vcombine.high %v2734, %v2740
        %v2916 = vunpack.c.l.s4 1983009808
        %v2917 = vunpack.c.0.s8 %v2916
        %v2918 = vlaneseq
        %v2919 = vshrl.u32 %v2918, 7
        %v2920 = vsub.s32 %v2917, %v2919
        %v2921 = vrot.slane %v2913, %v2920
        %v2923 = vunpack.c.l.s4 1983009808
        %v2924 = vunpack.c.0.s8 %v2923
        %v2925 = vlaneseq
        %v2926 = vshrl.u32 %v2925, 7
        %v2927 = vsub.s32 %v2924, %v2926
        %v2928 = vrot.slane %v2914, %v2927
        %v2929 = vcombine.low %v2737, %v2743
        %v2930 = vcombine.high %v2737, %v2743
        %v2932 = vunpack.c.l.s4 1983009808
        %v2933 = vunpack.c.0.s8 %v2932
        %v2934 = vlaneseq
        %v2935 = vshrl.u32 %v2934, 7
        %v2936 = vsub.s32 %v2933, %v2935
        %v2937 = vrot.slane %v2929, %v2936
        %v2939 = vunpack.c.l.s4 1983009808
        %v2940 = vunpack.c.0.s8 %v2939
        %v2941 = vlaneseq
        %v2942 = vshrl.u32 %v2941, 7
        %v2943 = vsub.s32 %v2940, %v2942
        %v2944 = vrot.slane %v2930, %v2943
        %v2945 = vcombine.low %v2889, %v2905
        %v2946 = vcombine.high %v2889, %v2905
        %v2948 = vunpack.c.l.s4 1934713408
        %v2949 = vunpack.c.0.s8 %v2948
        %v2950 = vlaneseq
        %v2951 = vshrl.u32 %v2950, 7
        %v2952 = vsub.s32 %v2949, %v2951
        %v2953 = vrot.slane %v2945, %v2952
        %v2955 = vunpack.c.l.s4 1934713408
        %v2956 = vunpack.c.0.s8 %v2955
        %v2957 = vlaneseq
        %v2958 = vshrl.u32 %v2957, 7
        %v2959 = vsub.s32 %v2956, %v2958
        %v2960 = vrot.slane %v2946, %v2959
        %v2961 = vcombine.low %v2896, %v2912
        %v2962 = vcombine.high %v2896, %v2912
        %v2964 = vunpack.c.l.s4 1934713408
        %v2965 = vunpack.c.0.s8 %v2964
        %v2966 = vlaneseq
        %v2967 = vshrl.u32 %v2966, 7
        %v2968 = vsub.s32 %v2965, %v2967
        %v2969 = vrot.slane %v2961, %v2968
        %v2971 = vunpack.c.l.s4 1934713408
        %v2972 = vunpack.c.0.s8 %v2971
        %v2973 = vlaneseq
        %v2974 = vshrl.u32 %v2973, 7
        %v2975 = vsub.s32 %v2972, %v2974
        %v2976 = vrot.slane %v2962, %v2975
        %v2977 = vcombine.low %v2921, %v2937
        %v2978 = vcombine.high %v2921, %v2937
        %v2980 = vunpack.c.l.s4 1934713408
        %v2981 = vunpack.c.0.s8 %v2980
        %v2982 = vlaneseq
        %v2983 = vshrl.u32 %v2982, 7
        %v2984 = vsub.s32 %v2981, %v2983
        %v2985 = vrot.slane %v2977, %v2984
        %v2987 = vunpack.c.l.s4 1934713408
        %v2988 = vunpack.c.0.s8 %v2987
        %v2989 = vlaneseq
        %v2990 = vshrl.u32 %v2989, 7
        %v2991 = vsub.s32 %v2988, %v2990
        %v2992 = vrot.slane %v2978, %v2991
        %v2993 = vcombine.low %v2928, %v2944
        %v2994 = vcombine.high %v2928, %v2944
        %v2996 = vunpack.c.l.s4 1934713408
        %v2997 = vunpack.c.0.s8 %v2996
        %v2998 = vlaneseq
        %v2999 = vshrl.u32 %v2998, 7
        %v3000 = vsub.s32 %v2997, %v2999
        %v3001 = vrot.slane %v2993, %v3000
        %v3003 = vunpack.c.l.s4 1934713408
        %v3004 = vunpack.c.0.s8 %v3003
        %v3005 = vlaneseq
        %v3006 = vshrl.u32 %v3005, 7
        %v3007 = vsub.s32 %v3004, %v3006
        %v3008 = vrot.slane %v2994, %v3007
        %v3009 = vcombine.low %v2953, %v2985
        %v3010 = vcombine.high %v2953, %v2985
        %v3011 = vcombine.low %v2960, %v2992
        %v3012 = vcombine.high %v2960, %v2992
        %v3013 = vcombine.low %v2969, %v3001
        %v3014 = vcombine.high %v2969, %v3001
        %v3015 = vcombine.low %v2976, %v3008
        %v3016 = vcombine.high %v2976, %v3008
        %3018 = vrot.lane.b32.xlu0 %v2874, 16
        %v3019 = vpop.permute.xlu0 %3018
        %3022 = vrot.lane.b32.xlu0 %v2875, 32
        %v3023 = vpop.permute.xlu0 %3022
        %3026 = vrot.lane.b32.xlu0 %v2876, 48
        %v3027 = vpop.permute.xlu0 %3026
        %3030 = vrot.lane.b32.xlu0 %v2877, 64
        %v3031 = vpop.permute.xlu0 %3030
        %3034 = vrot.lane.b32.xlu0 %v2878, 80
        %v3035 = vpop.permute.xlu0 %3034
        %3038 = vrot.lane.b32.xlu0 %v2879, 96
        %v3039 = vpop.permute.xlu0 %3038
        %3042 = vrot.lane.b32.xlu0 %v2880, 112
        %v3043 = vpop.permute.xlu0 %3042
        %3046 = vrot.lane.b32.xlu0 %v3010, 16
        %v3047 = vpop.permute.xlu0 %3046
        %3050 = vrot.lane.b32.xlu0 %v3011, 32
        %v3051 = vpop.permute.xlu0 %3050
        %3054 = vrot.lane.b32.xlu0 %v3012, 48
        %v3055 = vpop.permute.xlu0 %3054
        %3058 = vrot.lane.b32.xlu0 %v3013, 64
        %v3059 = vpop.permute.xlu0 %3058
        %3062 = vrot.lane.b32.xlu0 %v3014, 80
        %v3063 = vpop.permute.xlu0 %3062
        %3066 = vrot.lane.b32.xlu0 %v3015, 96
        %v3067 = vpop.permute.xlu0 %3066
        %3070 = vrot.lane.b32.xlu0 %v3016, 112
        %v3071 = vpop.permute.xlu0 %3070
        %v3073 = vsel %vm418, %v2873, %v3019
        %v3074 = vsel %vm434, %v3073, %v3023
        %vm3075 = vcmask 392192
        %v3076 = vsel %vm3075, %v3074, %v3027
        %vm3077 = vcmask 523264
        %v3078 = vsel %vm3077, %v3076, %v3031
        %vm3079 = vcmask 654336
        %v3080 = vsel %vm3079, %v3078, %v3035
        %vm3081 = vcmask 785408
        %v3082 = vsel %vm3081, %v3080, %v3039
        %vm3083 = vcmask 916480
        %v3084 = vsel %vm3083, %v3082, %v3043
        %v3085 = vsel %vm418, %v3009, %v3047
        %v3086 = vsel %vm434, %v3085, %v3051
        %v3087 = vsel %vm3075, %v3086, %v3055
        %v3088 = vsel %vm3077, %v3087, %v3059
        %v3089 = vsel %vm3079, %v3088, %v3063
        %v3090 = vsel %vm3081, %v3089, %v3067
        %v3091 = vsel %vm3083, %v3090, %v3071
        %3108 = vrot.lane.b32.xlu0 %v2721, 127
        %v3109 = vpop.permute.xlu0 %3108
        %3110 = vrot.lane.b32.xlu0 %v2722, 127
        %v3111 = vpop.permute.xlu0 %3110
        %3112 = vrot.lane.b32.xlu0 %v2724, 127
        %v3113 = vpop.permute.xlu0 %3112
        %3114 = vrot.lane.b32.xlu0 %v2725, 127
        %v3115 = vpop.permute.xlu0 %3114
        %3116 = vrot.lane.b32.xlu0 %v2727, 127
        %v3117 = vpop.permute.xlu0 %3116
        %3118 = vrot.lane.b32.xlu0 %v2728, 127
        %v3119 = vpop.permute.xlu0 %3118
        %3120 = vrot.lane.b32.xlu0 %v2730, 127
        %v3121 = vpop.permute.xlu0 %3120
        %3122 = vrot.lane.b32.xlu0 %v2731, 127
        %v3123 = vpop.permute.xlu0 %3122
        %3124 = vrot.lane.b32.xlu0 %v2733, 127
        %v3125 = vpop.permute.xlu0 %3124
        %3126 = vrot.lane.b32.xlu0 %v2734, 127
        %v3127 = vpop.permute.xlu0 %3126
        %3128 = vrot.lane.b32.xlu0 %v2736, 127
        %v3129 = vpop.permute.xlu0 %3128
        %3130 = vrot.lane.b32.xlu0 %v2737, 127
        %v3131 = vpop.permute.xlu0 %3130
        %3132 = vrot.lane.b32.xlu0 %v2739, 127
        %v3133 = vpop.permute.xlu0 %3132
        %3134 = vrot.lane.b32.xlu0 %v2740, 127
        %v3135 = vpop.permute.xlu0 %3134
        %3136 = vrot.lane.b32.xlu0 %v2742, 127
        %v3137 = vpop.permute.xlu0 %3136
        %3138 = vrot.lane.b32.xlu0 %v2743, 127
        %v3139 = vpop.permute.xlu0 %3138
        %v3156 = vcombine.low %v3109, %v3117
        %v3157 = vcombine.high %v3109, %v3117
        %v3159 = vunpack.c.l.s4 1983009808
        %v3160 = vunpack.c.0.s8 %v3159
        %v3161 = vlaneseq
        %v3162 = vshrl.u32 %v3161, 7
        %v3163 = vsub.s32 %v3160, %v3162
        %v3164 = vrot.slane %v3156, %v3163
        %v3166 = vunpack.c.l.s4 1983009808
        %v3167 = vunpack.c.0.s8 %v3166
        %v3168 = vlaneseq
        %v3169 = vshrl.u32 %v3168, 7
        %v3170 = vsub.s32 %v3167, %v3169
        %v3171 = vrot.slane %v3157, %v3170
        %v3172 = vcombine.low %v3113, %v3121
        %v3173 = vcombine.high %v3113, %v3121
        %v3175 = vunpack.c.l.s4 1983009808
        %v3176 = vunpack.c.0.s8 %v3175
        %v3177 = vlaneseq
        %v3178 = vshrl.u32 %v3177, 7
        %v3179 = vsub.s32 %v3176, %v3178
        %v3180 = vrot.slane %v3172, %v3179
        %v3182 = vunpack.c.l.s4 1983009808
        %v3183 = vunpack.c.0.s8 %v3182
        %v3184 = vlaneseq
        %v3185 = vshrl.u32 %v3184, 7
        %v3186 = vsub.s32 %v3183, %v3185
        %v3187 = vrot.slane %v3173, %v3186
        %v3188 = vcombine.low %v3125, %v3133
        %v3189 = vcombine.high %v3125, %v3133
        %v3191 = vunpack.c.l.s4 1983009808
        %v3192 = vunpack.c.0.s8 %v3191
        %v3193 = vlaneseq
        %v3194 = vshrl.u32 %v3193, 7
        %v3195 = vsub.s32 %v3192, %v3194
        %v3196 = vrot.slane %v3188, %v3195
        %v3198 = vunpack.c.l.s4 1983009808
        %v3199 = vunpack.c.0.s8 %v3198
        %v3200 = vlaneseq
        %v3201 = vshrl.u32 %v3200, 7
        %v3202 = vsub.s32 %v3199, %v3201
        %v3203 = vrot.slane %v3189, %v3202
        %v3204 = vcombine.low %v3129, %v3137
        %v3205 = vcombine.high %v3129, %v3137
        %v3207 = vunpack.c.l.s4 1983009808
        %v3208 = vunpack.c.0.s8 %v3207
        %v3209 = vlaneseq
        %v3210 = vshrl.u32 %v3209, 7
        %v3211 = vsub.s32 %v3208, %v3210
        %v3212 = vrot.slane %v3204, %v3211
        %v3214 = vunpack.c.l.s4 1983009808
        %v3215 = vunpack.c.0.s8 %v3214
        %v3216 = vlaneseq
        %v3217 = vshrl.u32 %v3216, 7
        %v3218 = vsub.s32 %v3215, %v3217
        %v3219 = vrot.slane %v3205, %v3218
        %v3220 = vcombine.low %v3164, %v3180
        %v3221 = vcombine.high %v3164, %v3180
        %v3223 = vunpack.c.l.s4 1934713408
        %v3224 = vunpack.c.0.s8 %v3223
        %v3225 = vlaneseq
        %v3226 = vshrl.u32 %v3225, 7
        %v3227 = vsub.s32 %v3224, %v3226
        %v3228 = vrot.slane %v3220, %v3227
        %v3230 = vunpack.c.l.s4 1934713408
        %v3231 = vunpack.c.0.s8 %v3230
        %v3232 = vlaneseq
        %v3233 = vshrl.u32 %v3232, 7
        %v3234 = vsub.s32 %v3231, %v3233
        %v3235 = vrot.slane %v3221, %v3234
        %v3236 = vcombine.low %v3171, %v3187
        %v3237 = vcombine.high %v3171, %v3187
        %v3239 = vunpack.c.l.s4 1934713408
        %v3240 = vunpack.c.0.s8 %v3239
        %v3241 = vlaneseq
        %v3242 = vshrl.u32 %v3241, 7
        %v3243 = vsub.s32 %v3240, %v3242
        %v3244 = vrot.slane %v3236, %v3243
        %v3246 = vunpack.c.l.s4 1934713408
        %v3247 = vunpack.c.0.s8 %v3246
        %v3248 = vlaneseq
        %v3249 = vshrl.u32 %v3248, 7
        %v3250 = vsub.s32 %v3247, %v3249
        %v3251 = vrot.slane %v3237, %v3250
        %v3252 = vcombine.low %v3196, %v3212
        %v3253 = vcombine.high %v3196, %v3212
        %v3255 = vunpack.c.l.s4 1934713408
        %v3256 = vunpack.c.0.s8 %v3255
        %v3257 = vlaneseq
        %v3258 = vshrl.u32 %v3257, 7
        %v3259 = vsub.s32 %v3256, %v3258
        %v3260 = vrot.slane %v3252, %v3259
        %v3262 = vunpack.c.l.s4 1934713408
        %v3263 = vunpack.c.0.s8 %v3262
        %v3264 = vlaneseq
        %v3265 = vshrl.u32 %v3264, 7
        %v3266 = vsub.s32 %v3263, %v3265
        %v3267 = vrot.slane %v3253, %v3266
        %v3268 = vcombine.low %v3203, %v3219
        %v3269 = vcombine.high %v3203, %v3219
        %v3271 = vunpack.c.l.s4 1934713408
        %v3272 = vunpack.c.0.s8 %v3271
        %v3273 = vlaneseq
        %v3274 = vshrl.u32 %v3273, 7
        %v3275 = vsub.s32 %v3272, %v3274
        %v3276 = vrot.slane %v3268, %v3275
        %v3278 = vunpack.c.l.s4 1934713408
        %v3279 = vunpack.c.0.s8 %v3278
        %v3280 = vlaneseq
        %v3281 = vshrl.u32 %v3280, 7
        %v3282 = vsub.s32 %v3279, %v3281
        %v3283 = vrot.slane %v3269, %v3282
        %v3284 = vcombine.low %v3228, %v3260
        %v3285 = vcombine.high %v3228, %v3260
        %v3286 = vcombine.low %v3235, %v3267
        %v3287 = vcombine.high %v3235, %v3267
        %v3288 = vcombine.low %v3244, %v3276
        %v3289 = vcombine.high %v3244, %v3276
        %v3290 = vcombine.low %v3251, %v3283
        %v3291 = vcombine.high %v3251, %v3283
        %v3292 = vcombine.low %v3111, %v3119
        %v3293 = vcombine.high %v3111, %v3119
        %v3295 = vunpack.c.l.s4 1983009808
        %v3296 = vunpack.c.0.s8 %v3295
        %v3297 = vlaneseq
        %v3298 = vshrl.u32 %v3297, 7
        %v3299 = vsub.s32 %v3296, %v3298
        %v3300 = vrot.slane %v3292, %v3299
        %v3302 = vunpack.c.l.s4 1983009808
        %v3303 = vunpack.c.0.s8 %v3302
        %v3304 = vlaneseq
        %v3305 = vshrl.u32 %v3304, 7
        %v3306 = vsub.s32 %v3303, %v3305
        %v3307 = vrot.slane %v3293, %v3306
        %v3308 = vcombine.low %v3115, %v3123
        %v3309 = vcombine.high %v3115, %v3123
        %v3311 = vunpack.c.l.s4 1983009808
        %v3312 = vunpack.c.0.s8 %v3311
        %v3313 = vlaneseq
        %v3314 = vshrl.u32 %v3313, 7
        %v3315 = vsub.s32 %v3312, %v3314
        %v3316 = vrot.slane %v3308, %v3315
        %v3318 = vunpack.c.l.s4 1983009808
        %v3319 = vunpack.c.0.s8 %v3318
        %v3320 = vlaneseq
        %v3321 = vshrl.u32 %v3320, 7
        %v3322 = vsub.s32 %v3319, %v3321
        %v3323 = vrot.slane %v3309, %v3322
        %v3324 = vcombine.low %v3127, %v3135
        %v3325 = vcombine.high %v3127, %v3135
        %v3327 = vunpack.c.l.s4 1983009808
        %v3328 = vunpack.c.0.s8 %v3327
        %v3329 = vlaneseq
        %v3330 = vshrl.u32 %v3329, 7
        %v3331 = vsub.s32 %v3328, %v3330
        %v3332 = vrot.slane %v3324, %v3331
        %v3334 = vunpack.c.l.s4 1983009808
        %v3335 = vunpack.c.0.s8 %v3334
        %v3336 = vlaneseq
        %v3337 = vshrl.u32 %v3336, 7
        %v3338 = vsub.s32 %v3335, %v3337
        %v3339 = vrot.slane %v3325, %v3338
        %v3340 = vcombine.low %v3131, %v3139
        %v3341 = vcombine.high %v3131, %v3139
        %v3343 = vunpack.c.l.s4 1983009808
        %v3344 = vunpack.c.0.s8 %v3343
        %v3345 = vlaneseq
        %v3346 = vshrl.u32 %v3345, 7
        %v3347 = vsub.s32 %v3344, %v3346
        %v3348 = vrot.slane %v3340, %v3347
        %v3350 = vunpack.c.l.s4 1983009808
        %v3351 = vunpack.c.0.s8 %v3350
        %v3352 = vlaneseq
        %v3353 = vshrl.u32 %v3352, 7
        %v3354 = vsub.s32 %v3351, %v3353
        %v3355 = vrot.slane %v3341, %v3354
        %v3356 = vcombine.low %v3300, %v3316
        %v3357 = vcombine.high %v3300, %v3316
        %v3359 = vunpack.c.l.s4 1934713408
        %v3360 = vunpack.c.0.s8 %v3359
        %v3361 = vlaneseq
        %v3362 = vshrl.u32 %v3361, 7
        %v3363 = vsub.s32 %v3360, %v3362
        %v3364 = vrot.slane %v3356, %v3363
        %v3366 = vunpack.c.l.s4 1934713408
        %v3367 = vunpack.c.0.s8 %v3366
        %v3368 = vlaneseq
        %v3369 = vshrl.u32 %v3368, 7
        %v3370 = vsub.s32 %v3367, %v3369
        %v3371 = vrot.slane %v3357, %v3370
        %v3372 = vcombine.low %v3307, %v3323
        %v3373 = vcombine.high %v3307, %v3323
        %v3375 = vunpack.c.l.s4 1934713408
        %v3376 = vunpack.c.0.s8 %v3375
        %v3377 = vlaneseq
        %v3378 = vshrl.u32 %v3377, 7
        %v3379 = vsub.s32 %v3376, %v3378
        %v3380 = vrot.slane %v3372, %v3379
        %v3382 = vunpack.c.l.s4 1934713408
        %v3383 = vunpack.c.0.s8 %v3382
        %v3384 = vlaneseq
        %v3385 = vshrl.u32 %v3384, 7
        %v3386 = vsub.s32 %v3383, %v3385
        %v3387 = vrot.slane %v3373, %v3386
        %v3388 = vcombine.low %v3332, %v3348
        %v3389 = vcombine.high %v3332, %v3348
        %v3391 = vunpack.c.l.s4 1934713408
        %v3392 = vunpack.c.0.s8 %v3391
        %v3393 = vlaneseq
        %v3394 = vshrl.u32 %v3393, 7
        %v3395 = vsub.s32 %v3392, %v3394
        %v3396 = vrot.slane %v3388, %v3395
        %v3398 = vunpack.c.l.s4 1934713408
        %v3399 = vunpack.c.0.s8 %v3398
        %v3400 = vlaneseq
        %v3401 = vshrl.u32 %v3400, 7
        %v3402 = vsub.s32 %v3399, %v3401
        %v3403 = vrot.slane %v3389, %v3402
        %v3404 = vcombine.low %v3339, %v3355
        %v3405 = vcombine.high %v3339, %v3355
        %v3407 = vunpack.c.l.s4 1934713408
        %v3408 = vunpack.c.0.s8 %v3407
        %v3409 = vlaneseq
        %v3410 = vshrl.u32 %v3409, 7
        %v3411 = vsub.s32 %v3408, %v3410
        %v3412 = vrot.slane %v3404, %v3411
        %v3414 = vunpack.c.l.s4 1934713408
        %v3415 = vunpack.c.0.s8 %v3414
        %v3416 = vlaneseq
        %v3417 = vshrl.u32 %v3416, 7
        %v3418 = vsub.s32 %v3415, %v3417
        %v3419 = vrot.slane %v3405, %v3418
        %v3420 = vcombine.low %v3364, %v3396
        %v3421 = vcombine.high %v3364, %v3396
        %v3422 = vcombine.low %v3371, %v3403
        %v3423 = vcombine.high %v3371, %v3403
        %v3424 = vcombine.low %v3380, %v3412
        %v3425 = vcombine.high %v3380, %v3412
        %v3426 = vcombine.low %v3387, %v3419
        %v3427 = vcombine.high %v3387, %v3419
        %3429 = vrot.lane.b32.xlu0 %v3285, 16
        %v3430 = vpop.permute.xlu0 %3429
        %3433 = vrot.lane.b32.xlu0 %v3286, 32
        %v3434 = vpop.permute.xlu0 %3433
        %3437 = vrot.lane.b32.xlu0 %v3287, 48
        %v3438 = vpop.permute.xlu0 %3437
        %3441 = vrot.lane.b32.xlu0 %v3288, 64
        %v3442 = vpop.permute.xlu0 %3441
        %3445 = vrot.lane.b32.xlu0 %v3289, 80
        %v3446 = vpop.permute.xlu0 %3445
        %3449 = vrot.lane.b32.xlu0 %v3290, 96
        %v3450 = vpop.permute.xlu0 %3449
        %3453 = vrot.lane.b32.xlu0 %v3291, 112
        %v3454 = vpop.permute.xlu0 %3453
        %3457 = vrot.lane.b32.xlu0 %v3421, 16
        %v3458 = vpop.permute.xlu0 %3457
        %3461 = vrot.lane.b32.xlu0 %v3422, 32
        %v3462 = vpop.permute.xlu0 %3461
        %3465 = vrot.lane.b32.xlu0 %v3423, 48
        %v3466 = vpop.permute.xlu0 %3465
        %3469 = vrot.lane.b32.xlu0 %v3424, 64
        %v3470 = vpop.permute.xlu0 %3469
        %3473 = vrot.lane.b32.xlu0 %v3425, 80
        %v3474 = vpop.permute.xlu0 %3473
        %3477 = vrot.lane.b32.xlu0 %v3426, 96
        %v3478 = vpop.permute.xlu0 %3477
        %3481 = vrot.lane.b32.xlu0 %v3427, 112
        %v3482 = vpop.permute.xlu0 %3481
        %v3484 = vsel %vm418, %v3284, %v3430
        %v3485 = vsel %vm434, %v3484, %v3434
        %v3486 = vsel %vm3075, %v3485, %v3438
        %v3487 = vsel %vm3077, %v3486, %v3442
        %v3488 = vsel %vm3079, %v3487, %v3446
        %v3489 = vsel %vm3081, %v3488, %v3450
        %v3490 = vsel %vm3083, %v3489, %v3454
        %v3491 = vsel %vm418, %v3420, %v3458
        %v3492 = vsel %vm434, %v3491, %v3462
        %v3493 = vsel %vm3075, %v3492, %v3466
        %v3494 = vsel %vm3077, %v3493, %v3470
        %v3495 = vsel %vm3079, %v3494, %v3474
        %v3496 = vsel %vm3081, %v3495, %v3478
        %v3497 = vsel %vm3083, %v3496, %v3482
        %3498 = vrot.lane.b32.xlu0 %v2721, 126
        %v3499 = vpop.permute.xlu0 %3498
        %3500 = vrot.lane.b32.xlu0 %v2722, 126
        %v3501 = vpop.permute.xlu0 %3500
        %3502 = vrot.lane.b32.xlu0 %v2724, 126
        %v3503 = vpop.permute.xlu0 %3502
        %3504 = vrot.lane.b32.xlu0 %v2725, 126
        %v3505 = vpop.permute.xlu0 %3504
        %3506 = vrot.lane.b32.xlu0 %v2727, 126
        %v3507 = vpop.permute.xlu0 %3506
        %3508 = vrot.lane.b32.xlu0 %v2728, 126
        %v3509 = vpop.permute.xlu0 %3508
        %3510 = vrot.lane.b32.xlu0 %v2730, 126
        %v3511 = vpop.permute.xlu0 %3510
        %3512 = vrot.lane.b32.xlu0 %v2731, 126
        %v3513 = vpop.permute.xlu0 %3512
        %3514 = vrot.lane.b32.xlu0 %v2733, 126
        %v3515 = vpop.permute.xlu0 %3514
        %3516 = vrot.lane.b32.xlu0 %v2734, 126
        %v3517 = vpop.permute.xlu0 %3516
        %3518 = vrot.lane.b32.xlu0 %v2736, 126
        %v3519 = vpop.permute.xlu0 %3518
        %3520 = vrot.lane.b32.xlu0 %v2737, 126
        %v3521 = vpop.permute.xlu0 %3520
        %3522 = vrot.lane.b32.xlu0 %v2739, 126
        %v3523 = vpop.permute.xlu0 %3522
        %3524 = vrot.lane.b32.xlu0 %v2740, 126
        %v3525 = vpop.permute.xlu0 %3524
        %3526 = vrot.lane.b32.xlu0 %v2742, 126
        %v3527 = vpop.permute.xlu0 %3526
        %3528 = vrot.lane.b32.xlu0 %v2743, 126
        %v3529 = vpop.permute.xlu0 %3528
        %v3546 = vcombine.low %v3499, %v3507
        %v3547 = vcombine.high %v3499, %v3507
        %v3549 = vunpack.c.l.s4 1983009808
        %v3550 = vunpack.c.0.s8 %v3549
        %v3551 = vlaneseq
        %v3552 = vshrl.u32 %v3551, 7
        %v3553 = vsub.s32 %v3550, %v3552
        %v3554 = vrot.slane %v3546, %v3553
        %v3556 = vunpack.c.l.s4 1983009808
        %v3557 = vunpack.c.0.s8 %v3556
        %v3558 = vlaneseq
        %v3559 = vshrl.u32 %v3558, 7
        %v3560 = vsub.s32 %v3557, %v3559
        %v3561 = vrot.slane %v3547, %v3560
        %v3562 = vcombine.low %v3503, %v3511
        %v3563 = vcombine.high %v3503, %v3511
        %v3565 = vunpack.c.l.s4 1983009808
        %v3566 = vunpack.c.0.s8 %v3565
        %v3567 = vlaneseq
        %v3568 = vshrl.u32 %v3567, 7
        %v3569 = vsub.s32 %v3566, %v3568
        %v3570 = vrot.slane %v3562, %v3569
        %v3572 = vunpack.c.l.s4 1983009808
        %v3573 = vunpack.c.0.s8 %v3572
        %v3574 = vlaneseq
        %v3575 = vshrl.u32 %v3574, 7
        %v3576 = vsub.s32 %v3573, %v3575
        %v3577 = vrot.slane %v3563, %v3576
        %v3578 = vcombine.low %v3515, %v3523
        %v3579 = vcombine.high %v3515, %v3523
        %v3581 = vunpack.c.l.s4 1983009808
        %v3582 = vunpack.c.0.s8 %v3581
        %v3583 = vlaneseq
        %v3584 = vshrl.u32 %v3583, 7
        %v3585 = vsub.s32 %v3582, %v3584
        %v3586 = vrot.slane %v3578, %v3585
        %v3588 = vunpack.c.l.s4 1983009808
        %v3589 = vunpack.c.0.s8 %v3588
        %v3590 = vlaneseq
        %v3591 = vshrl.u32 %v3590, 7
        %v3592 = vsub.s32 %v3589, %v3591
        %v3593 = vrot.slane %v3579, %v3592
        %v3594 = vcombine.low %v3519, %v3527
        %v3595 = vcombine.high %v3519, %v3527
        %v3597 = vunpack.c.l.s4 1983009808
        %v3598 = vunpack.c.0.s8 %v3597
        %v3599 = vlaneseq
        %v3600 = vshrl.u32 %v3599, 7
        %v3601 = vsub.s32 %v3598, %v3600
        %v3602 = vrot.slane %v3594, %v3601
        %v3604 = vunpack.c.l.s4 1983009808
        %v3605 = vunpack.c.0.s8 %v3604
        %v3606 = vlaneseq
        %v3607 = vshrl.u32 %v3606, 7
        %v3608 = vsub.s32 %v3605, %v3607
        %v3609 = vrot.slane %v3595, %v3608
        %v3610 = vcombine.low %v3554, %v3570
        %v3611 = vcombine.high %v3554, %v3570
        %v3613 = vunpack.c.l.s4 1934713408
        %v3614 = vunpack.c.0.s8 %v3613
        %v3615 = vlaneseq
        %v3616 = vshrl.u32 %v3615, 7
        %v3617 = vsub.s32 %v3614, %v3616
        %v3618 = vrot.slane %v3610, %v3617
        %v3620 = vunpack.c.l.s4 1934713408
        %v3621 = vunpack.c.0.s8 %v3620
        %v3622 = vlaneseq
        %v3623 = vshrl.u32 %v3622, 7
        %v3624 = vsub.s32 %v3621, %v3623
        %v3625 = vrot.slane %v3611, %v3624
        %v3626 = vcombine.low %v3561, %v3577
        %v3627 = vcombine.high %v3561, %v3577
        %v3629 = vunpack.c.l.s4 1934713408
        %v3630 = vunpack.c.0.s8 %v3629
        %v3631 = vlaneseq
        %v3632 = vshrl.u32 %v3631, 7
        %v3633 = vsub.s32 %v3630, %v3632
        %v3634 = vrot.slane %v3626, %v3633
        %v3636 = vunpack.c.l.s4 1934713408
        %v3637 = vunpack.c.0.s8 %v3636
        %v3638 = vlaneseq
        %v3639 = vshrl.u32 %v3638, 7
        %v3640 = vsub.s32 %v3637, %v3639
        %v3641 = vrot.slane %v3627, %v3640
        %v3642 = vcombine.low %v3586, %v3602
        %v3643 = vcombine.high %v3586, %v3602
        %v3645 = vunpack.c.l.s4 1934713408
        %v3646 = vunpack.c.0.s8 %v3645
        %v3647 = vlaneseq
        %v3648 = vshrl.u32 %v3647, 7
        %v3649 = vsub.s32 %v3646, %v3648
        %v3650 = vrot.slane %v3642, %v3649
        %v3652 = vunpack.c.l.s4 1934713408
        %v3653 = vunpack.c.0.s8 %v3652
        %v3654 = vlaneseq
        %v3655 = vshrl.u32 %v3654, 7
        %v3656 = vsub.s32 %v3653, %v3655
        %v3657 = vrot.slane %v3643, %v3656
        %v3658 = vcombine.low %v3593, %v3609
        %v3659 = vcombine.high %v3593, %v3609
        %v3661 = vunpack.c.l.s4 1934713408
        %v3662 = vunpack.c.0.s8 %v3661
        %v3663 = vlaneseq
        %v3664 = vshrl.u32 %v3663, 7
        %v3665 = vsub.s32 %v3662, %v3664
        %v3666 = vrot.slane %v3658, %v3665
        %v3668 = vunpack.c.l.s4 1934713408
        %v3669 = vunpack.c.0.s8 %v3668
        %v3670 = vlaneseq
        %v3671 = vshrl.u32 %v3670, 7
        %v3672 = vsub.s32 %v3669, %v3671
        %v3673 = vrot.slane %v3659, %v3672
        %v3674 = vcombine.low %v3618, %v3650
        %v3675 = vcombine.high %v3618, %v3650
        %v3676 = vcombine.low %v3625, %v3657
        %v3677 = vcombine.high %v3625, %v3657
        %v3678 = vcombine.low %v3634, %v3666
        %v3679 = vcombine.high %v3634, %v3666
        %v3680 = vcombine.low %v3641, %v3673
        %v3681 = vcombine.high %v3641, %v3673
        %v3682 = vcombine.low %v3501, %v3509
        %v3683 = vcombine.high %v3501, %v3509
        %v3685 = vunpack.c.l.s4 1983009808
        %v3686 = vunpack.c.0.s8 %v3685
        %v3687 = vlaneseq
        %v3688 = vshrl.u32 %v3687, 7
        %v3689 = vsub.s32 %v3686, %v3688
        %v3690 = vrot.slane %v3682, %v3689
        %v3692 = vunpack.c.l.s4 1983009808
        %v3693 = vunpack.c.0.s8 %v3692
        %v3694 = vlaneseq
        %v3695 = vshrl.u32 %v3694, 7
        %v3696 = vsub.s32 %v3693, %v3695
        %v3697 = vrot.slane %v3683, %v3696
        %v3698 = vcombine.low %v3505, %v3513
        %v3699 = vcombine.high %v3505, %v3513
        %v3701 = vunpack.c.l.s4 1983009808
        %v3702 = vunpack.c.0.s8 %v3701
        %v3703 = vlaneseq
        %v3704 = vshrl.u32 %v3703, 7
        %v3705 = vsub.s32 %v3702, %v3704
        %v3706 = vrot.slane %v3698, %v3705
        %v3708 = vunpack.c.l.s4 1983009808
        %v3709 = vunpack.c.0.s8 %v3708
        %v3710 = vlaneseq
        %v3711 = vshrl.u32 %v3710, 7
        %v3712 = vsub.s32 %v3709, %v3711
        %v3713 = vrot.slane %v3699, %v3712
        %v3714 = vcombine.low %v3517, %v3525
        %v3715 = vcombine.high %v3517, %v3525
        %v3717 = vunpack.c.l.s4 1983009808
        %v3718 = vunpack.c.0.s8 %v3717
        %v3719 = vlaneseq
        %v3720 = vshrl.u32 %v3719, 7
        %v3721 = vsub.s32 %v3718, %v3720
        %v3722 = vrot.slane %v3714, %v3721
        %v3724 = vunpack.c.l.s4 1983009808
        %v3725 = vunpack.c.0.s8 %v3724
        %v3726 = vlaneseq
        %v3727 = vshrl.u32 %v3726, 7
        %v3728 = vsub.s32 %v3725, %v3727
        %v3729 = vrot.slane %v3715, %v3728
        %v3730 = vcombine.low %v3521, %v3529
        %v3731 = vcombine.high %v3521, %v3529
        %v3733 = vunpack.c.l.s4 1983009808
        %v3734 = vunpack.c.0.s8 %v3733
        %v3735 = vlaneseq
        %v3736 = vshrl.u32 %v3735, 7
        %v3737 = vsub.s32 %v3734, %v3736
        %v3738 = vrot.slane %v3730, %v3737
        %v3740 = vunpack.c.l.s4 1983009808
        %v3741 = vunpack.c.0.s8 %v3740
        %v3742 = vlaneseq
        %v3743 = vshrl.u32 %v3742, 7
        %v3744 = vsub.s32 %v3741, %v3743
        %v3745 = vrot.slane %v3731, %v3744
        %v3746 = vcombine.low %v3690, %v3706
        %v3747 = vcombine.high %v3690, %v3706
        %v3749 = vunpack.c.l.s4 1934713408
        %v3750 = vunpack.c.0.s8 %v3749
        %v3751 = vlaneseq
        %v3752 = vshrl.u32 %v3751, 7
        %v3753 = vsub.s32 %v3750, %v3752
        %v3754 = vrot.slane %v3746, %v3753
        %v3756 = vunpack.c.l.s4 1934713408
        %v3757 = vunpack.c.0.s8 %v3756
        %v3758 = vlaneseq
        %v3759 = vshrl.u32 %v3758, 7
        %v3760 = vsub.s32 %v3757, %v3759
        %v3761 = vrot.slane %v3747, %v3760
        %v3762 = vcombine.low %v3697, %v3713
        %v3763 = vcombine.high %v3697, %v3713
        %v3765 = vunpack.c.l.s4 1934713408
        %v3766 = vunpack.c.0.s8 %v3765
        %v3767 = vlaneseq
        %v3768 = vshrl.u32 %v3767, 7
        %v3769 = vsub.s32 %v3766, %v3768
        %v3770 = vrot.slane %v3762, %v3769
        %v3772 = vunpack.c.l.s4 1934713408
        %v3773 = vunpack.c.0.s8 %v3772
        %v3774 = vlaneseq
        %v3775 = vshrl.u32 %v3774, 7
        %v3776 = vsub.s32 %v3773, %v3775
        %v3777 = vrot.slane %v3763, %v3776
        %v3778 = vcombine.low %v3722, %v3738
        %v3779 = vcombine.high %v3722, %v3738
        %v3781 = vunpack.c.l.s4 1934713408
        %v3782 = vunpack.c.0.s8 %v3781
        %v3783 = vlaneseq
        %v3784 = vshrl.u32 %v3783, 7
        %v3785 = vsub.s32 %v3782, %v3784
        %v3786 = vrot.slane %v3778, %v3785
        %v3788 = vunpack.c.l.s4 1934713408
        %v3789 = vunpack.c.0.s8 %v3788
        %v3790 = vlaneseq
        %v3791 = vshrl.u32 %v3790, 7
        %v3792 = vsub.s32 %v3789, %v3791
        %v3793 = vrot.slane %v3779, %v3792
        %v3794 = vcombine.low %v3729, %v3745
        %v3795 = vcombine.high %v3729, %v3745
        %v3797 = vunpack.c.l.s4 1934713408
        %v3798 = vunpack.c.0.s8 %v3797
        %v3799 = vlaneseq
        %v3800 = vshrl.u32 %v3799, 7
        %v3801 = vsub.s32 %v3798, %v3800
        %v3802 = vrot.slane %v3794, %v3801
        %v3804 = vunpack.c.l.s4 1934713408
        %v3805 = vunpack.c.0.s8 %v3804
        %v3806 = vlaneseq
        %v3807 = vshrl.u32 %v3806, 7
        %v3808 = vsub.s32 %v3805, %v3807
        %v3809 = vrot.slane %v3795, %v3808
        %v3810 = vcombine.low %v3754, %v3786
        %v3811 = vcombine.high %v3754, %v3786
        %v3812 = vcombine.low %v3761, %v3793
        %v3813 = vcombine.high %v3761, %v3793
        %v3814 = vcombine.low %v3770, %v3802
        %v3815 = vcombine.high %v3770, %v3802
        %v3816 = vcombine.low %v3777, %v3809
        %v3817 = vcombine.high %v3777, %v3809
        %3819 = vrot.lane.b32.xlu0 %v3675, 16
        %v3820 = vpop.permute.xlu0 %3819
        %3823 = vrot.lane.b32.xlu0 %v3676, 32
        %v3824 = vpop.permute.xlu0 %3823
        %3827 = vrot.lane.b32.xlu0 %v3677, 48
        %v3828 = vpop.permute.xlu0 %3827
        %3831 = vrot.lane.b32.xlu0 %v3678, 64
        %v3832 = vpop.permute.xlu0 %3831
        %3835 = vrot.lane.b32.xlu0 %v3679, 80
        %v3836 = vpop.permute.xlu0 %3835
        %3839 = vrot.lane.b32.xlu0 %v3680, 96
        %v3840 = vpop.permute.xlu0 %3839
        %3843 = vrot.lane.b32.xlu0 %v3681, 112
        %v3844 = vpop.permute.xlu0 %3843
        %3847 = vrot.lane.b32.xlu0 %v3811, 16
        %v3848 = vpop.permute.xlu0 %3847
        %3851 = vrot.lane.b32.xlu0 %v3812, 32
        %v3852 = vpop.permute.xlu0 %3851
        %3855 = vrot.lane.b32.xlu0 %v3813, 48
        %v3856 = vpop.permute.xlu0 %3855
        %3859 = vrot.lane.b32.xlu0 %v3814, 64
        %v3860 = vpop.permute.xlu0 %3859
        %3863 = vrot.lane.b32.xlu0 %v3815, 80
        %v3864 = vpop.permute.xlu0 %3863
        %3867 = vrot.lane.b32.xlu0 %v3816, 96
        %v3868 = vpop.permute.xlu0 %3867
        %3871 = vrot.lane.b32.xlu0 %v3817, 112
        %v3872 = vpop.permute.xlu0 %3871
        %v3874 = vsel %vm418, %v3674, %v3820
        %v3875 = vsel %vm434, %v3874, %v3824
        %v3876 = vsel %vm3075, %v3875, %v3828
        %v3877 = vsel %vm3077, %v3876, %v3832
        %v3878 = vsel %vm3079, %v3877, %v3836
        %v3879 = vsel %vm3081, %v3878, %v3840
        %v3880 = vsel %vm3083, %v3879, %v3844
        %v3881 = vsel %vm418, %v3810, %v3848
        %v3882 = vsel %vm434, %v3881, %v3852
        %v3883 = vsel %vm3075, %v3882, %v3856
        %v3884 = vsel %vm3077, %v3883, %v3860
        %v3885 = vsel %vm3079, %v3884, %v3864
        %v3886 = vsel %vm3081, %v3885, %v3868
        %v3887 = vsel %vm3083, %v3886, %v3872
        %v3896 = vrot.slane %v2721, 1
        %v3897 = vrot.slane %v2722, 1
        %v3898 = vsel %vm841, %v3896, %v3897
        %v3899 = vrot.slane %v2723, 1
        %v3900 = vsel %vm841, %v3897, %v3899
        %v3901 = vrot.slane %v2724, 1
        %v3902 = vrot.slane %v2725, 1
        %v3903 = vsel %vm841, %v3901, %v3902
        %v3904 = vrot.slane %v2726, 1
        %v3905 = vsel %vm841, %v3902, %v3904
        %v3906 = vrot.slane %v2727, 1
        %v3907 = vrot.slane %v2728, 1
        %v3908 = vsel %vm841, %v3906, %v3907
        %v3909 = vrot.slane %v2729, 1
        %v3910 = vsel %vm841, %v3907, %v3909
        %v3911 = vrot.slane %v2730, 1
        %v3912 = vrot.slane %v2731, 1
        %v3913 = vsel %vm841, %v3911, %v3912
        %v3914 = vrot.slane %v2732, 1
        %v3915 = vsel %vm841, %v3912, %v3914
        %v3916 = vrot.slane %v2733, 1
        %v3917 = vrot.slane %v2734, 1
        %v3918 = vsel %vm841, %v3916, %v3917
        %v3919 = vrot.slane %v2735, 1
        %v3920 = vsel %vm841, %v3917, %v3919
        %v3921 = vrot.slane %v2736, 1
        %v3922 = vrot.slane %v2737, 1
        %v3923 = vsel %vm841, %v3921, %v3922
        %v3924 = vrot.slane %v2738, 1
        %v3925 = vsel %vm841, %v3922, %v3924
        %v3926 = vrot.slane %v2739, 1
        %v3927 = vrot.slane %v2740, 1
        %v3928 = vsel %vm841, %v3926, %v3927
        %v3929 = vrot.slane %v2741, 1
        %v3930 = vsel %vm841, %v3927, %v3929
        %v3931 = vrot.slane %v2742, 1
        %v3932 = vrot.slane %v2743, 1
        %v3933 = vsel %vm841, %v3931, %v3932
        %v3934 = vrot.slane %v2744, 1
        %v3935 = vsel %vm841, %v3932, %v3934
        %v3952 = vcombine.low %v3898, %v3908
        %v3953 = vcombine.high %v3898, %v3908
        %v3955 = vunpack.c.l.s4 1983009808
        %v3956 = vunpack.c.0.s8 %v3955
        %v3957 = vlaneseq
        %v3958 = vshrl.u32 %v3957, 7
        %v3959 = vsub.s32 %v3956, %v3958
        %v3960 = vrot.slane %v3952, %v3959
        %v3962 = vunpack.c.l.s4 1983009808
        %v3963 = vunpack.c.0.s8 %v3962
        %v3964 = vlaneseq
        %v3965 = vshrl.u32 %v3964, 7
        %v3966 = vsub.s32 %v3963, %v3965
        %v3967 = vrot.slane %v3953, %v3966
        %v3968 = vcombine.low %v3903, %v3913
        %v3969 = vcombine.high %v3903, %v3913
        %v3971 = vunpack.c.l.s4 1983009808
        %v3972 = vunpack.c.0.s8 %v3971
        %v3973 = vlaneseq
        %v3974 = vshrl.u32 %v3973, 7
        %v3975 = vsub.s32 %v3972, %v3974
        %v3976 = vrot.slane %v3968, %v3975
        %v3978 = vunpack.c.l.s4 1983009808
        %v3979 = vunpack.c.0.s8 %v3978
        %v3980 = vlaneseq
        %v3981 = vshrl.u32 %v3980, 7
        %v3982 = vsub.s32 %v3979, %v3981
        %v3983 = vrot.slane %v3969, %v3982
        %v3984 = vcombine.low %v3918, %v3928
        %v3985 = vcombine.high %v3918, %v3928
        %v3987 = vunpack.c.l.s4 1983009808
        %v3988 = vunpack.c.0.s8 %v3987
        %v3989 = vlaneseq
        %v3990 = vshrl.u32 %v3989, 7
        %v3991 = vsub.s32 %v3988, %v3990
        %v3992 = vrot.slane %v3984, %v3991
        %v3994 = vunpack.c.l.s4 1983009808
        %v3995 = vunpack.c.0.s8 %v3994
        %v3996 = vlaneseq
        %v3997 = vshrl.u32 %v3996, 7
        %v3998 = vsub.s32 %v3995, %v3997
        %v3999 = vrot.slane %v3985, %v3998
        %v4000 = vcombine.low %v3923, %v3933
        %v4001 = vcombine.high %v3923, %v3933
        %v4003 = vunpack.c.l.s4 1983009808
        %v4004 = vunpack.c.0.s8 %v4003
        %v4005 = vlaneseq
        %v4006 = vshrl.u32 %v4005, 7
        %v4007 = vsub.s32 %v4004, %v4006
        %v4008 = vrot.slane %v4000, %v4007
        %v4010 = vunpack.c.l.s4 1983009808
        %v4011 = vunpack.c.0.s8 %v4010
        %v4012 = vlaneseq
        %v4013 = vshrl.u32 %v4012, 7
        %v4014 = vsub.s32 %v4011, %v4013
        %v4015 = vrot.slane %v4001, %v4014
        %v4016 = vcombine.low %v3960, %v3976
        %v4017 = vcombine.high %v3960, %v3976
        %v4019 = vunpack.c.l.s4 1934713408
        %v4020 = vunpack.c.0.s8 %v4019
        %v4021 = vlaneseq
        %v4022 = vshrl.u32 %v4021, 7
        %v4023 = vsub.s32 %v4020, %v4022
        %v4024 = vrot.slane %v4016, %v4023
        %v4026 = vunpack.c.l.s4 1934713408
        %v4027 = vunpack.c.0.s8 %v4026
        %v4028 = vlaneseq
        %v4029 = vshrl.u32 %v4028, 7
        %v4030 = vsub.s32 %v4027, %v4029
        %v4031 = vrot.slane %v4017, %v4030
        %v4032 = vcombine.low %v3967, %v3983
        %v4033 = vcombine.high %v3967, %v3983
        %v4035 = vunpack.c.l.s4 1934713408
        %v4036 = vunpack.c.0.s8 %v4035
        %v4037 = vlaneseq
        %v4038 = vshrl.u32 %v4037, 7
        %v4039 = vsub.s32 %v4036, %v4038
        %v4040 = vrot.slane %v4032, %v4039
        %v4042 = vunpack.c.l.s4 1934713408
        %v4043 = vunpack.c.0.s8 %v4042
        %v4044 = vlaneseq
        %v4045 = vshrl.u32 %v4044, 7
        %v4046 = vsub.s32 %v4043, %v4045
        %v4047 = vrot.slane %v4033, %v4046
        %v4048 = vcombine.low %v3992, %v4008
        %v4049 = vcombine.high %v3992, %v4008
        %v4051 = vunpack.c.l.s4 1934713408
        %v4052 = vunpack.c.0.s8 %v4051
        %v4053 = vlaneseq
        %v4054 = vshrl.u32 %v4053, 7
        %v4055 = vsub.s32 %v4052, %v4054
        %v4056 = vrot.slane %v4048, %v4055
        %v4058 = vunpack.c.l.s4 1934713408
        %v4059 = vunpack.c.0.s8 %v4058
        %v4060 = vlaneseq
        %v4061 = vshrl.u32 %v4060, 7
        %v4062 = vsub.s32 %v4059, %v4061
        %v4063 = vrot.slane %v4049, %v4062
        %v4064 = vcombine.low %v3999, %v4015
        %v4065 = vcombine.high %v3999, %v4015
        %v4067 = vunpack.c.l.s4 1934713408
        %v4068 = vunpack.c.0.s8 %v4067
        %v4069 = vlaneseq
        %v4070 = vshrl.u32 %v4069, 7
        %v4071 = vsub.s32 %v4068, %v4070
        %v4072 = vrot.slane %v4064, %v4071
        %v4074 = vunpack.c.l.s4 1934713408
        %v4075 = vunpack.c.0.s8 %v4074
        %v4076 = vlaneseq
        %v4077 = vshrl.u32 %v4076, 7
        %v4078 = vsub.s32 %v4075, %v4077
        %v4079 = vrot.slane %v4065, %v4078
        %v4080 = vcombine.low %v4024, %v4056
        %v4081 = vcombine.high %v4024, %v4056
        %v4082 = vcombine.low %v4031, %v4063
        %v4083 = vcombine.high %v4031, %v4063
        %v4084 = vcombine.low %v4040, %v4072
        %v4085 = vcombine.high %v4040, %v4072
        %v4086 = vcombine.low %v4047, %v4079
        %v4087 = vcombine.high %v4047, %v4079
        %v4088 = vcombine.low %v3900, %v3910
        %v4089 = vcombine.high %v3900, %v3910
        %v4091 = vunpack.c.l.s4 1983009808
        %v4092 = vunpack.c.0.s8 %v4091
        %v4093 = vlaneseq
        %v4094 = vshrl.u32 %v4093, 7
        %v4095 = vsub.s32 %v4092, %v4094
        %v4096 = vrot.slane %v4088, %v4095
        %v4098 = vunpack.c.l.s4 1983009808
        %v4099 = vunpack.c.0.s8 %v4098
        %v4100 = vlaneseq
        %v4101 = vshrl.u32 %v4100, 7
        %v4102 = vsub.s32 %v4099, %v4101
        %v4103 = vrot.slane %v4089, %v4102
        %v4104 = vcombine.low %v3905, %v3915
        %v4105 = vcombine.high %v3905, %v3915
        %v4107 = vunpack.c.l.s4 1983009808
        %v4108 = vunpack.c.0.s8 %v4107
        %v4109 = vlaneseq
        %v4110 = vshrl.u32 %v4109, 7
        %v4111 = vsub.s32 %v4108, %v4110
        %v4112 = vrot.slane %v4104, %v4111
        %v4114 = vunpack.c.l.s4 1983009808
        %v4115 = vunpack.c.0.s8 %v4114
        %v4116 = vlaneseq
        %v4117 = vshrl.u32 %v4116, 7
        %v4118 = vsub.s32 %v4115, %v4117
        %v4119 = vrot.slane %v4105, %v4118
        %v4120 = vcombine.low %v3920, %v3930
        %v4121 = vcombine.high %v3920, %v3930
        %v4123 = vunpack.c.l.s4 1983009808
        %v4124 = vunpack.c.0.s8 %v4123
        %v4125 = vlaneseq
        %v4126 = vshrl.u32 %v4125, 7
        %v4127 = vsub.s32 %v4124, %v4126
        %v4128 = vrot.slane %v4120, %v4127
        %v4130 = vunpack.c.l.s4 1983009808
        %v4131 = vunpack.c.0.s8 %v4130
        %v4132 = vlaneseq
        %v4133 = vshrl.u32 %v4132, 7
        %v4134 = vsub.s32 %v4131, %v4133
        %v4135 = vrot.slane %v4121, %v4134
        %v4136 = vcombine.low %v3925, %v3935
        %v4137 = vcombine.high %v3925, %v3935
        %v4139 = vunpack.c.l.s4 1983009808
        %v4140 = vunpack.c.0.s8 %v4139
        %v4141 = vlaneseq
        %v4142 = vshrl.u32 %v4141, 7
        %v4143 = vsub.s32 %v4140, %v4142
        %v4144 = vrot.slane %v4136, %v4143
        %v4146 = vunpack.c.l.s4 1983009808
        %v4147 = vunpack.c.0.s8 %v4146
        %v4148 = vlaneseq
        %v4149 = vshrl.u32 %v4148, 7
        %v4150 = vsub.s32 %v4147, %v4149
        %v4151 = vrot.slane %v4137, %v4150
        %v4152 = vcombine.low %v4096, %v4112
        %v4153 = vcombine.high %v4096, %v4112
        %v4155 = vunpack.c.l.s4 1934713408
        %v4156 = vunpack.c.0.s8 %v4155
        %v4157 = vlaneseq
        %v4158 = vshrl.u32 %v4157, 7
        %v4159 = vsub.s32 %v4156, %v4158
        %v4160 = vrot.slane %v4152, %v4159
        %v4162 = vunpack.c.l.s4 1934713408
        %v4163 = vunpack.c.0.s8 %v4162
        %v4164 = vlaneseq
        %v4165 = vshrl.u32 %v4164, 7
        %v4166 = vsub.s32 %v4163, %v4165
        %v4167 = vrot.slane %v4153, %v4166
        %v4168 = vcombine.low %v4103, %v4119
        %v4169 = vcombine.high %v4103, %v4119
        %v4171 = vunpack.c.l.s4 1934713408
        %v4172 = vunpack.c.0.s8 %v4171
        %v4173 = vlaneseq
        %v4174 = vshrl.u32 %v4173, 7
        %v4175 = vsub.s32 %v4172, %v4174
        %v4176 = vrot.slane %v4168, %v4175
        %v4178 = vunpack.c.l.s4 1934713408
        %v4179 = vunpack.c.0.s8 %v4178
        %v4180 = vlaneseq
        %v4181 = vshrl.u32 %v4180, 7
        %v4182 = vsub.s32 %v4179, %v4181
        %v4183 = vrot.slane %v4169, %v4182
        %v4184 = vcombine.low %v4128, %v4144
        %v4185 = vcombine.high %v4128, %v4144
        %v4187 = vunpack.c.l.s4 1934713408
        %v4188 = vunpack.c.0.s8 %v4187
        %v4189 = vlaneseq
        %v4190 = vshrl.u32 %v4189, 7
        %v4191 = vsub.s32 %v4188, %v4190
        %v4192 = vrot.slane %v4184, %v4191
        %v4194 = vunpack.c.l.s4 1934713408
        %v4195 = vunpack.c.0.s8 %v4194
        %v4196 = vlaneseq
        %v4197 = vshrl.u32 %v4196, 7
        %v4198 = vsub.s32 %v4195, %v4197
        %v4199 = vrot.slane %v4185, %v4198
        %v4200 = vcombine.low %v4135, %v4151
        %v4201 = vcombine.high %v4135, %v4151
        %v4203 = vunpack.c.l.s4 1934713408
        %v4204 = vunpack.c.0.s8 %v4203
        %v4205 = vlaneseq
        %v4206 = vshrl.u32 %v4205, 7
        %v4207 = vsub.s32 %v4204, %v4206
        %v4208 = vrot.slane %v4200, %v4207
        %v4210 = vunpack.c.l.s4 1934713408
        %v4211 = vunpack.c.0.s8 %v4210
        %v4212 = vlaneseq
        %v4213 = vshrl.u32 %v4212, 7
        %v4214 = vsub.s32 %v4211, %v4213
        %v4215 = vrot.slane %v4201, %v4214
        %v4216 = vcombine.low %v4160, %v4192
        %v4217 = vcombine.high %v4160, %v4192
        %v4218 = vcombine.low %v4167, %v4199
        %v4219 = vcombine.high %v4167, %v4199
        %v4220 = vcombine.low %v4176, %v4208
        %v4221 = vcombine.high %v4176, %v4208
        %v4222 = vcombine.low %v4183, %v4215
        %v4223 = vcombine.high %v4183, %v4215
        %4225 = vrot.lane.b32.xlu0 %v4081, 16
        %v4226 = vpop.permute.xlu0 %4225
        %4229 = vrot.lane.b32.xlu0 %v4082, 32
        %v4230 = vpop.permute.xlu0 %4229
        %4233 = vrot.lane.b32.xlu0 %v4083, 48
        %v4234 = vpop.permute.xlu0 %4233
        %4237 = vrot.lane.b32.xlu0 %v4084, 64
        %v4238 = vpop.permute.xlu0 %4237
        %4241 = vrot.lane.b32.xlu0 %v4085, 80
        %v4242 = vpop.permute.xlu0 %4241
        %4245 = vrot.lane.b32.xlu0 %v4086, 96
        %v4246 = vpop.permute.xlu0 %4245
        %4249 = vrot.lane.b32.xlu0 %v4087, 112
        %v4250 = vpop.permute.xlu0 %4249
        %4253 = vrot.lane.b32.xlu0 %v4217, 16
        %v4254 = vpop.permute.xlu0 %4253
        %4257 = vrot.lane.b32.xlu0 %v4218, 32
        %v4258 = vpop.permute.xlu0 %4257
        %4261 = vrot.lane.b32.xlu0 %v4219, 48
        %v4262 = vpop.permute.xlu0 %4261
        %4265 = vrot.lane.b32.xlu0 %v4220, 64
        %v4266 = vpop.permute.xlu0 %4265
        %4269 = vrot.lane.b32.xlu0 %v4221, 80
        %v4270 = vpop.permute.xlu0 %4269
        %4273 = vrot.lane.b32.xlu0 %v4222, 96
        %v4274 = vpop.permute.xlu0 %4273
        %4277 = vrot.lane.b32.xlu0 %v4223, 112
        %v4278 = vpop.permute.xlu0 %4277
        %v4280 = vsel %vm418, %v4080, %v4226
        %v4281 = vsel %vm434, %v4280, %v4230
        %v4282 = vsel %vm3075, %v4281, %v4234
        %v4283 = vsel %vm3077, %v4282, %v4238
        %v4284 = vsel %vm3079, %v4283, %v4242
        %v4285 = vsel %vm3081, %v4284, %v4246
        %v4286 = vsel %vm3083, %v4285, %v4250
        %v4287 = vsel %vm418, %v4216, %v4254
        %v4288 = vsel %vm434, %v4287, %v4258
        %v4289 = vsel %vm3075, %v4288, %v4262
        %v4290 = vsel %vm3077, %v4289, %v4266
        %v4291 = vsel %vm3079, %v4290, %v4270
        %v4292 = vsel %vm3081, %v4291, %v4274
        %v4293 = vsel %vm3083, %v4292, %v4278
        %4294 = vrot.lane.b32.xlu0 %v3898, 127
        %v4295 = vpop.permute.xlu0 %4294
        %4296 = vrot.lane.b32.xlu0 %v3900, 127
        %v4297 = vpop.permute.xlu0 %4296
        %4298 = vrot.lane.b32.xlu0 %v3903, 127
        %v4299 = vpop.permute.xlu0 %4298
        %4300 = vrot.lane.b32.xlu0 %v3905, 127
        %v4301 = vpop.permute.xlu0 %4300
        %4302 = vrot.lane.b32.xlu0 %v3908, 127
        %v4303 = vpop.permute.xlu0 %4302
        %4304 = vrot.lane.b32.xlu0 %v3910, 127
        %v4305 = vpop.permute.xlu0 %4304
        %4306 = vrot.lane.b32.xlu0 %v3913, 127
        %v4307 = vpop.permute.xlu0 %4306
        %4308 = vrot.lane.b32.xlu0 %v3915, 127
        %v4309 = vpop.permute.xlu0 %4308
        %4310 = vrot.lane.b32.xlu0 %v3918, 127
        %v4311 = vpop.permute.xlu0 %4310
        %4312 = vrot.lane.b32.xlu0 %v3920, 127
        %v4313 = vpop.permute.xlu0 %4312
        %4314 = vrot.lane.b32.xlu0 %v3923, 127
        %v4315 = vpop.permute.xlu0 %4314
        %4316 = vrot.lane.b32.xlu0 %v3925, 127
        %v4317 = vpop.permute.xlu0 %4316
        %4318 = vrot.lane.b32.xlu0 %v3928, 127
        %v4319 = vpop.permute.xlu0 %4318
        %4320 = vrot.lane.b32.xlu0 %v3930, 127
        %v4321 = vpop.permute.xlu0 %4320
        %4322 = vrot.lane.b32.xlu0 %v3933, 127
        %v4323 = vpop.permute.xlu0 %4322
        %4324 = vrot.lane.b32.xlu0 %v3935, 127
        %v4325 = vpop.permute.xlu0 %4324
        %v4342 = vcombine.low %v4295, %v4303
        %v4343 = vcombine.high %v4295, %v4303
        %v4345 = vunpack.c.l.s4 1983009808
        %v4346 = vunpack.c.0.s8 %v4345
        %v4347 = vlaneseq
        %v4348 = vshrl.u32 %v4347, 7
        %v4349 = vsub.s32 %v4346, %v4348
        %v4350 = vrot.slane %v4342, %v4349
        %v4352 = vunpack.c.l.s4 1983009808
        %v4353 = vunpack.c.0.s8 %v4352
        %v4354 = vlaneseq
        %v4355 = vshrl.u32 %v4354, 7
        %v4356 = vsub.s32 %v4353, %v4355
        %v4357 = vrot.slane %v4343, %v4356
        %v4358 = vcombine.low %v4299, %v4307
        %v4359 = vcombine.high %v4299, %v4307
        %v4361 = vunpack.c.l.s4 1983009808
        %v4362 = vunpack.c.0.s8 %v4361
        %v4363 = vlaneseq
        %v4364 = vshrl.u32 %v4363, 7
        %v4365 = vsub.s32 %v4362, %v4364
        %v4366 = vrot.slane %v4358, %v4365
        %v4368 = vunpack.c.l.s4 1983009808
        %v4369 = vunpack.c.0.s8 %v4368
        %v4370 = vlaneseq
        %v4371 = vshrl.u32 %v4370, 7
        %v4372 = vsub.s32 %v4369, %v4371
        %v4373 = vrot.slane %v4359, %v4372
        %v4374 = vcombine.low %v4311, %v4319
        %v4375 = vcombine.high %v4311, %v4319
        %v4377 = vunpack.c.l.s4 1983009808
        %v4378 = vunpack.c.0.s8 %v4377
        %v4379 = vlaneseq
        %v4380 = vshrl.u32 %v4379, 7
        %v4381 = vsub.s32 %v4378, %v4380
        %v4382 = vrot.slane %v4374, %v4381
        %v4384 = vunpack.c.l.s4 1983009808
        %v4385 = vunpack.c.0.s8 %v4384
        %v4386 = vlaneseq
        %v4387 = vshrl.u32 %v4386, 7
        %v4388 = vsub.s32 %v4385, %v4387
        %v4389 = vrot.slane %v4375, %v4388
        %v4390 = vcombine.low %v4315, %v4323
        %v4391 = vcombine.high %v4315, %v4323
        %v4393 = vunpack.c.l.s4 1983009808
        %v4394 = vunpack.c.0.s8 %v4393
        %v4395 = vlaneseq
        %v4396 = vshrl.u32 %v4395, 7
        %v4397 = vsub.s32 %v4394, %v4396
        %v4398 = vrot.slane %v4390, %v4397
        %v4400 = vunpack.c.l.s4 1983009808
        %v4401 = vunpack.c.0.s8 %v4400
        %v4402 = vlaneseq
        %v4403 = vshrl.u32 %v4402, 7
        %v4404 = vsub.s32 %v4401, %v4403
        %v4405 = vrot.slane %v4391, %v4404
        %v4406 = vcombine.low %v4350, %v4366
        %v4407 = vcombine.high %v4350, %v4366
        %v4409 = vunpack.c.l.s4 1934713408
        %v4410 = vunpack.c.0.s8 %v4409
        %v4411 = vlaneseq
        %v4412 = vshrl.u32 %v4411, 7
        %v4413 = vsub.s32 %v4410, %v4412
        %v4414 = vrot.slane %v4406, %v4413
        %v4416 = vunpack.c.l.s4 1934713408
        %v4417 = vunpack.c.0.s8 %v4416
        %v4418 = vlaneseq
        %v4419 = vshrl.u32 %v4418, 7
        %v4420 = vsub.s32 %v4417, %v4419
        %v4421 = vrot.slane %v4407, %v4420
        %v4422 = vcombine.low %v4357, %v4373
        %v4423 = vcombine.high %v4357, %v4373
        %v4425 = vunpack.c.l.s4 1934713408
        %v4426 = vunpack.c.0.s8 %v4425
        %v4427 = vlaneseq
        %v4428 = vshrl.u32 %v4427, 7
        %v4429 = vsub.s32 %v4426, %v4428
        %v4430 = vrot.slane %v4422, %v4429
        %v4432 = vunpack.c.l.s4 1934713408
        %v4433 = vunpack.c.0.s8 %v4432
        %v4434 = vlaneseq
        %v4435 = vshrl.u32 %v4434, 7
        %v4436 = vsub.s32 %v4433, %v4435
        %v4437 = vrot.slane %v4423, %v4436
        %v4438 = vcombine.low %v4382, %v4398
        %v4439 = vcombine.high %v4382, %v4398
        %v4441 = vunpack.c.l.s4 1934713408
        %v4442 = vunpack.c.0.s8 %v4441
        %v4443 = vlaneseq
        %v4444 = vshrl.u32 %v4443, 7
        %v4445 = vsub.s32 %v4442, %v4444
        %v4446 = vrot.slane %v4438, %v4445
        %v4448 = vunpack.c.l.s4 1934713408
        %v4449 = vunpack.c.0.s8 %v4448
        %v4450 = vlaneseq
        %v4451 = vshrl.u32 %v4450, 7
        %v4452 = vsub.s32 %v4449, %v4451
        %v4453 = vrot.slane %v4439, %v4452
        %v4454 = vcombine.low %v4389, %v4405
        %v4455 = vcombine.high %v4389, %v4405
        %v4457 = vunpack.c.l.s4 1934713408
        %v4458 = vunpack.c.0.s8 %v4457
        %v4459 = vlaneseq
        %v4460 = vshrl.u32 %v4459, 7
        %v4461 = vsub.s32 %v4458, %v4460
        %v4462 = vrot.slane %v4454, %v4461
        %v4464 = vunpack.c.l.s4 1934713408
        %v4465 = vunpack.c.0.s8 %v4464
        %v4466 = vlaneseq
        %v4467 = vshrl.u32 %v4466, 7
        %v4468 = vsub.s32 %v4465, %v4467
        %v4469 = vrot.slane %v4455, %v4468
        %v4470 = vcombine.low %v4414, %v4446
        %v4471 = vcombine.high %v4414, %v4446
        %v4472 = vcombine.low %v4421, %v4453
        %v4473 = vcombine.high %v4421, %v4453
        %v4474 = vcombine.low %v4430, %v4462
        %v4475 = vcombine.high %v4430, %v4462
        %v4476 = vcombine.low %v4437, %v4469
        %v4477 = vcombine.high %v4437, %v4469
        %v4478 = vcombine.low %v4297, %v4305
        %v4479 = vcombine.high %v4297, %v4305
        %v4481 = vunpack.c.l.s4 1983009808
        %v4482 = vunpack.c.0.s8 %v4481
        %v4483 = vlaneseq
        %v4484 = vshrl.u32 %v4483, 7
        %v4485 = vsub.s32 %v4482, %v4484
        %v4486 = vrot.slane %v4478, %v4485
        %v4488 = vunpack.c.l.s4 1983009808
        %v4489 = vunpack.c.0.s8 %v4488
        %v4490 = vlaneseq
        %v4491 = vshrl.u32 %v4490, 7
        %v4492 = vsub.s32 %v4489, %v4491
        %v4493 = vrot.slane %v4479, %v4492
        %v4494 = vcombine.low %v4301, %v4309
        %v4495 = vcombine.high %v4301, %v4309
        %v4497 = vunpack.c.l.s4 1983009808
        %v4498 = vunpack.c.0.s8 %v4497
        %v4499 = vlaneseq
        %v4500 = vshrl.u32 %v4499, 7
        %v4501 = vsub.s32 %v4498, %v4500
        %v4502 = vrot.slane %v4494, %v4501
        %v4504 = vunpack.c.l.s4 1983009808
        %v4505 = vunpack.c.0.s8 %v4504
        %v4506 = vlaneseq
        %v4507 = vshrl.u32 %v4506, 7
        %v4508 = vsub.s32 %v4505, %v4507
        %v4509 = vrot.slane %v4495, %v4508
        %v4510 = vcombine.low %v4313, %v4321
        %v4511 = vcombine.high %v4313, %v4321
        %v4513 = vunpack.c.l.s4 1983009808
        %v4514 = vunpack.c.0.s8 %v4513
        %v4515 = vlaneseq
        %v4516 = vshrl.u32 %v4515, 7
        %v4517 = vsub.s32 %v4514, %v4516
        %v4518 = vrot.slane %v4510, %v4517
        %v4520 = vunpack.c.l.s4 1983009808
        %v4521 = vunpack.c.0.s8 %v4520
        %v4522 = vlaneseq
        %v4523 = vshrl.u32 %v4522, 7
        %v4524 = vsub.s32 %v4521, %v4523
        %v4525 = vrot.slane %v4511, %v4524
        %v4526 = vcombine.low %v4317, %v4325
        %v4527 = vcombine.high %v4317, %v4325
        %v4529 = vunpack.c.l.s4 1983009808
        %v4530 = vunpack.c.0.s8 %v4529
        %v4531 = vlaneseq
        %v4532 = vshrl.u32 %v4531, 7
        %v4533 = vsub.s32 %v4530, %v4532
        %v4534 = vrot.slane %v4526, %v4533
        %v4536 = vunpack.c.l.s4 1983009808
        %v4537 = vunpack.c.0.s8 %v4536
        %v4538 = vlaneseq
        %v4539 = vshrl.u32 %v4538, 7
        %v4540 = vsub.s32 %v4537, %v4539
        %v4541 = vrot.slane %v4527, %v4540
        %v4542 = vcombine.low %v4486, %v4502
        %v4543 = vcombine.high %v4486, %v4502
        %v4545 = vunpack.c.l.s4 1934713408
        %v4546 = vunpack.c.0.s8 %v4545
        %v4547 = vlaneseq
        %v4548 = vshrl.u32 %v4547, 7
        %v4549 = vsub.s32 %v4546, %v4548
        %v4550 = vrot.slane %v4542, %v4549
        %v4552 = vunpack.c.l.s4 1934713408
        %v4553 = vunpack.c.0.s8 %v4552
        %v4554 = vlaneseq
        %v4555 = vshrl.u32 %v4554, 7
        %v4556 = vsub.s32 %v4553, %v4555
        %v4557 = vrot.slane %v4543, %v4556
        %v4558 = vcombine.low %v4493, %v4509
        %v4559 = vcombine.high %v4493, %v4509
        %v4561 = vunpack.c.l.s4 1934713408
        %v4562 = vunpack.c.0.s8 %v4561
        %v4563 = vlaneseq
        %v4564 = vshrl.u32 %v4563, 7
        %v4565 = vsub.s32 %v4562, %v4564
        %v4566 = vrot.slane %v4558, %v4565
        %v4568 = vunpack.c.l.s4 1934713408
        %v4569 = vunpack.c.0.s8 %v4568
        %v4570 = vlaneseq
        %v4571 = vshrl.u32 %v4570, 7
        %v4572 = vsub.s32 %v4569, %v4571
        %v4573 = vrot.slane %v4559, %v4572
        %v4574 = vcombine.low %v4518, %v4534
        %v4575 = vcombine.high %v4518, %v4534
        %v4577 = vunpack.c.l.s4 1934713408
        %v4578 = vunpack.c.0.s8 %v4577
        %v4579 = vlaneseq
        %v4580 = vshrl.u32 %v4579, 7
        %v4581 = vsub.s32 %v4578, %v4580
        %v4582 = vrot.slane %v4574, %v4581
        %v4584 = vunpack.c.l.s4 1934713408
        %v4585 = vunpack.c.0.s8 %v4584
        %v4586 = vlaneseq
        %v4587 = vshrl.u32 %v4586, 7
        %v4588 = vsub.s32 %v4585, %v4587
        %v4589 = vrot.slane %v4575, %v4588
        %v4590 = vcombine.low %v4525, %v4541
        %v4591 = vcombine.high %v4525, %v4541
        %v4593 = vunpack.c.l.s4 1934713408
        %v4594 = vunpack.c.0.s8 %v4593
        %v4595 = vlaneseq
        %v4596 = vshrl.u32 %v4595, 7
        %v4597 = vsub.s32 %v4594, %v4596
        %v4598 = vrot.slane %v4590, %v4597
        %v4600 = vunpack.c.l.s4 1934713408
        %v4601 = vunpack.c.0.s8 %v4600
        %v4602 = vlaneseq
        %v4603 = vshrl.u32 %v4602, 7
        %v4604 = vsub.s32 %v4601, %v4603
        %v4605 = vrot.slane %v4591, %v4604
        %v4606 = vcombine.low %v4550, %v4582
        %v4607 = vcombine.high %v4550, %v4582
        %v4608 = vcombine.low %v4557, %v4589
        %v4609 = vcombine.high %v4557, %v4589
        %v4610 = vcombine.low %v4566, %v4598
        %v4611 = vcombine.high %v4566, %v4598
        %v4612 = vcombine.low %v4573, %v4605
        %v4613 = vcombine.high %v4573, %v4605
        %4615 = vrot.lane.b32.xlu0 %v4471, 16
        %v4616 = vpop.permute.xlu0 %4615
        %4619 = vrot.lane.b32.xlu0 %v4472, 32
        %v4620 = vpop.permute.xlu0 %4619
        %4623 = vrot.lane.b32.xlu0 %v4473, 48
        %v4624 = vpop.permute.xlu0 %4623
        %4627 = vrot.lane.b32.xlu0 %v4474, 64
        %v4628 = vpop.permute.xlu0 %4627
        %4631 = vrot.lane.b32.xlu0 %v4475, 80
        %v4632 = vpop.permute.xlu0 %4631
        %4635 = vrot.lane.b32.xlu0 %v4476, 96
        %v4636 = vpop.permute.xlu0 %4635
        %4639 = vrot.lane.b32.xlu0 %v4477, 112
        %v4640 = vpop.permute.xlu0 %4639
        %4643 = vrot.lane.b32.xlu0 %v4607, 16
        %v4644 = vpop.permute.xlu0 %4643
        %4647 = vrot.lane.b32.xlu0 %v4608, 32
        %v4648 = vpop.permute.xlu0 %4647
        %4651 = vrot.lane.b32.xlu0 %v4609, 48
        %v4652 = vpop.permute.xlu0 %4651
        %4655 = vrot.lane.b32.xlu0 %v4610, 64
        %v4656 = vpop.permute.xlu0 %4655
        %4659 = vrot.lane.b32.xlu0 %v4611, 80
        %v4660 = vpop.permute.xlu0 %4659
        %4663 = vrot.lane.b32.xlu0 %v4612, 96
        %v4664 = vpop.permute.xlu0 %4663
        %4667 = vrot.lane.b32.xlu0 %v4613, 112
        %v4668 = vpop.permute.xlu0 %4667
        %v4670 = vsel %vm418, %v4470, %v4616
        %v4671 = vsel %vm434, %v4670, %v4620
        %v4672 = vsel %vm3075, %v4671, %v4624
        %v4673 = vsel %vm3077, %v4672, %v4628
        %v4674 = vsel %vm3079, %v4673, %v4632
        %v4675 = vsel %vm3081, %v4674, %v4636
        %v4676 = vsel %vm3083, %v4675, %v4640
        %v4677 = vsel %vm418, %v4606, %v4644
        %v4678 = vsel %vm434, %v4677, %v4648
        %v4679 = vsel %vm3075, %v4678, %v4652
        %v4680 = vsel %vm3077, %v4679, %v4656
        %v4681 = vsel %vm3079, %v4680, %v4660
        %v4682 = vsel %vm3081, %v4681, %v4664
        %v4683 = vsel %vm3083, %v4682, %v4668
        %4684 = vrot.lane.b32.xlu0 %v3898, 126
        %v4685 = vpop.permute.xlu0 %4684
        %4686 = vrot.lane.b32.xlu0 %v3900, 126
        %v4687 = vpop.permute.xlu0 %4686
        %4688 = vrot.lane.b32.xlu0 %v3903, 126
        %v4689 = vpop.permute.xlu0 %4688
        %4690 = vrot.lane.b32.xlu0 %v3905, 126
        %v4691 = vpop.permute.xlu0 %4690
        %4692 = vrot.lane.b32.xlu0 %v3908, 126
        %v4693 = vpop.permute.xlu0 %4692
        %4694 = vrot.lane.b32.xlu0 %v3910, 126
        %v4695 = vpop.permute.xlu0 %4694
        %4696 = vrot.lane.b32.xlu0 %v3913, 126
        %v4697 = vpop.permute.xlu0 %4696
        %4698 = vrot.lane.b32.xlu0 %v3915, 126
        %v4699 = vpop.permute.xlu0 %4698
        %4700 = vrot.lane.b32.xlu0 %v3918, 126
        %v4701 = vpop.permute.xlu0 %4700
        %4702 = vrot.lane.b32.xlu0 %v3920, 126
        %v4703 = vpop.permute.xlu0 %4702
        %4704 = vrot.lane.b32.xlu0 %v3923, 126
        %v4705 = vpop.permute.xlu0 %4704
        %4706 = vrot.lane.b32.xlu0 %v3925, 126
        %v4707 = vpop.permute.xlu0 %4706
        %4708 = vrot.lane.b32.xlu0 %v3928, 126
        %v4709 = vpop.permute.xlu0 %4708
        %4710 = vrot.lane.b32.xlu0 %v3930, 126
        %v4711 = vpop.permute.xlu0 %4710
        %4712 = vrot.lane.b32.xlu0 %v3933, 126
        %v4713 = vpop.permute.xlu0 %4712
        %4714 = vrot.lane.b32.xlu0 %v3935, 126
        %v4715 = vpop.permute.xlu0 %4714
        %v4732 = vcombine.low %v4685, %v4693
        %v4733 = vcombine.high %v4685, %v4693
        %v4735 = vunpack.c.l.s4 1983009808
        %v4736 = vunpack.c.0.s8 %v4735
        %v4737 = vlaneseq
        %v4738 = vshrl.u32 %v4737, 7
        %v4739 = vsub.s32 %v4736, %v4738
        %v4740 = vrot.slane %v4732, %v4739
        %v4742 = vunpack.c.l.s4 1983009808
        %v4743 = vunpack.c.0.s8 %v4742
        %v4744 = vlaneseq
        %v4745 = vshrl.u32 %v4744, 7
        %v4746 = vsub.s32 %v4743, %v4745
        %v4747 = vrot.slane %v4733, %v4746
        %v4748 = vcombine.low %v4689, %v4697
        %v4749 = vcombine.high %v4689, %v4697
        %v4751 = vunpack.c.l.s4 1983009808
        %v4752 = vunpack.c.0.s8 %v4751
        %v4753 = vlaneseq
        %v4754 = vshrl.u32 %v4753, 7
        %v4755 = vsub.s32 %v4752, %v4754
        %v4756 = vrot.slane %v4748, %v4755
        %v4758 = vunpack.c.l.s4 1983009808
        %v4759 = vunpack.c.0.s8 %v4758
        %v4760 = vlaneseq
        %v4761 = vshrl.u32 %v4760, 7
        %v4762 = vsub.s32 %v4759, %v4761
        %v4763 = vrot.slane %v4749, %v4762
        %v4764 = vcombine.low %v4701, %v4709
        %v4765 = vcombine.high %v4701, %v4709
        %v4767 = vunpack.c.l.s4 1983009808
        %v4768 = vunpack.c.0.s8 %v4767
        %v4769 = vlaneseq
        %v4770 = vshrl.u32 %v4769, 7
        %v4771 = vsub.s32 %v4768, %v4770
        %v4772 = vrot.slane %v4764, %v4771
        %v4774 = vunpack.c.l.s4 1983009808
        %v4775 = vunpack.c.0.s8 %v4774
        %v4776 = vlaneseq
        %v4777 = vshrl.u32 %v4776, 7
        %v4778 = vsub.s32 %v4775, %v4777
        %v4779 = vrot.slane %v4765, %v4778
        %v4780 = vcombine.low %v4705, %v4713
        %v4781 = vcombine.high %v4705, %v4713
        %v4783 = vunpack.c.l.s4 1983009808
        %v4784 = vunpack.c.0.s8 %v4783
        %v4785 = vlaneseq
        %v4786 = vshrl.u32 %v4785, 7
        %v4787 = vsub.s32 %v4784, %v4786
        %v4788 = vrot.slane %v4780, %v4787
        %v4790 = vunpack.c.l.s4 1983009808
        %v4791 = vunpack.c.0.s8 %v4790
        %v4792 = vlaneseq
        %v4793 = vshrl.u32 %v4792, 7
        %v4794 = vsub.s32 %v4791, %v4793
        %v4795 = vrot.slane %v4781, %v4794
        %v4796 = vcombine.low %v4740, %v4756
        %v4797 = vcombine.high %v4740, %v4756
        %v4799 = vunpack.c.l.s4 1934713408
        %v4800 = vunpack.c.0.s8 %v4799
        %v4801 = vlaneseq
        %v4802 = vshrl.u32 %v4801, 7
        %v4803 = vsub.s32 %v4800, %v4802
        %v4804 = vrot.slane %v4796, %v4803
        %v4806 = vunpack.c.l.s4 1934713408
        %v4807 = vunpack.c.0.s8 %v4806
        %v4808 = vlaneseq
        %v4809 = vshrl.u32 %v4808, 7
        %v4810 = vsub.s32 %v4807, %v4809
        %v4811 = vrot.slane %v4797, %v4810
        %v4812 = vcombine.low %v4747, %v4763
        %v4813 = vcombine.high %v4747, %v4763
        %v4815 = vunpack.c.l.s4 1934713408
        %v4816 = vunpack.c.0.s8 %v4815
        %v4817 = vlaneseq
        %v4818 = vshrl.u32 %v4817, 7
        %v4819 = vsub.s32 %v4816, %v4818
        %v4820 = vrot.slane %v4812, %v4819
        %v4822 = vunpack.c.l.s4 1934713408
        %v4823 = vunpack.c.0.s8 %v4822
        %v4824 = vlaneseq
        %v4825 = vshrl.u32 %v4824, 7
        %v4826 = vsub.s32 %v4823, %v4825
        %v4827 = vrot.slane %v4813, %v4826
        %v4828 = vcombine.low %v4772, %v4788
        %v4829 = vcombine.high %v4772, %v4788
        %v4831 = vunpack.c.l.s4 1934713408
        %v4832 = vunpack.c.0.s8 %v4831
        %v4833 = vlaneseq
        %v4834 = vshrl.u32 %v4833, 7
        %v4835 = vsub.s32 %v4832, %v4834
        %v4836 = vrot.slane %v4828, %v4835
        %v4838 = vunpack.c.l.s4 1934713408
        %v4839 = vunpack.c.0.s8 %v4838
        %v4840 = vlaneseq
        %v4841 = vshrl.u32 %v4840, 7
        %v4842 = vsub.s32 %v4839, %v4841
        %v4843 = vrot.slane %v4829, %v4842
        %v4844 = vcombine.low %v4779, %v4795
        %v4845 = vcombine.high %v4779, %v4795
        %v4847 = vunpack.c.l.s4 1934713408
        %v4848 = vunpack.c.0.s8 %v4847
        %v4849 = vlaneseq
        %v4850 = vshrl.u32 %v4849, 7
        %v4851 = vsub.s32 %v4848, %v4850
        %v4852 = vrot.slane %v4844, %v4851
        %v4854 = vunpack.c.l.s4 1934713408
        %v4855 = vunpack.c.0.s8 %v4854
        %v4856 = vlaneseq
        %v4857 = vshrl.u32 %v4856, 7
        %v4858 = vsub.s32 %v4855, %v4857
        %v4859 = vrot.slane %v4845, %v4858
        %v4860 = vcombine.low %v4804, %v4836
        %v4861 = vcombine.high %v4804, %v4836
        %v4862 = vcombine.low %v4811, %v4843
        %v4863 = vcombine.high %v4811, %v4843
        %v4864 = vcombine.low %v4820, %v4852
        %v4865 = vcombine.high %v4820, %v4852
        %v4866 = vcombine.low %v4827, %v4859
        %v4867 = vcombine.high %v4827, %v4859
        %v4868 = vcombine.low %v4687, %v4695
        %v4869 = vcombine.high %v4687, %v4695
        %v4871 = vunpack.c.l.s4 1983009808
        %v4872 = vunpack.c.0.s8 %v4871
        %v4873 = vlaneseq
        %v4874 = vshrl.u32 %v4873, 7
        %v4875 = vsub.s32 %v4872, %v4874
        %v4876 = vrot.slane %v4868, %v4875
        %v4878 = vunpack.c.l.s4 1983009808
        %v4879 = vunpack.c.0.s8 %v4878
        %v4880 = vlaneseq
        %v4881 = vshrl.u32 %v4880, 7
        %v4882 = vsub.s32 %v4879, %v4881
        %v4883 = vrot.slane %v4869, %v4882
        %v4884 = vcombine.low %v4691, %v4699
        %v4885 = vcombine.high %v4691, %v4699
        %v4887 = vunpack.c.l.s4 1983009808
        %v4888 = vunpack.c.0.s8 %v4887
        %v4889 = vlaneseq
        %v4890 = vshrl.u32 %v4889, 7
        %v4891 = vsub.s32 %v4888, %v4890
        %v4892 = vrot.slane %v4884, %v4891
        %v4894 = vunpack.c.l.s4 1983009808
        %v4895 = vunpack.c.0.s8 %v4894
        %v4896 = vlaneseq
        %v4897 = vshrl.u32 %v4896, 7
        %v4898 = vsub.s32 %v4895, %v4897
        %v4899 = vrot.slane %v4885, %v4898
        %v4900 = vcombine.low %v4703, %v4711
        %v4901 = vcombine.high %v4703, %v4711
        %v4903 = vunpack.c.l.s4 1983009808
        %v4904 = vunpack.c.0.s8 %v4903
        %v4905 = vlaneseq
        %v4906 = vshrl.u32 %v4905, 7
        %v4907 = vsub.s32 %v4904, %v4906
        %v4908 = vrot.slane %v4900, %v4907
        %v4910 = vunpack.c.l.s4 1983009808
        %v4911 = vunpack.c.0.s8 %v4910
        %v4912 = vlaneseq
        %v4913 = vshrl.u32 %v4912, 7
        %v4914 = vsub.s32 %v4911, %v4913
        %v4915 = vrot.slane %v4901, %v4914
        %v4916 = vcombine.low %v4707, %v4715
        %v4917 = vcombine.high %v4707, %v4715
        %v4919 = vunpack.c.l.s4 1983009808
        %v4920 = vunpack.c.0.s8 %v4919
        %v4921 = vlaneseq
        %v4922 = vshrl.u32 %v4921, 7
        %v4923 = vsub.s32 %v4920, %v4922
        %v4924 = vrot.slane %v4916, %v4923
        %v4926 = vunpack.c.l.s4 1983009808
        %v4927 = vunpack.c.0.s8 %v4926
        %v4928 = vlaneseq
        %v4929 = vshrl.u32 %v4928, 7
        %v4930 = vsub.s32 %v4927, %v4929
        %v4931 = vrot.slane %v4917, %v4930
        %v4932 = vcombine.low %v4876, %v4892
        %v4933 = vcombine.high %v4876, %v4892
        %v4935 = vunpack.c.l.s4 1934713408
        %v4936 = vunpack.c.0.s8 %v4935
        %v4937 = vlaneseq
        %v4938 = vshrl.u32 %v4937, 7
        %v4939 = vsub.s32 %v4936, %v4938
        %v4940 = vrot.slane %v4932, %v4939
        %v4942 = vunpack.c.l.s4 1934713408
        %v4943 = vunpack.c.0.s8 %v4942
        %v4944 = vlaneseq
        %v4945 = vshrl.u32 %v4944, 7
        %v4946 = vsub.s32 %v4943, %v4945
        %v4947 = vrot.slane %v4933, %v4946
        %v4948 = vcombine.low %v4883, %v4899
        %v4949 = vcombine.high %v4883, %v4899
        %v4951 = vunpack.c.l.s4 1934713408
        %v4952 = vunpack.c.0.s8 %v4951
        %v4953 = vlaneseq
        %v4954 = vshrl.u32 %v4953, 7
        %v4955 = vsub.s32 %v4952, %v4954
        %v4956 = vrot.slane %v4948, %v4955
        %v4958 = vunpack.c.l.s4 1934713408
        %v4959 = vunpack.c.0.s8 %v4958
        %v4960 = vlaneseq
        %v4961 = vshrl.u32 %v4960, 7
        %v4962 = vsub.s32 %v4959, %v4961
        %v4963 = vrot.slane %v4949, %v4962
        %v4964 = vcombine.low %v4908, %v4924
        %v4965 = vcombine.high %v4908, %v4924
        %v4967 = vunpack.c.l.s4 1934713408
        %v4968 = vunpack.c.0.s8 %v4967
        %v4969 = vlaneseq
        %v4970 = vshrl.u32 %v4969, 7
        %v4971 = vsub.s32 %v4968, %v4970
        %v4972 = vrot.slane %v4964, %v4971
        %v4974 = vunpack.c.l.s4 1934713408
        %v4975 = vunpack.c.0.s8 %v4974
        %v4976 = vlaneseq
        %v4977 = vshrl.u32 %v4976, 7
        %v4978 = vsub.s32 %v4975, %v4977
        %v4979 = vrot.slane %v4965, %v4978
        %v4980 = vcombine.low %v4915, %v4931
        %v4981 = vcombine.high %v4915, %v4931
        %v4983 = vunpack.c.l.s4 1934713408
        %v4984 = vunpack.c.0.s8 %v4983
        %v4985 = vlaneseq
        %v4986 = vshrl.u32 %v4985, 7
        %v4987 = vsub.s32 %v4984, %v4986
        %v4988 = vrot.slane %v4980, %v4987
        %v4990 = vunpack.c.l.s4 1934713408
        %v4991 = vunpack.c.0.s8 %v4990
        %v4992 = vlaneseq
        %v4993 = vshrl.u32 %v4992, 7
        %v4994 = vsub.s32 %v4991, %v4993
        %v4995 = vrot.slane %v4981, %v4994
        %v4996 = vcombine.low %v4940, %v4972
        %v4997 = vcombine.high %v4940, %v4972
        %v4998 = vcombine.low %v4947, %v4979
        %v4999 = vcombine.high %v4947, %v4979
        %v5000 = vcombine.low %v4956, %v4988
        %v5001 = vcombine.high %v4956, %v4988
        %v5002 = vcombine.low %v4963, %v4995
        %v5003 = vcombine.high %v4963, %v4995
        %5005 = vrot.lane.b32.xlu0 %v4861, 16
        %v5006 = vpop.permute.xlu0 %5005
        %5009 = vrot.lane.b32.xlu0 %v4862, 32
        %v5010 = vpop.permute.xlu0 %5009
        %5013 = vrot.lane.b32.xlu0 %v4863, 48
        %v5014 = vpop.permute.xlu0 %5013
        %5017 = vrot.lane.b32.xlu0 %v4864, 64
        %v5018 = vpop.permute.xlu0 %5017
        %5021 = vrot.lane.b32.xlu0 %v4865, 80
        %v5022 = vpop.permute.xlu0 %5021
        %5025 = vrot.lane.b32.xlu0 %v4866, 96
        %v5026 = vpop.permute.xlu0 %5025
        %5029 = vrot.lane.b32.xlu0 %v4867, 112
        %v5030 = vpop.permute.xlu0 %5029
        %5033 = vrot.lane.b32.xlu0 %v4997, 16
        %v5034 = vpop.permute.xlu0 %5033
        %5037 = vrot.lane.b32.xlu0 %v4998, 32
        %v5038 = vpop.permute.xlu0 %5037
        %5041 = vrot.lane.b32.xlu0 %v4999, 48
        %v5042 = vpop.permute.xlu0 %5041
        %5045 = vrot.lane.b32.xlu0 %v5000, 64
        %v5046 = vpop.permute.xlu0 %5045
        %5049 = vrot.lane.b32.xlu0 %v5001, 80
        %v5050 = vpop.permute.xlu0 %5049
        %5053 = vrot.lane.b32.xlu0 %v5002, 96
        %v5054 = vpop.permute.xlu0 %5053
        %5057 = vrot.lane.b32.xlu0 %v5003, 112
        %v5058 = vpop.permute.xlu0 %5057
        %v5060 = vsel %vm418, %v4860, %v5006
        %v5061 = vsel %vm434, %v5060, %v5010
        %v5062 = vsel %vm3075, %v5061, %v5014
        %v5063 = vsel %vm3077, %v5062, %v5018
        %v5064 = vsel %vm3079, %v5063, %v5022
        %v5065 = vsel %vm3081, %v5064, %v5026
        %v5066 = vsel %vm3083, %v5065, %v5030
        %v5067 = vsel %vm418, %v4996, %v5034
        %v5068 = vsel %vm434, %v5067, %v5038
        %v5069 = vsel %vm3075, %v5068, %v5042
        %v5070 = vsel %vm3077, %v5069, %v5046
        %v5071 = vsel %vm3079, %v5070, %v5050
        %v5072 = vsel %vm3081, %v5071, %v5054
        %v5073 = vsel %vm3083, %v5072, %v5058
        %v5074 = vrot.slane %v2721, 2
        %v5075 = vrot.slane %v2722, 2
        %v5076 = vsel %vm1441, %v5074, %v5075
        %v5077 = vrot.slane %v2723, 2
        %v5078 = vsel %vm1441, %v5075, %v5077
        %v5079 = vrot.slane %v2724, 2
        %v5080 = vrot.slane %v2725, 2
        %v5081 = vsel %vm1441, %v5079, %v5080
        %v5082 = vrot.slane %v2726, 2
        %v5083 = vsel %vm1441, %v5080, %v5082
        %v5084 = vrot.slane %v2727, 2
        %v5085 = vrot.slane %v2728, 2
        %v5086 = vsel %vm1441, %v5084, %v5085
        %v5087 = vrot.slane %v2729, 2
        %v5088 = vsel %vm1441, %v5085, %v5087
        %v5089 = vrot.slane %v2730, 2
        %v5090 = vrot.slane %v2731, 2
        %v5091 = vsel %vm1441, %v5089, %v5090
        %v5092 = vrot.slane %v2732, 2
        %v5093 = vsel %vm1441, %v5090, %v5092
        %v5094 = vrot.slane %v2733, 2
        %v5095 = vrot.slane %v2734, 2
        %v5096 = vsel %vm1441, %v5094, %v5095
        %v5097 = vrot.slane %v2735, 2
        %v5098 = vsel %vm1441, %v5095, %v5097
        %v5099 = vrot.slane %v2736, 2
        %v5100 = vrot.slane %v2737, 2
        %v5101 = vsel %vm1441, %v5099, %v5100
        %v5102 = vrot.slane %v2738, 2
        %v5103 = vsel %vm1441, %v5100, %v5102
        %v5104 = vrot.slane %v2739, 2
        %v5105 = vrot.slane %v2740, 2
        %v5106 = vsel %vm1441, %v5104, %v5105
        %v5107 = vrot.slane %v2741, 2
        %v5108 = vsel %vm1441, %v5105, %v5107
        %v5109 = vrot.slane %v2742, 2
        %v5110 = vrot.slane %v2743, 2
        %v5111 = vsel %vm1441, %v5109, %v5110
        %v5112 = vrot.slane %v2744, 2
        %v5113 = vsel %vm1441, %v5110, %v5112
        %v5130 = vcombine.low %v5076, %v5086
        %v5131 = vcombine.high %v5076, %v5086
        %v5133 = vunpack.c.l.s4 1983009808
        %v5134 = vunpack.c.0.s8 %v5133
        %v5135 = vlaneseq
        %v5136 = vshrl.u32 %v5135, 7
        %v5137 = vsub.s32 %v5134, %v5136
        %v5138 = vrot.slane %v5130, %v5137
        %v5140 = vunpack.c.l.s4 1983009808
        %v5141 = vunpack.c.0.s8 %v5140
        %v5142 = vlaneseq
        %v5143 = vshrl.u32 %v5142, 7
        %v5144 = vsub.s32 %v5141, %v5143
        %v5145 = vrot.slane %v5131, %v5144
        %v5146 = vcombine.low %v5081, %v5091
        %v5147 = vcombine.high %v5081, %v5091
        %v5149 = vunpack.c.l.s4 1983009808
        %v5150 = vunpack.c.0.s8 %v5149
        %v5151 = vlaneseq
        %v5152 = vshrl.u32 %v5151, 7
        %v5153 = vsub.s32 %v5150, %v5152
        %v5154 = vrot.slane %v5146, %v5153
        %v5156 = vunpack.c.l.s4 1983009808
        %v5157 = vunpack.c.0.s8 %v5156
        %v5158 = vlaneseq
        %v5159 = vshrl.u32 %v5158, 7
        %v5160 = vsub.s32 %v5157, %v5159
        %v5161 = vrot.slane %v5147, %v5160
        %v5162 = vcombine.low %v5096, %v5106
        %v5163 = vcombine.high %v5096, %v5106
        %v5165 = vunpack.c.l.s4 1983009808
        %v5166 = vunpack.c.0.s8 %v5165
        %v5167 = vlaneseq
        %v5168 = vshrl.u32 %v5167, 7
        %v5169 = vsub.s32 %v5166, %v5168
        %v5170 = vrot.slane %v5162, %v5169
        %v5172 = vunpack.c.l.s4 1983009808
        %v5173 = vunpack.c.0.s8 %v5172
        %v5174 = vlaneseq
        %v5175 = vshrl.u32 %v5174, 7
        %v5176 = vsub.s32 %v5173, %v5175
        %v5177 = vrot.slane %v5163, %v5176
        %v5178 = vcombine.low %v5101, %v5111
        %v5179 = vcombine.high %v5101, %v5111
        %v5181 = vunpack.c.l.s4 1983009808
        %v5182 = vunpack.c.0.s8 %v5181
        %v5183 = vlaneseq
        %v5184 = vshrl.u32 %v5183, 7
        %v5185 = vsub.s32 %v5182, %v5184
        %v5186 = vrot.slane %v5178, %v5185
        %v5188 = vunpack.c.l.s4 1983009808
        %v5189 = vunpack.c.0.s8 %v5188
        %v5190 = vlaneseq
        %v5191 = vshrl.u32 %v5190, 7
        %v5192 = vsub.s32 %v5189, %v5191
        %v5193 = vrot.slane %v5179, %v5192
        %v5194 = vcombine.low %v5138, %v5154
        %v5195 = vcombine.high %v5138, %v5154
        %v5197 = vunpack.c.l.s4 1934713408
        %v5198 = vunpack.c.0.s8 %v5197
        %v5199 = vlaneseq
        %v5200 = vshrl.u32 %v5199, 7
        %v5201 = vsub.s32 %v5198, %v5200
        %v5202 = vrot.slane %v5194, %v5201
        %v5204 = vunpack.c.l.s4 1934713408
        %v5205 = vunpack.c.0.s8 %v5204
        %v5206 = vlaneseq
        %v5207 = vshrl.u32 %v5206, 7
        %v5208 = vsub.s32 %v5205, %v5207
        %v5209 = vrot.slane %v5195, %v5208
        %v5210 = vcombine.low %v5145, %v5161
        %v5211 = vcombine.high %v5145, %v5161
        %v5213 = vunpack.c.l.s4 1934713408
        %v5214 = vunpack.c.0.s8 %v5213
        %v5215 = vlaneseq
        %v5216 = vshrl.u32 %v5215, 7
        %v5217 = vsub.s32 %v5214, %v5216
        %v5218 = vrot.slane %v5210, %v5217
        %v5220 = vunpack.c.l.s4 1934713408
        %v5221 = vunpack.c.0.s8 %v5220
        %v5222 = vlaneseq
        %v5223 = vshrl.u32 %v5222, 7
        %v5224 = vsub.s32 %v5221, %v5223
        %v5225 = vrot.slane %v5211, %v5224
        %v5226 = vcombine.low %v5170, %v5186
        %v5227 = vcombine.high %v5170, %v5186
        %v5229 = vunpack.c.l.s4 1934713408
        %v5230 = vunpack.c.0.s8 %v5229
        %v5231 = vlaneseq
        %v5232 = vshrl.u32 %v5231, 7
        %v5233 = vsub.s32 %v5230, %v5232
        %v5234 = vrot.slane %v5226, %v5233
        %v5236 = vunpack.c.l.s4 1934713408
        %v5237 = vunpack.c.0.s8 %v5236
        %v5238 = vlaneseq
        %v5239 = vshrl.u32 %v5238, 7
        %v5240 = vsub.s32 %v5237, %v5239
        %v5241 = vrot.slane %v5227, %v5240
        %v5242 = vcombine.low %v5177, %v5193
        %v5243 = vcombine.high %v5177, %v5193
        %v5245 = vunpack.c.l.s4 1934713408
        %v5246 = vunpack.c.0.s8 %v5245
        %v5247 = vlaneseq
        %v5248 = vshrl.u32 %v5247, 7
        %v5249 = vsub.s32 %v5246, %v5248
        %v5250 = vrot.slane %v5242, %v5249
        %v5252 = vunpack.c.l.s4 1934713408
        %v5253 = vunpack.c.0.s8 %v5252
        %v5254 = vlaneseq
        %v5255 = vshrl.u32 %v5254, 7
        %v5256 = vsub.s32 %v5253, %v5255
        %v5257 = vrot.slane %v5243, %v5256
        %v5258 = vcombine.low %v5202, %v5234
        %v5259 = vcombine.high %v5202, %v5234
        %v5260 = vcombine.low %v5209, %v5241
        %v5261 = vcombine.high %v5209, %v5241
        %v5262 = vcombine.low %v5218, %v5250
        %v5263 = vcombine.high %v5218, %v5250
        %v5264 = vcombine.low %v5225, %v5257
        %v5265 = vcombine.high %v5225, %v5257
        %v5266 = vcombine.low %v5078, %v5088
        %v5267 = vcombine.high %v5078, %v5088
        %v5269 = vunpack.c.l.s4 1983009808
        %v5270 = vunpack.c.0.s8 %v5269
        %v5271 = vlaneseq
        %v5272 = vshrl.u32 %v5271, 7
        %v5273 = vsub.s32 %v5270, %v5272
        %v5274 = vrot.slane %v5266, %v5273
        %v5276 = vunpack.c.l.s4 1983009808
        %v5277 = vunpack.c.0.s8 %v5276
        %v5278 = vlaneseq
        %v5279 = vshrl.u32 %v5278, 7
        %v5280 = vsub.s32 %v5277, %v5279
        %v5281 = vrot.slane %v5267, %v5280
        %v5282 = vcombine.low %v5083, %v5093
        %v5283 = vcombine.high %v5083, %v5093
        %v5285 = vunpack.c.l.s4 1983009808
        %v5286 = vunpack.c.0.s8 %v5285
        %v5287 = vlaneseq
        %v5288 = vshrl.u32 %v5287, 7
        %v5289 = vsub.s32 %v5286, %v5288
        %v5290 = vrot.slane %v5282, %v5289
        %v5292 = vunpack.c.l.s4 1983009808
        %v5293 = vunpack.c.0.s8 %v5292
        %v5294 = vlaneseq
        %v5295 = vshrl.u32 %v5294, 7
        %v5296 = vsub.s32 %v5293, %v5295
        %v5297 = vrot.slane %v5283, %v5296
        %v5298 = vcombine.low %v5098, %v5108
        %v5299 = vcombine.high %v5098, %v5108
        %v5301 = vunpack.c.l.s4 1983009808
        %v5302 = vunpack.c.0.s8 %v5301
        %v5303 = vlaneseq
        %v5304 = vshrl.u32 %v5303, 7
        %v5305 = vsub.s32 %v5302, %v5304
        %v5306 = vrot.slane %v5298, %v5305
        %v5308 = vunpack.c.l.s4 1983009808
        %v5309 = vunpack.c.0.s8 %v5308
        %v5310 = vlaneseq
        %v5311 = vshrl.u32 %v5310, 7
        %v5312 = vsub.s32 %v5309, %v5311
        %v5313 = vrot.slane %v5299, %v5312
        %v5314 = vcombine.low %v5103, %v5113
        %v5315 = vcombine.high %v5103, %v5113
        %v5317 = vunpack.c.l.s4 1983009808
        %v5318 = vunpack.c.0.s8 %v5317
        %v5319 = vlaneseq
        %v5320 = vshrl.u32 %v5319, 7
        %v5321 = vsub.s32 %v5318, %v5320
        %v5322 = vrot.slane %v5314, %v5321
        %v5324 = vunpack.c.l.s4 1983009808
        %v5325 = vunpack.c.0.s8 %v5324
        %v5326 = vlaneseq
        %v5327 = vshrl.u32 %v5326, 7
        %v5328 = vsub.s32 %v5325, %v5327
        %v5329 = vrot.slane %v5315, %v5328
        %v5330 = vcombine.low %v5274, %v5290
        %v5331 = vcombine.high %v5274, %v5290
        %v5333 = vunpack.c.l.s4 1934713408
        %v5334 = vunpack.c.0.s8 %v5333
        %v5335 = vlaneseq
        %v5336 = vshrl.u32 %v5335, 7
        %v5337 = vsub.s32 %v5334, %v5336
        %v5338 = vrot.slane %v5330, %v5337
        %v5340 = vunpack.c.l.s4 1934713408
        %v5341 = vunpack.c.0.s8 %v5340
        %v5342 = vlaneseq
        %v5343 = vshrl.u32 %v5342, 7
        %v5344 = vsub.s32 %v5341, %v5343
        %v5345 = vrot.slane %v5331, %v5344
        %v5346 = vcombine.low %v5281, %v5297
        %v5347 = vcombine.high %v5281, %v5297
        %v5349 = vunpack.c.l.s4 1934713408
        %v5350 = vunpack.c.0.s8 %v5349
        %v5351 = vlaneseq
        %v5352 = vshrl.u32 %v5351, 7
        %v5353 = vsub.s32 %v5350, %v5352
        %v5354 = vrot.slane %v5346, %v5353
        %v5356 = vunpack.c.l.s4 1934713408
        %v5357 = vunpack.c.0.s8 %v5356
        %v5358 = vlaneseq
        %v5359 = vshrl.u32 %v5358, 7
        %v5360 = vsub.s32 %v5357, %v5359
        %v5361 = vrot.slane %v5347, %v5360
        %v5362 = vcombine.low %v5306, %v5322
        %v5363 = vcombine.high %v5306, %v5322
        %v5365 = vunpack.c.l.s4 1934713408
        %v5366 = vunpack.c.0.s8 %v5365
        %v5367 = vlaneseq
        %v5368 = vshrl.u32 %v5367, 7
        %v5369 = vsub.s32 %v5366, %v5368
        %v5370 = vrot.slane %v5362, %v5369
        %v5372 = vunpack.c.l.s4 1934713408
        %v5373 = vunpack.c.0.s8 %v5372
        %v5374 = vlaneseq
        %v5375 = vshrl.u32 %v5374, 7
        %v5376 = vsub.s32 %v5373, %v5375
        %v5377 = vrot.slane %v5363, %v5376
        %v5378 = vcombine.low %v5313, %v5329
        %v5379 = vcombine.high %v5313, %v5329
        %v5381 = vunpack.c.l.s4 1934713408
        %v5382 = vunpack.c.0.s8 %v5381
        %v5383 = vlaneseq
        %v5384 = vshrl.u32 %v5383, 7
        %v5385 = vsub.s32 %v5382, %v5384
        %v5386 = vrot.slane %v5378, %v5385
        %v5388 = vunpack.c.l.s4 1934713408
        %v5389 = vunpack.c.0.s8 %v5388
        %v5390 = vlaneseq
        %v5391 = vshrl.u32 %v5390, 7
        %v5392 = vsub.s32 %v5389, %v5391
        %v5393 = vrot.slane %v5379, %v5392
        %v5394 = vcombine.low %v5338, %v5370
        %v5395 = vcombine.high %v5338, %v5370
        %v5396 = vcombine.low %v5345, %v5377
        %v5397 = vcombine.high %v5345, %v5377
        %v5398 = vcombine.low %v5354, %v5386
        %v5399 = vcombine.high %v5354, %v5386
        %v5400 = vcombine.low %v5361, %v5393
        %v5401 = vcombine.high %v5361, %v5393
        %5403 = vrot.lane.b32.xlu0 %v5259, 16
        %v5404 = vpop.permute.xlu0 %5403
        %5407 = vrot.lane.b32.xlu0 %v5260, 32
        %v5408 = vpop.permute.xlu0 %5407
        %5411 = vrot.lane.b32.xlu0 %v5261, 48
        %v5412 = vpop.permute.xlu0 %5411
        %5415 = vrot.lane.b32.xlu0 %v5262, 64
        %v5416 = vpop.permute.xlu0 %5415
        %5419 = vrot.lane.b32.xlu0 %v5263, 80
        %v5420 = vpop.permute.xlu0 %5419
        %5423 = vrot.lane.b32.xlu0 %v5264, 96
        %v5424 = vpop.permute.xlu0 %5423
        %5427 = vrot.lane.b32.xlu0 %v5265, 112
        %v5428 = vpop.permute.xlu0 %5427
        %5431 = vrot.lane.b32.xlu0 %v5395, 16
        %v5432 = vpop.permute.xlu0 %5431
        %5435 = vrot.lane.b32.xlu0 %v5396, 32
        %v5436 = vpop.permute.xlu0 %5435
        %5439 = vrot.lane.b32.xlu0 %v5397, 48
        %v5440 = vpop.permute.xlu0 %5439
        %5443 = vrot.lane.b32.xlu0 %v5398, 64
        %v5444 = vpop.permute.xlu0 %5443
        %5447 = vrot.lane.b32.xlu0 %v5399, 80
        %v5448 = vpop.permute.xlu0 %5447
        %5451 = vrot.lane.b32.xlu0 %v5400, 96
        %v5452 = vpop.permute.xlu0 %5451
        %5455 = vrot.lane.b32.xlu0 %v5401, 112
        %v5456 = vpop.permute.xlu0 %5455
        %v5458 = vsel %vm418, %v5258, %v5404
        %v5459 = vsel %vm434, %v5458, %v5408
        %v5460 = vsel %vm3075, %v5459, %v5412
        %v5461 = vsel %vm3077, %v5460, %v5416
        %v5462 = vsel %vm3079, %v5461, %v5420
        %v5463 = vsel %vm3081, %v5462, %v5424
        %v5464 = vsel %vm3083, %v5463, %v5428
        %v5465 = vsel %vm418, %v5394, %v5432
        %v5466 = vsel %vm434, %v5465, %v5436
        %v5467 = vsel %vm3075, %v5466, %v5440
        %v5468 = vsel %vm3077, %v5467, %v5444
        %v5469 = vsel %vm3079, %v5468, %v5448
        %v5470 = vsel %vm3081, %v5469, %v5452
        %v5471 = vsel %vm3083, %v5470, %v5456
        %5472 = vrot.lane.b32.xlu0 %v5076, 127
        %v5473 = vpop.permute.xlu0 %5472
        %5474 = vrot.lane.b32.xlu0 %v5078, 127
        %v5475 = vpop.permute.xlu0 %5474
        %5476 = vrot.lane.b32.xlu0 %v5081, 127
        %v5477 = vpop.permute.xlu0 %5476
        %5478 = vrot.lane.b32.xlu0 %v5083, 127
        %v5479 = vpop.permute.xlu0 %5478
        %5480 = vrot.lane.b32.xlu0 %v5086, 127
        %v5481 = vpop.permute.xlu0 %5480
        %5482 = vrot.lane.b32.xlu0 %v5088, 127
        %v5483 = vpop.permute.xlu0 %5482
        %5484 = vrot.lane.b32.xlu0 %v5091, 127
        %v5485 = vpop.permute.xlu0 %5484
        %5486 = vrot.lane.b32.xlu0 %v5093, 127
        %v5487 = vpop.permute.xlu0 %5486
        %5488 = vrot.lane.b32.xlu0 %v5096, 127
        %v5489 = vpop.permute.xlu0 %5488
        %5490 = vrot.lane.b32.xlu0 %v5098, 127
        %v5491 = vpop.permute.xlu0 %5490
        %5492 = vrot.lane.b32.xlu0 %v5101, 127
        %v5493 = vpop.permute.xlu0 %5492
        %5494 = vrot.lane.b32.xlu0 %v5103, 127
        %v5495 = vpop.permute.xlu0 %5494
        %5496 = vrot.lane.b32.xlu0 %v5106, 127
        %v5497 = vpop.permute.xlu0 %5496
        %5498 = vrot.lane.b32.xlu0 %v5108, 127
        %v5499 = vpop.permute.xlu0 %5498
        %5500 = vrot.lane.b32.xlu0 %v5111, 127
        %v5501 = vpop.permute.xlu0 %5500
        %5502 = vrot.lane.b32.xlu0 %v5113, 127
        %v5503 = vpop.permute.xlu0 %5502
        %v5520 = vcombine.low %v5473, %v5481
        %v5521 = vcombine.high %v5473, %v5481
        %v5523 = vunpack.c.l.s4 1983009808
        %v5524 = vunpack.c.0.s8 %v5523
        %v5525 = vlaneseq
        %v5526 = vshrl.u32 %v5525, 7
        %v5527 = vsub.s32 %v5524, %v5526
        %v5528 = vrot.slane %v5520, %v5527
        %v5530 = vunpack.c.l.s4 1983009808
        %v5531 = vunpack.c.0.s8 %v5530
        %v5532 = vlaneseq
        %v5533 = vshrl.u32 %v5532, 7
        %v5534 = vsub.s32 %v5531, %v5533
        %v5535 = vrot.slane %v5521, %v5534
        %v5536 = vcombine.low %v5477, %v5485
        %v5537 = vcombine.high %v5477, %v5485
        %v5539 = vunpack.c.l.s4 1983009808
        %v5540 = vunpack.c.0.s8 %v5539
        %v5541 = vlaneseq
        %v5542 = vshrl.u32 %v5541, 7
        %v5543 = vsub.s32 %v5540, %v5542
        %v5544 = vrot.slane %v5536, %v5543
        %v5546 = vunpack.c.l.s4 1983009808
        %v5547 = vunpack.c.0.s8 %v5546
        %v5548 = vlaneseq
        %v5549 = vshrl.u32 %v5548, 7
        %v5550 = vsub.s32 %v5547, %v5549
        %v5551 = vrot.slane %v5537, %v5550
        %v5552 = vcombine.low %v5489, %v5497
        %v5553 = vcombine.high %v5489, %v5497
        %v5555 = vunpack.c.l.s4 1983009808
        %v5556 = vunpack.c.0.s8 %v5555
        %v5557 = vlaneseq
        %v5558 = vshrl.u32 %v5557, 7
        %v5559 = vsub.s32 %v5556, %v5558
        %v5560 = vrot.slane %v5552, %v5559
        %v5562 = vunpack.c.l.s4 1983009808
        %v5563 = vunpack.c.0.s8 %v5562
        %v5564 = vlaneseq
        %v5565 = vshrl.u32 %v5564, 7
        %v5566 = vsub.s32 %v5563, %v5565
        %v5567 = vrot.slane %v5553, %v5566
        %v5568 = vcombine.low %v5493, %v5501
        %v5569 = vcombine.high %v5493, %v5501
        %v5571 = vunpack.c.l.s4 1983009808
        %v5572 = vunpack.c.0.s8 %v5571
        %v5573 = vlaneseq
        %v5574 = vshrl.u32 %v5573, 7
        %v5575 = vsub.s32 %v5572, %v5574
        %v5576 = vrot.slane %v5568, %v5575
        %v5578 = vunpack.c.l.s4 1983009808
        %v5579 = vunpack.c.0.s8 %v5578
        %v5580 = vlaneseq
        %v5581 = vshrl.u32 %v5580, 7
        %v5582 = vsub.s32 %v5579, %v5581
        %v5583 = vrot.slane %v5569, %v5582
        %v5584 = vcombine.low %v5528, %v5544
        %v5585 = vcombine.high %v5528, %v5544
        %v5587 = vunpack.c.l.s4 1934713408
        %v5588 = vunpack.c.0.s8 %v5587
        %v5589 = vlaneseq
        %v5590 = vshrl.u32 %v5589, 7
        %v5591 = vsub.s32 %v5588, %v5590
        %v5592 = vrot.slane %v5584, %v5591
        %v5594 = vunpack.c.l.s4 1934713408
        %v5595 = vunpack.c.0.s8 %v5594
        %v5596 = vlaneseq
        %v5597 = vshrl.u32 %v5596, 7
        %v5598 = vsub.s32 %v5595, %v5597
        %v5599 = vrot.slane %v5585, %v5598
        %v5600 = vcombine.low %v5535, %v5551
        %v5601 = vcombine.high %v5535, %v5551
        %v5603 = vunpack.c.l.s4 1934713408
        %v5604 = vunpack.c.0.s8 %v5603
        %v5605 = vlaneseq
        %v5606 = vshrl.u32 %v5605, 7
        %v5607 = vsub.s32 %v5604, %v5606
        %v5608 = vrot.slane %v5600, %v5607
        %v5610 = vunpack.c.l.s4 1934713408
        %v5611 = vunpack.c.0.s8 %v5610
        %v5612 = vlaneseq
        %v5613 = vshrl.u32 %v5612, 7
        %v5614 = vsub.s32 %v5611, %v5613
        %v5615 = vrot.slane %v5601, %v5614
        %v5616 = vcombine.low %v5560, %v5576
        %v5617 = vcombine.high %v5560, %v5576
        %v5619 = vunpack.c.l.s4 1934713408
        %v5620 = vunpack.c.0.s8 %v5619
        %v5621 = vlaneseq
        %v5622 = vshrl.u32 %v5621, 7
        %v5623 = vsub.s32 %v5620, %v5622
        %v5624 = vrot.slane %v5616, %v5623
        %v5626 = vunpack.c.l.s4 1934713408
        %v5627 = vunpack.c.0.s8 %v5626
        %v5628 = vlaneseq
        %v5629 = vshrl.u32 %v5628, 7
        %v5630 = vsub.s32 %v5627, %v5629
        %v5631 = vrot.slane %v5617, %v5630
        %v5632 = vcombine.low %v5567, %v5583
        %v5633 = vcombine.high %v5567, %v5583
        %v5635 = vunpack.c.l.s4 1934713408
        %v5636 = vunpack.c.0.s8 %v5635
        %v5637 = vlaneseq
        %v5638 = vshrl.u32 %v5637, 7
        %v5639 = vsub.s32 %v5636, %v5638
        %v5640 = vrot.slane %v5632, %v5639
        %v5642 = vunpack.c.l.s4 1934713408
        %v5643 = vunpack.c.0.s8 %v5642
        %v5644 = vlaneseq
        %v5645 = vshrl.u32 %v5644, 7
        %v5646 = vsub.s32 %v5643, %v5645
        %v5647 = vrot.slane %v5633, %v5646
        %v5648 = vcombine.low %v5592, %v5624
        %v5649 = vcombine.high %v5592, %v5624
        %v5650 = vcombine.low %v5599, %v5631
        %v5651 = vcombine.high %v5599, %v5631
        %v5652 = vcombine.low %v5608, %v5640
        %v5653 = vcombine.high %v5608, %v5640
        %v5654 = vcombine.low %v5615, %v5647
        %v5655 = vcombine.high %v5615, %v5647
        %v5656 = vcombine.low %v5475, %v5483
        %v5657 = vcombine.high %v5475, %v5483
        %v5659 = vunpack.c.l.s4 1983009808
        %v5660 = vunpack.c.0.s8 %v5659
        %v5661 = vlaneseq
        %v5662 = vshrl.u32 %v5661, 7
        %v5663 = vsub.s32 %v5660, %v5662
        %v5664 = vrot.slane %v5656, %v5663
        %v5666 = vunpack.c.l.s4 1983009808
        %v5667 = vunpack.c.0.s8 %v5666
        %v5668 = vlaneseq
        %v5669 = vshrl.u32 %v5668, 7
        %v5670 = vsub.s32 %v5667, %v5669
        %v5671 = vrot.slane %v5657, %v5670
        %v5672 = vcombine.low %v5479, %v5487
        %v5673 = vcombine.high %v5479, %v5487
        %v5675 = vunpack.c.l.s4 1983009808
        %v5676 = vunpack.c.0.s8 %v5675
        %v5677 = vlaneseq
        %v5678 = vshrl.u32 %v5677, 7
        %v5679 = vsub.s32 %v5676, %v5678
        %v5680 = vrot.slane %v5672, %v5679
        %v5682 = vunpack.c.l.s4 1983009808
        %v5683 = vunpack.c.0.s8 %v5682
        %v5684 = vlaneseq
        %v5685 = vshrl.u32 %v5684, 7
        %v5686 = vsub.s32 %v5683, %v5685
        %v5687 = vrot.slane %v5673, %v5686
        %v5688 = vcombine.low %v5491, %v5499
        %v5689 = vcombine.high %v5491, %v5499
        %v5691 = vunpack.c.l.s4 1983009808
        %v5692 = vunpack.c.0.s8 %v5691
        %v5693 = vlaneseq
        %v5694 = vshrl.u32 %v5693, 7
        %v5695 = vsub.s32 %v5692, %v5694
        %v5696 = vrot.slane %v5688, %v5695
        %v5698 = vunpack.c.l.s4 1983009808
        %v5699 = vunpack.c.0.s8 %v5698
        %v5700 = vlaneseq
        %v5701 = vshrl.u32 %v5700, 7
        %v5702 = vsub.s32 %v5699, %v5701
        %v5703 = vrot.slane %v5689, %v5702
        %v5704 = vcombine.low %v5495, %v5503
        %v5705 = vcombine.high %v5495, %v5503
        %v5707 = vunpack.c.l.s4 1983009808
        %v5708 = vunpack.c.0.s8 %v5707
        %v5709 = vlaneseq
        %v5710 = vshrl.u32 %v5709, 7
        %v5711 = vsub.s32 %v5708, %v5710
        %v5712 = vrot.slane %v5704, %v5711
        %v5714 = vunpack.c.l.s4 1983009808
        %v5715 = vunpack.c.0.s8 %v5714
        %v5716 = vlaneseq
        %v5717 = vshrl.u32 %v5716, 7
        %v5718 = vsub.s32 %v5715, %v5717
        %v5719 = vrot.slane %v5705, %v5718
        %v5720 = vcombine.low %v5664, %v5680
        %v5721 = vcombine.high %v5664, %v5680
        %v5723 = vunpack.c.l.s4 1934713408
        %v5724 = vunpack.c.0.s8 %v5723
        %v5725 = vlaneseq
        %v5726 = vshrl.u32 %v5725, 7
        %v5727 = vsub.s32 %v5724, %v5726
        %v5728 = vrot.slane %v5720, %v5727
        %v5730 = vunpack.c.l.s4 1934713408
        %v5731 = vunpack.c.0.s8 %v5730
        %v5732 = vlaneseq
        %v5733 = vshrl.u32 %v5732, 7
        %v5734 = vsub.s32 %v5731, %v5733
        %v5735 = vrot.slane %v5721, %v5734
        %v5736 = vcombine.low %v5671, %v5687
        %v5737 = vcombine.high %v5671, %v5687
        %v5739 = vunpack.c.l.s4 1934713408
        %v5740 = vunpack.c.0.s8 %v5739
        %v5741 = vlaneseq
        %v5742 = vshrl.u32 %v5741, 7
        %v5743 = vsub.s32 %v5740, %v5742
        %v5744 = vrot.slane %v5736, %v5743
        %v5746 = vunpack.c.l.s4 1934713408
        %v5747 = vunpack.c.0.s8 %v5746
        %v5748 = vlaneseq
        %v5749 = vshrl.u32 %v5748, 7
        %v5750 = vsub.s32 %v5747, %v5749
        %v5751 = vrot.slane %v5737, %v5750
        %v5752 = vcombine.low %v5696, %v5712
        %v5753 = vcombine.high %v5696, %v5712
        %v5755 = vunpack.c.l.s4 1934713408
        %v5756 = vunpack.c.0.s8 %v5755
        %v5757 = vlaneseq
        %v5758 = vshrl.u32 %v5757, 7
        %v5759 = vsub.s32 %v5756, %v5758
        %v5760 = vrot.slane %v5752, %v5759
        %v5762 = vunpack.c.l.s4 1934713408
        %v5763 = vunpack.c.0.s8 %v5762
        %v5764 = vlaneseq
        %v5765 = vshrl.u32 %v5764, 7
        %v5766 = vsub.s32 %v5763, %v5765
        %v5767 = vrot.slane %v5753, %v5766
        %v5768 = vcombine.low %v5703, %v5719
        %v5769 = vcombine.high %v5703, %v5719
        %v5771 = vunpack.c.l.s4 1934713408
        %v5772 = vunpack.c.0.s8 %v5771
        %v5773 = vlaneseq
        %v5774 = vshrl.u32 %v5773, 7
        %v5775 = vsub.s32 %v5772, %v5774
        %v5776 = vrot.slane %v5768, %v5775
        %v5778 = vunpack.c.l.s4 1934713408
        %v5779 = vunpack.c.0.s8 %v5778
        %v5780 = vlaneseq
        %v5781 = vshrl.u32 %v5780, 7
        %v5782 = vsub.s32 %v5779, %v5781
        %v5783 = vrot.slane %v5769, %v5782
        %v5784 = vcombine.low %v5728, %v5760
        %v5785 = vcombine.high %v5728, %v5760
        %v5786 = vcombine.low %v5735, %v5767
        %v5787 = vcombine.high %v5735, %v5767
        %v5788 = vcombine.low %v5744, %v5776
        %v5789 = vcombine.high %v5744, %v5776
        %v5790 = vcombine.low %v5751, %v5783
        %v5791 = vcombine.high %v5751, %v5783
        %5793 = vrot.lane.b32.xlu0 %v5649, 16
        %v5794 = vpop.permute.xlu0 %5793
        %5797 = vrot.lane.b32.xlu0 %v5650, 32
        %v5798 = vpop.permute.xlu0 %5797
        %5801 = vrot.lane.b32.xlu0 %v5651, 48
        %v5802 = vpop.permute.xlu0 %5801
        %5805 = vrot.lane.b32.xlu0 %v5652, 64
        %v5806 = vpop.permute.xlu0 %5805
        %5809 = vrot.lane.b32.xlu0 %v5653, 80
        %v5810 = vpop.permute.xlu0 %5809
        %5813 = vrot.lane.b32.xlu0 %v5654, 96
        %v5814 = vpop.permute.xlu0 %5813
        %5817 = vrot.lane.b32.xlu0 %v5655, 112
        %v5818 = vpop.permute.xlu0 %5817
        %5821 = vrot.lane.b32.xlu0 %v5785, 16
        %v5822 = vpop.permute.xlu0 %5821
        %5825 = vrot.lane.b32.xlu0 %v5786, 32
        %v5826 = vpop.permute.xlu0 %5825
        %5829 = vrot.lane.b32.xlu0 %v5787, 48
        %v5830 = vpop.permute.xlu0 %5829
        %5833 = vrot.lane.b32.xlu0 %v5788, 64
        %v5834 = vpop.permute.xlu0 %5833
        %5837 = vrot.lane.b32.xlu0 %v5789, 80
        %v5838 = vpop.permute.xlu0 %5837
        %5841 = vrot.lane.b32.xlu0 %v5790, 96
        %v5842 = vpop.permute.xlu0 %5841
        %5845 = vrot.lane.b32.xlu0 %v5791, 112
        %v5846 = vpop.permute.xlu0 %5845
        %v5848 = vsel %vm418, %v5648, %v5794
        %v5849 = vsel %vm434, %v5848, %v5798
        %v5850 = vsel %vm3075, %v5849, %v5802
        %v5851 = vsel %vm3077, %v5850, %v5806
        %v5852 = vsel %vm3079, %v5851, %v5810
        %v5853 = vsel %vm3081, %v5852, %v5814
        %v5854 = vsel %vm3083, %v5853, %v5818
        %v5855 = vsel %vm418, %v5784, %v5822
        %v5856 = vsel %vm434, %v5855, %v5826
        %v5857 = vsel %vm3075, %v5856, %v5830
        %v5858 = vsel %vm3077, %v5857, %v5834
        %v5859 = vsel %vm3079, %v5858, %v5838
        %v5860 = vsel %vm3081, %v5859, %v5842
        %v5861 = vsel %vm3083, %v5860, %v5846
        %5862 = vrot.lane.b32.xlu0 %v5076, 126
        %v5863 = vpop.permute.xlu0 %5862
        %5864 = vrot.lane.b32.xlu0 %v5078, 126
        %v5865 = vpop.permute.xlu0 %5864
        %5866 = vrot.lane.b32.xlu0 %v5081, 126
        %v5867 = vpop.permute.xlu0 %5866
        %5868 = vrot.lane.b32.xlu0 %v5083, 126
        %v5869 = vpop.permute.xlu0 %5868
        %5870 = vrot.lane.b32.xlu0 %v5086, 126
        %v5871 = vpop.permute.xlu0 %5870
        %5872 = vrot.lane.b32.xlu0 %v5088, 126
        %v5873 = vpop.permute.xlu0 %5872
        %5874 = vrot.lane.b32.xlu0 %v5091, 126
        %v5875 = vpop.permute.xlu0 %5874
        %5876 = vrot.lane.b32.xlu0 %v5093, 126
        %v5877 = vpop.permute.xlu0 %5876
        %5878 = vrot.lane.b32.xlu0 %v5096, 126
        %v5879 = vpop.permute.xlu0 %5878
        %5880 = vrot.lane.b32.xlu0 %v5098, 126
        %v5881 = vpop.permute.xlu0 %5880
        %5882 = vrot.lane.b32.xlu0 %v5101, 126
        %v5883 = vpop.permute.xlu0 %5882
        %5884 = vrot.lane.b32.xlu0 %v5103, 126
        %v5885 = vpop.permute.xlu0 %5884
        %5886 = vrot.lane.b32.xlu0 %v5106, 126
        %v5887 = vpop.permute.xlu0 %5886
        %5888 = vrot.lane.b32.xlu0 %v5108, 126
        %v5889 = vpop.permute.xlu0 %5888
        %5890 = vrot.lane.b32.xlu0 %v5111, 126
        %v5891 = vpop.permute.xlu0 %5890
        %5892 = vrot.lane.b32.xlu0 %v5113, 126
        %v5893 = vpop.permute.xlu0 %5892
        %v5910 = vcombine.low %v5863, %v5871
        %v5911 = vcombine.high %v5863, %v5871
        %v5913 = vunpack.c.l.s4 1983009808
        %v5914 = vunpack.c.0.s8 %v5913
        %v5915 = vlaneseq
        %v5916 = vshrl.u32 %v5915, 7
        %v5917 = vsub.s32 %v5914, %v5916
        %v5918 = vrot.slane %v5910, %v5917
        %v5920 = vunpack.c.l.s4 1983009808
        %v5921 = vunpack.c.0.s8 %v5920
        %v5922 = vlaneseq
        %v5923 = vshrl.u32 %v5922, 7
        %v5924 = vsub.s32 %v5921, %v5923
        %v5925 = vrot.slane %v5911, %v5924
        %v5926 = vcombine.low %v5867, %v5875
        %v5927 = vcombine.high %v5867, %v5875
        %v5929 = vunpack.c.l.s4 1983009808
        %v5930 = vunpack.c.0.s8 %v5929
        %v5931 = vlaneseq
        %v5932 = vshrl.u32 %v5931, 7
        %v5933 = vsub.s32 %v5930, %v5932
        %v5934 = vrot.slane %v5926, %v5933
        %v5936 = vunpack.c.l.s4 1983009808
        %v5937 = vunpack.c.0.s8 %v5936
        %v5938 = vlaneseq
        %v5939 = vshrl.u32 %v5938, 7
        %v5940 = vsub.s32 %v5937, %v5939
        %v5941 = vrot.slane %v5927, %v5940
        %v5942 = vcombine.low %v5879, %v5887
        %v5943 = vcombine.high %v5879, %v5887
        %v5945 = vunpack.c.l.s4 1983009808
        %v5946 = vunpack.c.0.s8 %v5945
        %v5947 = vlaneseq
        %v5948 = vshrl.u32 %v5947, 7
        %v5949 = vsub.s32 %v5946, %v5948
        %v5950 = vrot.slane %v5942, %v5949
        %v5952 = vunpack.c.l.s4 1983009808
        %v5953 = vunpack.c.0.s8 %v5952
        %v5954 = vlaneseq
        %v5955 = vshrl.u32 %v5954, 7
        %v5956 = vsub.s32 %v5953, %v5955
        %v5957 = vrot.slane %v5943, %v5956
        %v5958 = vcombine.low %v5883, %v5891
        %v5959 = vcombine.high %v5883, %v5891
        %v5961 = vunpack.c.l.s4 1983009808
        %v5962 = vunpack.c.0.s8 %v5961
        %v5963 = vlaneseq
        %v5964 = vshrl.u32 %v5963, 7
        %v5965 = vsub.s32 %v5962, %v5964
        %v5966 = vrot.slane %v5958, %v5965
        %v5968 = vunpack.c.l.s4 1983009808
        %v5969 = vunpack.c.0.s8 %v5968
        %v5970 = vlaneseq
        %v5971 = vshrl.u32 %v5970, 7
        %v5972 = vsub.s32 %v5969, %v5971
        %v5973 = vrot.slane %v5959, %v5972
        %v5974 = vcombine.low %v5918, %v5934
        %v5975 = vcombine.high %v5918, %v5934
        %v5977 = vunpack.c.l.s4 1934713408
        %v5978 = vunpack.c.0.s8 %v5977
        %v5979 = vlaneseq
        %v5980 = vshrl.u32 %v5979, 7
        %v5981 = vsub.s32 %v5978, %v5980
        %v5982 = vrot.slane %v5974, %v5981
        %v5984 = vunpack.c.l.s4 1934713408
        %v5985 = vunpack.c.0.s8 %v5984
        %v5986 = vlaneseq
        %v5987 = vshrl.u32 %v5986, 7
        %v5988 = vsub.s32 %v5985, %v5987
        %v5989 = vrot.slane %v5975, %v5988
        %v5990 = vcombine.low %v5925, %v5941
        %v5991 = vcombine.high %v5925, %v5941
        %v5993 = vunpack.c.l.s4 1934713408
        %v5994 = vunpack.c.0.s8 %v5993
        %v5995 = vlaneseq
        %v5996 = vshrl.u32 %v5995, 7
        %v5997 = vsub.s32 %v5994, %v5996
        %v5998 = vrot.slane %v5990, %v5997
        %v6000 = vunpack.c.l.s4 1934713408
        %v6001 = vunpack.c.0.s8 %v6000
        %v6002 = vlaneseq
        %v6003 = vshrl.u32 %v6002, 7
        %v6004 = vsub.s32 %v6001, %v6003
        %v6005 = vrot.slane %v5991, %v6004
        %v6006 = vcombine.low %v5950, %v5966
        %v6007 = vcombine.high %v5950, %v5966
        %v6009 = vunpack.c.l.s4 1934713408
        %v6010 = vunpack.c.0.s8 %v6009
        %v6011 = vlaneseq
        %v6012 = vshrl.u32 %v6011, 7
        %v6013 = vsub.s32 %v6010, %v6012
        %v6014 = vrot.slane %v6006, %v6013
        %v6016 = vunpack.c.l.s4 1934713408
        %v6017 = vunpack.c.0.s8 %v6016
        %v6018 = vlaneseq
        %v6019 = vshrl.u32 %v6018, 7
        %v6020 = vsub.s32 %v6017, %v6019
        %v6021 = vrot.slane %v6007, %v6020
        %v6022 = vcombine.low %v5957, %v5973
        %v6023 = vcombine.high %v5957, %v5973
        %v6025 = vunpack.c.l.s4 1934713408
        %v6026 = vunpack.c.0.s8 %v6025
        %v6027 = vlaneseq
        %v6028 = vshrl.u32 %v6027, 7
        %v6029 = vsub.s32 %v6026, %v6028
        %v6030 = vrot.slane %v6022, %v6029
        %v6032 = vunpack.c.l.s4 1934713408
        %v6033 = vunpack.c.0.s8 %v6032
        %v6034 = vlaneseq
        %v6035 = vshrl.u32 %v6034, 7
        %v6036 = vsub.s32 %v6033, %v6035
        %v6037 = vrot.slane %v6023, %v6036
        %v6038 = vcombine.low %v5982, %v6014
        %v6039 = vcombine.high %v5982, %v6014
        %v6040 = vcombine.low %v5989, %v6021
        %v6041 = vcombine.high %v5989, %v6021
        %v6042 = vcombine.low %v5998, %v6030
        %v6043 = vcombine.high %v5998, %v6030
        %v6044 = vcombine.low %v6005, %v6037
        %v6045 = vcombine.high %v6005, %v6037
        %v6046 = vcombine.low %v5865, %v5873
        %v6047 = vcombine.high %v5865, %v5873
        %v6049 = vunpack.c.l.s4 1983009808
        %v6050 = vunpack.c.0.s8 %v6049
        %v6051 = vlaneseq
        %v6052 = vshrl.u32 %v6051, 7
        %v6053 = vsub.s32 %v6050, %v6052
        %v6054 = vrot.slane %v6046, %v6053
        %v6056 = vunpack.c.l.s4 1983009808
        %v6057 = vunpack.c.0.s8 %v6056
        %v6058 = vlaneseq
        %v6059 = vshrl.u32 %v6058, 7
        %v6060 = vsub.s32 %v6057, %v6059
        %v6061 = vrot.slane %v6047, %v6060
        %v6062 = vcombine.low %v5869, %v5877
        %v6063 = vcombine.high %v5869, %v5877
        %v6065 = vunpack.c.l.s4 1983009808
        %v6066 = vunpack.c.0.s8 %v6065
        %v6067 = vlaneseq
        %v6068 = vshrl.u32 %v6067, 7
        %v6069 = vsub.s32 %v6066, %v6068
        %v6070 = vrot.slane %v6062, %v6069
        %v6072 = vunpack.c.l.s4 1983009808
        %v6073 = vunpack.c.0.s8 %v6072
        %v6074 = vlaneseq
        %v6075 = vshrl.u32 %v6074, 7
        %v6076 = vsub.s32 %v6073, %v6075
        %v6077 = vrot.slane %v6063, %v6076
        %v6078 = vcombine.low %v5881, %v5889
        %v6079 = vcombine.high %v5881, %v5889
        %v6081 = vunpack.c.l.s4 1983009808
        %v6082 = vunpack.c.0.s8 %v6081
        %v6083 = vlaneseq
        %v6084 = vshrl.u32 %v6083, 7
        %v6085 = vsub.s32 %v6082, %v6084
        %v6086 = vrot.slane %v6078, %v6085
        %v6088 = vunpack.c.l.s4 1983009808
        %v6089 = vunpack.c.0.s8 %v6088
        %v6090 = vlaneseq
        %v6091 = vshrl.u32 %v6090, 7
        %v6092 = vsub.s32 %v6089, %v6091
        %v6093 = vrot.slane %v6079, %v6092
        %v6094 = vcombine.low %v5885, %v5893
        %v6095 = vcombine.high %v5885, %v5893
        %v6097 = vunpack.c.l.s4 1983009808
        %v6098 = vunpack.c.0.s8 %v6097
        %v6099 = vlaneseq
        %v6100 = vshrl.u32 %v6099, 7
        %v6101 = vsub.s32 %v6098, %v6100
        %v6102 = vrot.slane %v6094, %v6101
        %v6104 = vunpack.c.l.s4 1983009808
        %v6105 = vunpack.c.0.s8 %v6104
        %v6106 = vlaneseq
        %v6107 = vshrl.u32 %v6106, 7
        %v6108 = vsub.s32 %v6105, %v6107
        %v6109 = vrot.slane %v6095, %v6108
        %v6110 = vcombine.low %v6054, %v6070
        %v6111 = vcombine.high %v6054, %v6070
        %v6113 = vunpack.c.l.s4 1934713408
        %v6114 = vunpack.c.0.s8 %v6113
        %v6115 = vlaneseq
        %v6116 = vshrl.u32 %v6115, 7
        %v6117 = vsub.s32 %v6114, %v6116
        %v6118 = vrot.slane %v6110, %v6117
        %v6120 = vunpack.c.l.s4 1934713408
        %v6121 = vunpack.c.0.s8 %v6120
        %v6122 = vlaneseq
        %v6123 = vshrl.u32 %v6122, 7
        %v6124 = vsub.s32 %v6121, %v6123
        %v6125 = vrot.slane %v6111, %v6124
        %v6126 = vcombine.low %v6061, %v6077
        %v6127 = vcombine.high %v6061, %v6077
        %v6129 = vunpack.c.l.s4 1934713408
        %v6130 = vunpack.c.0.s8 %v6129
        %v6131 = vlaneseq
        %v6132 = vshrl.u32 %v6131, 7
        %v6133 = vsub.s32 %v6130, %v6132
        %v6134 = vrot.slane %v6126, %v6133
        %v6136 = vunpack.c.l.s4 1934713408
        %v6137 = vunpack.c.0.s8 %v6136
        %v6138 = vlaneseq
        %v6139 = vshrl.u32 %v6138, 7
        %v6140 = vsub.s32 %v6137, %v6139
        %v6141 = vrot.slane %v6127, %v6140
        %v6142 = vcombine.low %v6086, %v6102
        %v6143 = vcombine.high %v6086, %v6102
        %v6145 = vunpack.c.l.s4 1934713408
        %v6146 = vunpack.c.0.s8 %v6145
        %v6147 = vlaneseq
        %v6148 = vshrl.u32 %v6147, 7
        %v6149 = vsub.s32 %v6146, %v6148
        %v6150 = vrot.slane %v6142, %v6149
        %v6152 = vunpack.c.l.s4 1934713408
        %v6153 = vunpack.c.0.s8 %v6152
        %v6154 = vlaneseq
        %v6155 = vshrl.u32 %v6154, 7
        %v6156 = vsub.s32 %v6153, %v6155
        %v6157 = vrot.slane %v6143, %v6156
        %v6158 = vcombine.low %v6093, %v6109
        %v6159 = vcombine.high %v6093, %v6109
        %v6161 = vunpack.c.l.s4 1934713408
        %v6162 = vunpack.c.0.s8 %v6161
        %v6163 = vlaneseq
        %v6164 = vshrl.u32 %v6163, 7
        %v6165 = vsub.s32 %v6162, %v6164
        %v6166 = vrot.slane %v6158, %v6165
        %v6168 = vunpack.c.l.s4 1934713408
        %v6169 = vunpack.c.0.s8 %v6168
        %v6170 = vlaneseq
        %v6171 = vshrl.u32 %v6170, 7
        %v6172 = vsub.s32 %v6169, %v6171
        %v6173 = vrot.slane %v6159, %v6172
        %v6174 = vcombine.low %v6118, %v6150
        %v6175 = vcombine.high %v6118, %v6150
        %v6176 = vcombine.low %v6125, %v6157
        %v6177 = vcombine.high %v6125, %v6157
        %v6178 = vcombine.low %v6134, %v6166
        %v6179 = vcombine.high %v6134, %v6166
        %v6180 = vcombine.low %v6141, %v6173
        %v6181 = vcombine.high %v6141, %v6173
        %6183 = vrot.lane.b32.xlu0 %v6039, 16
        %v6184 = vpop.permute.xlu0 %6183
        %6187 = vrot.lane.b32.xlu0 %v6040, 32
        %v6188 = vpop.permute.xlu0 %6187
        %6191 = vrot.lane.b32.xlu0 %v6041, 48
        %v6192 = vpop.permute.xlu0 %6191
        %6195 = vrot.lane.b32.xlu0 %v6042, 64
        %v6196 = vpop.permute.xlu0 %6195
        %6199 = vrot.lane.b32.xlu0 %v6043, 80
        %v6200 = vpop.permute.xlu0 %6199
        %6203 = vrot.lane.b32.xlu0 %v6044, 96
        %v6204 = vpop.permute.xlu0 %6203
        %6207 = vrot.lane.b32.xlu0 %v6045, 112
        %v6208 = vpop.permute.xlu0 %6207
        %6211 = vrot.lane.b32.xlu0 %v6175, 16
        %v6212 = vpop.permute.xlu0 %6211
        %6215 = vrot.lane.b32.xlu0 %v6176, 32
        %v6216 = vpop.permute.xlu0 %6215
        %6219 = vrot.lane.b32.xlu0 %v6177, 48
        %v6220 = vpop.permute.xlu0 %6219
        %6223 = vrot.lane.b32.xlu0 %v6178, 64
        %v6224 = vpop.permute.xlu0 %6223
        %6227 = vrot.lane.b32.xlu0 %v6179, 80
        %v6228 = vpop.permute.xlu0 %6227
        %6231 = vrot.lane.b32.xlu0 %v6180, 96
        %v6232 = vpop.permute.xlu0 %6231
        %6235 = vrot.lane.b32.xlu0 %v6181, 112
        %v6236 = vpop.permute.xlu0 %6235
        %v6238 = vsel %vm418, %v6038, %v6184
        %v6239 = vsel %vm434, %v6238, %v6188
        %v6240 = vsel %vm3075, %v6239, %v6192
        %v6241 = vsel %vm3077, %v6240, %v6196
        %v6242 = vsel %vm3079, %v6241, %v6200
        %v6243 = vsel %vm3081, %v6242, %v6204
        %v6244 = vsel %vm3083, %v6243, %v6208
        %v6245 = vsel %vm418, %v6174, %v6212
        %v6246 = vsel %vm434, %v6245, %v6216
        %v6247 = vsel %vm3075, %v6246, %v6220
        %v6248 = vsel %vm3077, %v6247, %v6224
        %v6249 = vsel %vm3079, %v6248, %v6228
        %v6250 = vsel %vm3081, %v6249, %v6232
        %v6251 = vsel %vm3083, %v6250, %v6236
        %6253 = vset.pattern.permute.xlu0 0
        %6254 = vperm.xlu0 %6253, %v229
        %v6255 = vpop.permute.xlu0 %6254
        %v6258 = vsel %vm410, %v228, 0
        %6260 = vmatprep.subr.mxu0 %v3091
        %6261 = vmatpush1.msra.mxu0 %v3084
        %6262 = vmatprep.subr.mxu0 %v3497
        %6263 = vmatpush1.msra.mxu0 %v3490
        %6264 = vmatprep.subr.mxu0 %v3887
        %6265 = vmatpush1.msra.mxu0 %v3880
        %6266 = vmatprep.subr.mxu0 %v4293
        %6267 = vmatpush1.msra.mxu0 %v4286
        %6268 = vmatprep.subr.mxu0 %v4683
        %6269 = vmatpush1.msra.mxu0 %v4676
        %6270 = vmatprep.subr.mxu0 %v5073
        %6271 = vmatpush1.msra.mxu0 %v5066
        %6272 = vmatprep.subr.mxu0 %v5471
        %6273 = vmatpush1.msra.mxu0 %v5464
        %6274 = vmatprep.subr.mxu0 %v5861
        %6275 = vmatpush1.msra.mxu0 %v5854
        %6276 = vmatprep.subr.mxu0 %v6251
        %6277 = vmatpush1.msra.mxu0 %v6244
        %6278 = vmatprep.subr.mxu0 0.0
        %6279 = vmatpush1.msra.mxu0 0.0
        %6280 = vmatprep.subr.mxu0 0.0
        %6281 = vmatpush1.msra.mxu0 0.0
        %6282 = vmatprep.subr.mxu0 0.0
        %6283 = vmatpush1.msra.mxu0 0.0
        %6284 = vmatprep.subr.mxu0 0.0
        %6285 = vmatpush1.msra.mxu0 0.0
        %6286 = vmatprep.subr.mxu0 0.0
        %6287 = vmatpush1.msra.mxu0 0.0
        %6288 = vmatprep.subr.mxu0 0.0
        %6289 = vmatpush1.msra.mxu0 0.0
        %6290 = vmatprep.subr.mxu0 0.0
        %6291 = vmatpush1.msra.mxu0 0.0
        %6292 = vmatprep.subr.mxu0 0.0
        %6293 = vmatpush1.msra.mxu0 0.0
        %6294 = vmatprep.subr.mxu0 0.0
        %6295 = vmatpush1.msra.mxu0 0.0
        %6296 = vmatprep.subr.mxu0 0.0
        %6297 = vmatpush1.msra.mxu0 0.0
        %6298 = vmatprep.subr.mxu0 0.0
        %6299 = vmatpush1.msra.mxu0 0.0
        %6300 = vmatprep.subr.mxu0 0.0
        %6301 = vmatpush1.msra.mxu0 0.0
        %6302 = vmatprep.subr.mxu0 0.0
        %6303 = vmatpush1.msra.mxu0 0.0
        %6304 = vmatprep.subr.mxu0 0.0
        %6305 = vmatpush1.msra.mxu0 0.0
        %6306 = vmatprep.subr.mxu0 0.0
        %6307 = vmatpush1.msra.mxu0 0.0
        %6308 = vmatprep.subr.mxu0 0.0
        %6309 = vmatpush1.msra.mxu0 0.0
        %6310 = vmatprep.subr.mxu0 0.0
        %6311 = vmatpush1.msra.mxu0 0.0
        %6312 = vmatprep.subr.mxu0 0.0
        %6313 = vmatpush1.msra.mxu0 0.0
        %6314 = vmatprep.subr.mxu0 0.0
        %6315 = vmatpush1.msra.mxu0 0.0
        %6316 = vmatprep.subr.mxu0 0.0
        %6317 = vmatpush1.msra.mxu0 0.0
        %6318 = vmatprep.subr.mxu0 0.0
        %6319 = vmatpush1.msra.mxu0 0.0
        %6320 = vmatprep.subr.mxu0 0.0
        %6321 = vmatpush1.msra.mxu0 0.0
        %6322 = vmatprep.subr.mxu0 0.0
        %6323 = vmatpush1.msra.mxu0 0.0
        %6324 = vmatprep.mubr.f32.mxu0 0.0
        %6325 = vmatmul.mubr.f32.gmra.mrb[0].mxu0 %v6258
        %v6326 = vpop.f32.mrb[0].mxu0
        %v6327 = vadd.f32 %v6255, %v6326
        %v6328 = vpop.f32.mrb[0].mxu0
        %v6329 = vadd.f32 %v6255, %v6328
        %6330 = vdwg.mxu0
        %v6331 = vmax.f32 %v6327, 0.0
        %v6332 = vmax.f32 %v6329, 0.0
        %6333 = vst [vmem:[%s217] sm:$0xff] %v6331
        %6334 = vst [vmem:[%s217 + $0x8] sm:$0xff] %v6332
        %s6335 = sand.u32 %s137, 1
        %s6336 = scalar_lea.sflag [#allocation3], %s6335
        %s6337 = sand.u32 %s137, 1
        %s6338 = smul.addr %s6337, 16
        %s6339 = scalar_lea.vmem [#allocation2], %s6338
        // Predicated region
        $region41: #{tpu_custom_call.1} parent=39 // pred_check
          %p6340 = pneg %p147
        $region42: #{tpu_custom_call.1} parent=39 // pred_check_branch
          %6342 = sbr.rel (%p6340) target = $region44
        $region43: #{tpu_custom_call.1} parent=39 // pred_region
          %s6344 = ssub.s32 256, 256
          %6345 = vsyncadd %s6336, %s6344
          %s6346 = smul.addr %s19, 2
          %s6347 = smul.addr %s6346, 128
          %s6348 = scalar_lea.hbm %s5, %s6347
          %s6350 = sshll.u32 %s6339, 4
          %s6351 = int_to_ptr.vmem [resolvable:$true] %s6350
          %6353 = dma.vmem_to_hbm [thread:$0]  %s6351, 256, %s6348, %s6336
        $region44: #{tpu_custom_call.1} parent=39 // pred_fallthru
          _
      $region40: #{tpu_custom_call.1} parent=5 // pred_fallthru
        _
      %p6354 = scmp.le.s32.totalorder 2, %s14
      // Predicated region
      $region45: #{tpu_custom_call.1} parent=5 // pred_check
        %p6355 = pneg %p6354
      $region46: #{tpu_custom_call.1} parent=5 // pred_check_branch
        %6357 = sbr.rel (%p6355) target = $region48
      $region47: #{tpu_custom_call.1} parent=5 // pred_region
        %s6358 = ssub.s32 %s14, 2
        // Predicated region
        $region49: #{tpu_custom_call.1} parent=47 // pred_check
          %p6359 = pneg %p153
        $region50: #{tpu_custom_call.1} parent=47 // pred_check_branch
          %6361 = sbr.rel (%p6359) target = $region52
        $region51: #{tpu_custom_call.1} parent=47 // pred_region
          %s6362 = sand.u32 %s138, 1
          %s6363 = scalar_lea.sflag [#allocation3], %s6362
          %s6364 = sand.u32 %s138, 1
          %s6365 = smul.addr %s6364, 16
          %s6366 = scalar_lea.vmem [#allocation2], %s6365
          %6367 = dma.done %s6363, 256
        $region52: #{tpu_custom_call.1} parent=47 // pred_fallthru
          _
      $region48: #{tpu_custom_call.1} parent=5 // pred_fallthru
        _
    $region6: #{tpu_custom_call.1} parent=1 // loop_footer
      %s18 = sadd.s32 1, %s14
    $region7: #{tpu_custom_call.1} parent=1 // loop_footer_branch
      %13 = sbr.rel target = $region3
    $region8: #{tpu_custom_call.1} parent=1 // loop_exit
      _
    %6368 = vsyncpa [#allocation3], 1
    %s6369 = scalar_lea.sflag [#allocation3], 1
    %6370 = vsyncpa %s6369, 1

</llo_original>
